<compile_context>
chip_gen: v7x
topology: tpu7x:2x2x1
jax: 0.10.0
libtpu: 0.0.40
codegen_flags: <defaults>
</compile_context>

<pallas_src>
import jax
import jax.numpy as jnp
from jax.experimental import pallas as pl
from jax.experimental.pallas import tpu as pltpu


def _round_up(n, m):
    return ((n + m - 1) // m) * m


def _choose_tile_b(batch, requested=None):
    """128-aligned batch tile; >=2 grid steps whenever batch > 128."""
    if requested is None:
        requested = 512 if batch >= 4096 else 256
    requested = max(128, _round_up(requested, 128))
    if batch <= 128:
        # Tiny batch: a single 8-aligned tile, don't over-pad to 128.
        return max(8, _round_up(batch, 8))
    # 128-aligned and at least two grid steps (both v7x TensorCores busy).
    return min(requested, _round_up(-(-batch // 2), 128))


def _discriminator_kernel(x_ref,
                          w1_ref, b1_ref,
                          w2_ref, b2_ref,
                          w3_ref, b3_ref,
                          w4_ref, b4_ref,
                          o_ref):
    """One batch-tile of the full 4-layer MLP, fused in VMEM.

    x_ref: f32 (cast to bf16 in-kernel).  w1..w3: bf16 (MXU inputs).
    Biases / w4 row: f32 (VMEM).  b4: f32 scalar in SMEM.
    All accumulation / bias / activation math is f32.
    """
    neg_slope = jnp.float32(0.2)

    def leaky_relu(h):
        # single VPU max instead of compare+select
        return jnp.maximum(h, neg_slope * h)

    # Layer 1: (tb, 784) @ (784, 512) + (1, 512)   [bf16 MXU, f32 accumulate]
    x = x_ref[...].astype(jnp.bfloat16)          # in-kernel cast (VPU), no HBM pre-pass
    h = jnp.dot(x, w1_ref[...], preferred_element_type=jnp.float32)
    h = leaky_relu(h + b1_ref[...])

    # Layer 2: (tb, 512) @ (512, 256) + (1, 256)
    h = jnp.dot(h.astype(jnp.bfloat16), w2_ref[...],
                preferred_element_type=jnp.float32)
    h = leaky_relu(h + b2_ref[...])

    # Layer 3: (tb, 256) @ (256, 128) + (1, 128)
    h = jnp.dot(h.astype(jnp.bfloat16), w3_ref[...],
                preferred_element_type=jnp.float32)
    h = leaky_relu(h + b3_ref[...])

    # Layer 4: N=1 output -> VPU multiply + XLU lane-reduce (keep off the MXU).
    # w4_ref is the weight column reshaped to a (1, 128) f32 row; b4 is an
    # SMEM scalar (no padded (1,1) VMEM tile / vector load).
    logits = jnp.sum(h * w4_ref[...], axis=-1, keepdims=True) + b4_ref[0]

    o_ref[...] = logits.astype(o_ref.dtype)


def discriminator_forward(x, params, *, tile_b=None):
    """x: (B, image_dim) float32. params: w1..w4 stored (in,out), b1..b4 (1,out)."""
    B, image_dim = x.shape

    tile = _choose_tile_b(B, tile_b)
    Bp = _round_up(B, tile)

    # Weights shipped as bf16 MXU operands (tiny one-off convert; callers can
    # hold bf16 weights to make it a no-op).  Biases / head stay f32.
    w1 = params["w1"].astype(jnp.bfloat16)
    w2 = params["w2"].astype(jnp.bfloat16)
    w3 = params["w3"].astype(jnp.bfloat16)
    b1 = params["b1"].astype(jnp.float32)
    b2 = params["b2"].astype(jnp.float32)
    b3 = params["b3"].astype(jnp.float32)
    d1, d2, d3 = w1.shape[1], w2.shape[1], w3.shape[1]
    w4_row = params["w4"].reshape(1, d3).astype(jnp.float32)   # (1, 128)
    b4_s = params["b4"].reshape(1).astype(jnp.float32)         # (1,) SMEM scalar

    # x stays f32 and untouched in HBM; only a ragged batch (B % tile != 0)
    # needs a zero-pad row copy.  No K padding, no dtype-convert pass.
    x_p = x if Bp == B else jnp.pad(x, ((0, Bp - B), (0, 0)))

    # Weights / biases: whole-array blocks; constant index_map => resident in
    # VMEM (fetched once, reused every grid step).
    def full_spec(shape):
        return pl.BlockSpec(shape, lambda i: (0, 0))

    grid = (Bp // tile,)

    out = pl.pallas_call(
        _discriminator_kernel,
        out_shape=jax.ShapeDtypeStruct((Bp, 1), jnp.float32),
        grid_spec=pltpu.PrefetchScalarGridSpec(
            num_scalar_prefetch=0,
            grid=grid,
            in_specs=[
                pl.BlockSpec((tile, image_dim), lambda i: (i, 0)),  # x tile (f32)
                full_spec((image_dim, d1)), full_spec((1, d1)),     # layer 1
                full_spec((d1, d2)), full_spec((1, d2)),            # layer 2
                full_spec((d2, d3)), full_spec((1, d3)),            # layer 3
                full_spec((1, d3)),                                 # layer 4 weight row
                pl.BlockSpec(memory_space=pltpu.MemorySpace.SMEM),  # layer 4 bias (scalar)
            ],
            out_specs=pl.BlockSpec((tile, 1), lambda i: (i, 0)),
        ),
        compiler_params=pltpu.CompilerParams(
            dimension_semantics=("parallel",)),
    )(x_p, w1, b1, w2, b2, w3, b3, w4_row, b4_s)

    return out[:B] if Bp != B else out


def init_discriminator_params(key, image_dim=784, hidden_dim=128):
    """Deterministic init matching PyTorch Linear shapes (stored transposed)."""
    dims = [image_dim, hidden_dim * 4, hidden_dim * 2, hidden_dim, 1]
    params = {}
    keys = jax.random.split(key, len(dims) - 1)
    for idx, (din, dout) in enumerate(zip(dims[:-1], dims[1:]), start=1):
        kw, kb = jax.random.split(keys[idx - 1])
        bound = 1.0 / (din ** 0.5)  # PyTorch default uniform(-1/sqrt(in), 1/sqrt(in))
        params[f"w{idx}"] = jax.random.uniform(
            kw, (din, dout), jnp.float32, -bound, bound)
        params[f"b{idx}"] = jax.random.uniform(
            kb, (1, dout), jnp.float32, -bound, bound)
    return params


def _reference_forward(x, params):
    h = x
    for idx in range(1, 4):
        h = h @ params[f"w{idx}"] + params[f"b{idx}"]
        h = jnp.where(h > 0, h, 0.2 * h)
    return h @ params["w4"] + params["b4"]


if __name__ == "__main__":
    key = jax.random.PRNGKey(0)
    k_params, k_x = jax.random.split(key)

    image_dim, hidden_dim = 784, 128
    batch = 200  # not a multiple of the tile: exercises batch padding + 2-step grid

    params = init_discriminator_params(k_params, image_dim, hidden_dim)
    x = jax.random.normal(k_x, (batch, image_dim), jnp.float32)

    out = discriminator_forward(x, params)
    out = jax.block_until_ready(out)

    ref = _reference_forward(x, params)
    assert out.shape == (batch, 1), out.shape
    # bf16 MXU operands with f32 accumulation -> looser tolerance than pure f32.
    assert jnp.allclose(out, ref, atol=3e-2, rtol=3e-2), (
        float(jnp.max(jnp.abs(out - ref))))

    print("KERNEL_OK")
</pallas_src>

<mosaic_0001>
module attributes {stable_mosaic.version = 11 : i64} {
  func.func @_discriminator_kernel(%arg0: i32, %arg1: memref<128x784xf32, #tpu.memory_space<vmem>>, %arg2: memref<784x512xbf16, #tpu.memory_space<vmem>>, %arg3: memref<1x512xf32, #tpu.memory_space<vmem>>, %arg4: memref<512x256xbf16, #tpu.memory_space<vmem>>, %arg5: memref<1x256xf32, #tpu.memory_space<vmem>>, %arg6: memref<256x128xbf16, #tpu.memory_space<vmem>>, %arg7: memref<1x128xf32, #tpu.memory_space<vmem>>, %arg8: memref<1x128xf32, #tpu.memory_space<vmem>>, %arg9: memref<1xf32, #tpu.memory_space<smem>>, %arg10: memref<128x1xf32, #tpu.memory_space<vmem>>) attributes {dimension_semantics = [#tpu.dimension_semantics<parallel>], iteration_bounds = array<i64: 2>, scalar_prefetch = 0 : i64, scratch_operands = 0 : i64, tpu.core_type = #tpu.core_type<tc>, window_params = [{transform_indices = @transform_0, window_bounds = array<i64: 128, 784>}, {pipeline_mode = #tpu.pipeline_mode<synchronous>, transform_indices = @transform_1, window_bounds = array<i64: 784, 512>}, {pipeline_mode = #tpu.pipeline_mode<synchronous>, transform_indices = @transform_2, window_bounds = array<i64: 1, 512>}, {pipeline_mode = #tpu.pipeline_mode<synchronous>, transform_indices = @transform_3, window_bounds = array<i64: 512, 256>}, {pipeline_mode = #tpu.pipeline_mode<synchronous>, transform_indices = @transform_4, window_bounds = array<i64: 1, 256>}, {pipeline_mode = #tpu.pipeline_mode<synchronous>, transform_indices = @transform_5, window_bounds = array<i64: 256, 128>}, {pipeline_mode = #tpu.pipeline_mode<synchronous>, transform_indices = @transform_6, window_bounds = array<i64: 1, 128>}, {pipeline_mode = #tpu.pipeline_mode<synchronous>, transform_indices = @transform_7, window_bounds = array<i64: 1, 128>}, {transform_indices = @transform_8, window_bounds = array<i64: 1>}, {transform_indices = @transform_9, window_bounds = array<i64: 128, 1>}]} {
    %c0 = arith.constant 0 : index
    %c0_0 = arith.constant 0 : index
    %0 = vector.load %arg1[%c0, %c0_0] : memref<128x784xf32, #tpu.memory_space<vmem>>, vector<128x784xf32>
    %1 = arith.truncf %0 : vector<128x784xf32> to vector<128x784xbf16>
    %c0_1 = arith.constant 0 : index
    %c0_2 = arith.constant 0 : index
    %2 = vector.load %arg2[%c0_1, %c0_2] : memref<784x512xbf16, #tpu.memory_space<vmem>>, vector<784x512xbf16>
    %cst = arith.constant dense<0.000000e+00> : vector<128x512xf32>
    %3 = tpu.matmul %1, %2, %cst {dimension_numbers = #tpu.dot_dimension_numbers<[1], [0], [0], [1], [0, 0, 1, 1], [], []>} : vector<128x784xbf16>, vector<784x512xbf16>, vector<128x512xf32> -> vector<128x512xf32>
    %c0_3 = arith.constant 0 : index
    %c0_4 = arith.constant 0 : index
    %4 = vector.load %arg3[%c0_3, %c0_4] : memref<1x512xf32, #tpu.memory_space<vmem>>, vector<1x512xf32>
    %5 = vector.broadcast %4 : vector<1x512xf32> to vector<128x512xf32>
    %6 = arith.addf %3, %5 : vector<128x512xf32>
    %cst_5 = arith.constant 2.000000e-01 : f32
    %7 = vector.broadcast %cst_5 : f32 to vector<128x512xf32>
    %8 = arith.mulf %7, %6 : vector<128x512xf32>
    %9 = arith.maximumf %6, %8 : vector<128x512xf32>
    %10 = arith.truncf %9 : vector<128x512xf32> to vector<128x512xbf16>
    %c0_6 = arith.constant 0 : index
    %c0_7 = arith.constant 0 : index
    %11 = vector.load %arg4[%c0_6, %c0_7] : memref<512x256xbf16, #tpu.memory_space<vmem>>, vector<512x256xbf16>
    %cst_8 = arith.constant dense<0.000000e+00> : vector<128x256xf32>
    %12 = tpu.matmul %10, %11, %cst_8 {dimension_numbers = #tpu.dot_dimension_numbers<[1], [0], [0], [1], [0, 0, 1, 1], [], []>} : vector<128x512xbf16>, vector<512x256xbf16>, vector<128x256xf32> -> vector<128x256xf32>
    %c0_9 = arith.constant 0 : index
    %c0_10 = arith.constant 0 : index
    %13 = vector.load %arg5[%c0_9, %c0_10] : memref<1x256xf32, #tpu.memory_space<vmem>>, vector<1x256xf32>
    %14 = vector.broadcast %13 : vector<1x256xf32> to vector<128x256xf32>
    %15 = arith.addf %12, %14 : vector<128x256xf32>
    %cst_11 = arith.constant 2.000000e-01 : f32
    %16 = vector.broadcast %cst_11 : f32 to vector<128x256xf32>
    %17 = arith.mulf %16, %15 : vector<128x256xf32>
    %18 = arith.maximumf %15, %17 : vector<128x256xf32>
    %19 = arith.truncf %18 : vector<128x256xf32> to vector<128x256xbf16>
    %c0_12 = arith.constant 0 : index
    %c0_13 = arith.constant 0 : index
    %20 = vector.load %arg6[%c0_12, %c0_13] : memref<256x128xbf16, #tpu.memory_space<vmem>>, vector<256x128xbf16>
    %cst_14 = arith.constant dense<0.000000e+00> : vector<128x128xf32>
    %21 = tpu.matmul %19, %20, %cst_14 {dimension_numbers = #tpu.dot_dimension_numbers<[1], [0], [0], [1], [0, 0, 1, 1], [], []>} : vector<128x256xbf16>, vector<256x128xbf16>, vector<128x128xf32> -> vector<128x128xf32>
    %c0_15 = arith.constant 0 : index
    %c0_16 = arith.constant 0 : index
    %22 = vector.load %arg7[%c0_15, %c0_16] : memref<1x128xf32, #tpu.memory_space<vmem>>, vector<1x128xf32>
    %23 = vector.broadcast %22 : vector<1x128xf32> to vector<128x128xf32>
    %24 = arith.addf %21, %23 : vector<128x128xf32>
    %cst_17 = arith.constant 2.000000e-01 : f32
    %25 = vector.broadcast %cst_17 : f32 to vector<128x128xf32>
    %26 = arith.mulf %25, %24 : vector<128x128xf32>
    %27 = arith.maximumf %24, %26 : vector<128x128xf32>
    %c0_18 = arith.constant 0 : index
    %c0_19 = arith.constant 0 : index
    %28 = vector.load %arg8[%c0_18, %c0_19] : memref<1x128xf32, #tpu.memory_space<vmem>>, vector<1x128xf32>
    %29 = vector.broadcast %28 : vector<1x128xf32> to vector<128x128xf32>
    %30 = arith.mulf %27, %29 : vector<128x128xf32>
    %cst_20 = arith.constant dense<0.000000e+00> : vector<128xf32>
    %31 = vector.multi_reduction <add>, %30, %cst_20 [1] : vector<128x128xf32> to vector<128xf32>
    %32 = vector.shape_cast %31 : vector<128xf32> to vector<128x1xf32>
    %c0_21 = arith.constant 0 : index
    %33 = memref.load %arg9[%c0_21] : memref<1xf32, #tpu.memory_space<smem>>
    %34 = vector.broadcast %33 : f32 to vector<128x1xf32>
    %35 = arith.addf %32, %34 : vector<128x1xf32>
    %c0_22 = arith.constant 0 : index
    %c0_23 = arith.constant 0 : index
    %36 = vector.load %arg10[%c0_22, %c0_23] : memref<128x1xf32, #tpu.memory_space<vmem>>, vector<128x1xf32>
    tpu.vector_store %arg10[%c0_22, %c0_23], %35 {strides = array<i32>} : memref<128x1xf32, #tpu.memory_space<vmem>>, vector<128x1xf32>,
    return
  }
  func.func @transform_0(%arg0: i32) -> (i32, i32) {
    %c0_i32 = arith.constant 0 : i32
    %c0_i32_0 = arith.constant 0 : i32
    return %arg0, %c0_i32 : i32, i32
  }
  func.func @transform_1(%arg0: i32) -> (i32, i32) {
    %c0_i32 = arith.constant 0 : i32
    %c0_i32_0 = arith.constant 0 : i32
    %c0_i32_1 = arith.constant 0 : i32
    return %c0_i32, %c0_i32_0 : i32, i32
  }
  func.func @transform_2(%arg0: i32) -> (i32, i32) {
    %c0_i32 = arith.constant 0 : i32
    %c0_i32_0 = arith.constant 0 : i32
    %c0_i32_1 = arith.constant 0 : i32
    return %c0_i32, %c0_i32_0 : i32, i32
  }
  func.func @transform_3(%arg0: i32) -> (i32, i32) {
    %c0_i32 = arith.constant 0 : i32
    %c0_i32_0 = arith.constant 0 : i32
    %c0_i32_1 = arith.constant 0 : i32
    return %c0_i32, %c0_i32_0 : i32, i32
  }
  func.func @transform_4(%arg0: i32) -> (i32, i32) {
    %c0_i32 = arith.constant 0 : i32
    %c0_i32_0 = arith.constant 0 : i32
    %c0_i32_1 = arith.constant 0 : i32
    return %c0_i32, %c0_i32_0 : i32, i32
  }
  func.func @transform_5(%arg0: i32) -> (i32, i32) {
    %c0_i32 = arith.constant 0 : i32
    %c0_i32_0 = arith.constant 0 : i32
    %c0_i32_1 = arith.constant 0 : i32
    return %c0_i32, %c0_i32_0 : i32, i32
  }
  func.func @transform_6(%arg0: i32) -> (i32, i32) {
    %c0_i32 = arith.constant 0 : i32
    %c0_i32_0 = arith.constant 0 : i32
    %c0_i32_1 = arith.constant 0 : i32
    return %c0_i32, %c0_i32_0 : i32, i32
  }
  func.func @transform_7(%arg0: i32) -> (i32, i32) {
    %c0_i32 = arith.constant 0 : i32
    %c0_i32_0 = arith.constant 0 : i32
    %c0_i32_1 = arith.constant 0 : i32
    return %c0_i32, %c0_i32_0 : i32, i32
  }
  func.func @transform_8(%arg0: i32) -> i32 {
    %c0_i32 = arith.constant 0 : i32
    %c0_i32_0 = arith.constant 0 : i32
    return %c0_i32 : i32
  }
  func.func @transform_9(%arg0: i32) -> (i32, i32) {
    %c0_i32 = arith.constant 0 : i32
    %c0_i32_0 = arith.constant 0 : i32
    return %arg0, %c0_i32 : i32, i32
  }
}

</mosaic_0001>

<llo_original>
// kernel: tpu_custom_call.1
$region0: #{tpu_custom_call.1}
  #allocation0 [shape = 'u32[]', space=smem, size = 0x4, offset = 0x4, fixed_abs, tag = 'smem constant byte address 0x4 - core index']
  #allocation1 [shape = 'u32[144,128]{1,0:T(1,128)}', space=vmem, size = 0x12000, scoped, tag = 'internal scratch']
  #allocation2 [shape = 'f32[1]{0:T(128)S(6)}', space=smem, size = 0x200, scoped, tag = 'scoped memory for tpu_custom_call.1']
  %s0 = inlined_call_operand.vmem [shape: f32[256,784], index: 0, kind: input, shape index: {}]
  %s1 = inlined_call_operand.vmem [shape: bf16[784,512], index: 1, kind: input, shape index: {}]
  %s2 = inlined_call_operand.vmem [shape: f32[1,512], index: 2, kind: input, shape index: {}]
  %s3 = inlined_call_operand.vmem [shape: bf16[512,256], index: 3, kind: input, shape index: {}]
  %s4 = inlined_call_operand.vmem [shape: f32[1,256], index: 4, kind: input, shape index: {}]
  %s5 = inlined_call_operand.vmem [shape: bf16[256,128], index: 5, kind: input, shape index: {}]
  %s6 = inlined_call_operand.vmem [shape: f32[1,128], index: 6, kind: input, shape index: {}]
  %s7 = inlined_call_operand.vmem [shape: f32[1,128], index: 7, kind: input, shape index: {}]
  %s8 = inlined_call_operand.<no memory space> [shape: f32[1], index: 8, kind: input, shape index: {}]
  %s9 = inlined_call_operand.vmem [shape: f32[256,1], index: 9, kind: output, shape index: {}]
  %s10 = sld [smem:[#allocation0]]
  $region69: #{tpu_custom_call.1} parent=0
    _
  %s12 = ssub.s32 1, %s10
  %s13 = scalar_select 0, %s12, %s10
  %14 = sst [smem:[#allocation2]] %s8
  loop: start=0, step=1, limit=4
  $region2: #{tpu_custom_call.1} parent=0 // loop_pre_header
    _
  $region3: #{tpu_custom_call.1} parent=0 // loop_header
    %s16 = sphi 0, %s20
    %p17 = scmp.ge.s32.totalorder %s16, 4
    %s26 = sphi 0, %s28
    %s29 = sphi 0, %s26
    %s30 = sphi 0, %s29
    %s46 = sphi 0, %s30
    %s50 = sphi 0, %s50
    %s52 = sphi 0, %s50
    %s53 = sphi 0, %s52
    %s67 = sphi 0, %s53
    %s71 = sphi 0, %s71
    %s73 = sphi 0, %s71
    %s74 = sphi 0, %s73
    %s88 = sphi 0, %s74
    %s92 = sphi 0, %s92
    %s94 = sphi 0, %s92
    %s95 = sphi 0, %s94
    %s109 = sphi 0, %s95
    %s113 = sphi 0, %s113
    %s115 = sphi 0, %s113
    %s116 = sphi 0, %s115
    %s130 = sphi 0, %s116
    %s134 = sphi 0, %s134
    %s136 = sphi 0, %s134
    %s137 = sphi 0, %s136
    %s151 = sphi 0, %s137
    %s155 = sphi 0, %s155
    %s157 = sphi 0, %s155
    %s158 = sphi 0, %s157
    %s172 = sphi 0, %s158
    %s176 = sphi 0, %s176
    %s178 = sphi 0, %s176
    %s179 = sphi 0, %s178
    %s193 = sphi 0, %s179
    %s197 = sphi 0, %s197
    %s199 = sphi 0, %s197
    %s200 = sphi 0, %s199
    %s214 = sphi 0, %s200
    %s220 = sphi 0, %s222
    %s223 = sphi 0, %s220
    %s224 = sphi 0, %s223
    %s240 = sphi 0, %s224
  $region4: #{tpu_custom_call.1} parent=0 // loop_header_branch
    %19 = sbr.rel (%p17) target = $region8
  $region5: #{tpu_custom_call.1} parent=0 // loop_body
    %s21 = ssub.s32 %s16, 1
    %s22 = ssub.s32 %s16, 2
    %s23 = sadd.s32 %s16, 1
    %s24 = ssub.s32 %s16, %s23
    %p25 = scmp.eq.s32.totalorder %s24, 0
    %s27 = sadd.s32 %s26, 1
    %s28 = scalar_select %p25, %s26, %s27
    %p31 = pneg %p25
    %p32 = scmp.eq.s32.totalorder %s16, 1
    %p33 = por %p31, %p32
    %p34 = scmp.ne.s32.totalorder %s26, %s29
    %p35 = scmp.eq.s32.totalorder %s16, 0
    %p36 = por %p34, %p35
    %p37 = scmp.ne.s32.totalorder %s26, %s29
    %p38 = scmp.eq.s32.totalorder %s21, 1
    %p39 = por %p37, %p38
    %p40 = scmp.ne.s32.totalorder %s29, %s30
    %p41 = scmp.eq.s32.totalorder %s21, 0
    %p42 = por %p40, %p41
    %p43 = scmp.ne.s32.totalorder %s29, %s30
    %p44 = scmp.eq.s32.totalorder %s22, 1
    %p45 = por %p43, %p44
    %p47 = scmp.ne.s32.totalorder %s30, %s46
    %p48 = scmp.eq.s32.totalorder %s22, 0
    %p49 = por %p47, %p48
    %s51 = sadd.s32 %s50, 1
    %p54 = scmp.eq.s32.totalorder %s16, 1
    %p55 = scmp.ne.s32.totalorder %s50, %s52
    %p56 = scmp.eq.s32.totalorder %s16, 0
    %p57 = por %p55, %p56
    %p58 = scmp.ne.s32.totalorder %s50, %s52
    %p59 = scmp.eq.s32.totalorder %s21, 1
    %p60 = por %p58, %p59
    %p61 = scmp.ne.s32.totalorder %s52, %s53
    %p62 = scmp.eq.s32.totalorder %s21, 0
    %p63 = por %p61, %p62
    %p64 = scmp.ne.s32.totalorder %s52, %s53
    %p65 = scmp.eq.s32.totalorder %s22, 1
    %p66 = por %p64, %p65
    %p68 = scmp.ne.s32.totalorder %s53, %s67
    %p69 = scmp.eq.s32.totalorder %s22, 0
    %p70 = por %p68, %p69
    %s72 = sadd.s32 %s71, 1
    %p75 = scmp.eq.s32.totalorder %s16, 1
    %p76 = scmp.ne.s32.totalorder %s71, %s73
    %p77 = scmp.eq.s32.totalorder %s16, 0
    %p78 = por %p76, %p77
    %p79 = scmp.ne.s32.totalorder %s71, %s73
    %p80 = scmp.eq.s32.totalorder %s21, 1
    %p81 = por %p79, %p80
    %p82 = scmp.ne.s32.totalorder %s73, %s74
    %p83 = scmp.eq.s32.totalorder %s21, 0
    %p84 = por %p82, %p83
    %p85 = scmp.ne.s32.totalorder %s73, %s74
    %p86 = scmp.eq.s32.totalorder %s22, 1
    %p87 = por %p85, %p86
    %p89 = scmp.ne.s32.totalorder %s74, %s88
    %p90 = scmp.eq.s32.totalorder %s22, 0
    %p91 = por %p89, %p90
    %s93 = sadd.s32 %s92, 1
    %p96 = scmp.eq.s32.totalorder %s16, 1
    %p97 = scmp.ne.s32.totalorder %s92, %s94
    %p98 = scmp.eq.s32.totalorder %s16, 0
    %p99 = por %p97, %p98
    %p100 = scmp.ne.s32.totalorder %s92, %s94
    %p101 = scmp.eq.s32.totalorder %s21, 1
    %p102 = por %p100, %p101
    %p103 = scmp.ne.s32.totalorder %s94, %s95
    %p104 = scmp.eq.s32.totalorder %s21, 0
    %p105 = por %p103, %p104
    %p106 = scmp.ne.s32.totalorder %s94, %s95
    %p107 = scmp.eq.s32.totalorder %s22, 1
    %p108 = por %p106, %p107
    %p110 = scmp.ne.s32.totalorder %s95, %s109
    %p111 = scmp.eq.s32.totalorder %s22, 0
    %p112 = por %p110, %p111
    %s114 = sadd.s32 %s113, 1
    %p117 = scmp.eq.s32.totalorder %s16, 1
    %p118 = scmp.ne.s32.totalorder %s113, %s115
    %p119 = scmp.eq.s32.totalorder %s16, 0
    %p120 = por %p118, %p119
    %p121 = scmp.ne.s32.totalorder %s113, %s115
    %p122 = scmp.eq.s32.totalorder %s21, 1
    %p123 = por %p121, %p122
    %p124 = scmp.ne.s32.totalorder %s115, %s116
    %p125 = scmp.eq.s32.totalorder %s21, 0
    %p126 = por %p124, %p125
    %p127 = scmp.ne.s32.totalorder %s115, %s116
    %p128 = scmp.eq.s32.totalorder %s22, 1
    %p129 = por %p127, %p128
    %p131 = scmp.ne.s32.totalorder %s116, %s130
    %p132 = scmp.eq.s32.totalorder %s22, 0
    %p133 = por %p131, %p132
    %s135 = sadd.s32 %s134, 1
    %p138 = scmp.eq.s32.totalorder %s16, 1
    %p139 = scmp.ne.s32.totalorder %s134, %s136
    %p140 = scmp.eq.s32.totalorder %s16, 0
    %p141 = por %p139, %p140
    %p142 = scmp.ne.s32.totalorder %s134, %s136
    %p143 = scmp.eq.s32.totalorder %s21, 1
    %p144 = por %p142, %p143
    %p145 = scmp.ne.s32.totalorder %s136, %s137
    %p146 = scmp.eq.s32.totalorder %s21, 0
    %p147 = por %p145, %p146
    %p148 = scmp.ne.s32.totalorder %s136, %s137
    %p149 = scmp.eq.s32.totalorder %s22, 1
    %p150 = por %p148, %p149
    %p152 = scmp.ne.s32.totalorder %s137, %s151
    %p153 = scmp.eq.s32.totalorder %s22, 0
    %p154 = por %p152, %p153
    %s156 = sadd.s32 %s155, 1
    %p159 = scmp.eq.s32.totalorder %s16, 1
    %p160 = scmp.ne.s32.totalorder %s155, %s157
    %p161 = scmp.eq.s32.totalorder %s16, 0
    %p162 = por %p160, %p161
    %p163 = scmp.ne.s32.totalorder %s155, %s157
    %p164 = scmp.eq.s32.totalorder %s21, 1
    %p165 = por %p163, %p164
    %p166 = scmp.ne.s32.totalorder %s157, %s158
    %p167 = scmp.eq.s32.totalorder %s21, 0
    %p168 = por %p166, %p167
    %p169 = scmp.ne.s32.totalorder %s157, %s158
    %p170 = scmp.eq.s32.totalorder %s22, 1
    %p171 = por %p169, %p170
    %p173 = scmp.ne.s32.totalorder %s158, %s172
    %p174 = scmp.eq.s32.totalorder %s22, 0
    %p175 = por %p173, %p174
    %s177 = sadd.s32 %s176, 1
    %p180 = scmp.eq.s32.totalorder %s16, 1
    %p181 = scmp.ne.s32.totalorder %s176, %s178
    %p182 = scmp.eq.s32.totalorder %s16, 0
    %p183 = por %p181, %p182
    %p184 = scmp.ne.s32.totalorder %s176, %s178
    %p185 = scmp.eq.s32.totalorder %s21, 1
    %p186 = por %p184, %p185
    %p187 = scmp.ne.s32.totalorder %s178, %s179
    %p188 = scmp.eq.s32.totalorder %s21, 0
    %p189 = por %p187, %p188
    %p190 = scmp.ne.s32.totalorder %s178, %s179
    %p191 = scmp.eq.s32.totalorder %s22, 1
    %p192 = por %p190, %p191
    %p194 = scmp.ne.s32.totalorder %s179, %s193
    %p195 = scmp.eq.s32.totalorder %s22, 0
    %p196 = por %p194, %p195
    %s198 = sadd.s32 %s197, 1
    %p201 = scmp.eq.s32.totalorder %s16, 1
    %p202 = scmp.ne.s32.totalorder %s197, %s199
    %p203 = scmp.eq.s32.totalorder %s16, 0
    %p204 = por %p202, %p203
    %p205 = scmp.ne.s32.totalorder %s197, %s199
    %p206 = scmp.eq.s32.totalorder %s21, 1
    %p207 = por %p205, %p206
    %p208 = scmp.ne.s32.totalorder %s199, %s200
    %p209 = scmp.eq.s32.totalorder %s21, 0
    %p210 = por %p208, %p209
    %p211 = scmp.ne.s32.totalorder %s199, %s200
    %p212 = scmp.eq.s32.totalorder %s22, 1
    %p213 = por %p211, %p212
    %p215 = scmp.ne.s32.totalorder %s200, %s214
    %p216 = scmp.eq.s32.totalorder %s22, 0
    %p217 = por %p215, %p216
    %s218 = ssub.s32 %s16, %s23
    %p219 = scmp.eq.s32.totalorder %s218, 0
    %s221 = sadd.s32 %s220, 1
    %s222 = scalar_select %p219, %s220, %s221
    %p225 = pneg %p219
    %p226 = scmp.eq.s32.totalorder %s16, 1
    %p227 = por %p225, %p226
    %p228 = scmp.ne.s32.totalorder %s220, %s223
    %p229 = scmp.eq.s32.totalorder %s16, 0
    %p230 = por %p228, %p229
    %p231 = scmp.ne.s32.totalorder %s220, %s223
    %p232 = scmp.eq.s32.totalorder %s21, 1
    %p233 = por %p231, %p232
    %p234 = scmp.ne.s32.totalorder %s223, %s224
    %p235 = scmp.eq.s32.totalorder %s21, 0
    %p236 = por %p234, %p235
    %p237 = scmp.ne.s32.totalorder %s223, %s224
    %p238 = scmp.eq.s32.totalorder %s22, 1
    %p239 = por %p237, %p238
    %p241 = scmp.ne.s32.totalorder %s224, %s240
    %p242 = scmp.eq.s32.totalorder %s22, 0
    %p243 = por %p241, %p242
    %p244 = scmp.le.s32.totalorder 1, %s16
    %p245 = scmp.lt.s32.totalorder %s16, 3
    %p246 = pnand %p244, %p245
    %p247 = pneg %p246
    // Predicated region
    $region9: #{tpu_custom_call.1} parent=5 // pred_check
      _
    $region10: #{tpu_custom_call.1} parent=5 // pred_check_branch
      %249 = sbr.rel (%p246) target = $region12
    $region11: #{tpu_custom_call.1} parent=5 // pred_region
      %s250 = ssub.s32 %s16, 1
      // Predicated region
      $region13: #{tpu_custom_call.1} parent=11 // pred_check
        %p251 = pneg %p63
      $region14: #{tpu_custom_call.1} parent=11 // pred_check_branch
        %253 = sbr.rel (%p251) target = $region16
      $region15: #{tpu_custom_call.1} parent=11 // pred_region
        _
      $region16: #{tpu_custom_call.1} parent=11 // pred_fallthru
        _
      // Predicated region
      $region17: #{tpu_custom_call.1} parent=11 // pred_check
        %p254 = pneg %p84
      $region18: #{tpu_custom_call.1} parent=11 // pred_check_branch
        %256 = sbr.rel (%p254) target = $region20
      $region19: #{tpu_custom_call.1} parent=11 // pred_region
        _
      $region20: #{tpu_custom_call.1} parent=11 // pred_fallthru
        _
      // Predicated region
      $region21: #{tpu_custom_call.1} parent=11 // pred_check
        %p257 = pneg %p105
      $region22: #{tpu_custom_call.1} parent=11 // pred_check_branch
        %259 = sbr.rel (%p257) target = $region24
      $region23: #{tpu_custom_call.1} parent=11 // pred_region
        _
      $region24: #{tpu_custom_call.1} parent=11 // pred_fallthru
        _
      // Predicated region
      $region25: #{tpu_custom_call.1} parent=11 // pred_check
        %p260 = pneg %p126
      $region26: #{tpu_custom_call.1} parent=11 // pred_check_branch
        %262 = sbr.rel (%p260) target = $region28
      $region27: #{tpu_custom_call.1} parent=11 // pred_region
        _
      $region28: #{tpu_custom_call.1} parent=11 // pred_fallthru
        _
      // Predicated region
      $region29: #{tpu_custom_call.1} parent=11 // pred_check
        %p263 = pneg %p147
      $region30: #{tpu_custom_call.1} parent=11 // pred_check_branch
        %265 = sbr.rel (%p263) target = $region32
      $region31: #{tpu_custom_call.1} parent=11 // pred_region
        _
      $region32: #{tpu_custom_call.1} parent=11 // pred_fallthru
        _
      // Predicated region
      $region33: #{tpu_custom_call.1} parent=11 // pred_check
        %p266 = pneg %p168
      $region34: #{tpu_custom_call.1} parent=11 // pred_check_branch
        %268 = sbr.rel (%p266) target = $region36
      $region35: #{tpu_custom_call.1} parent=11 // pred_region
        _
      $region36: #{tpu_custom_call.1} parent=11 // pred_fallthru
        _
      // Predicated region
      $region37: #{tpu_custom_call.1} parent=11 // pred_check
        %p269 = pneg %p189
      $region38: #{tpu_custom_call.1} parent=11 // pred_check_branch
        %271 = sbr.rel (%p269) target = $region40
      $region39: #{tpu_custom_call.1} parent=11 // pred_region
        _
      $region40: #{tpu_custom_call.1} parent=11 // pred_fallthru
        _
      // Predicated region
      $region41: #{tpu_custom_call.1} parent=11 // pred_check
        %p272 = pneg %p210
      $region42: #{tpu_custom_call.1} parent=11 // pred_check_branch
        %274 = sbr.rel (%p272) target = $region44
      $region43: #{tpu_custom_call.1} parent=11 // pred_region
        _
      $region44: #{tpu_custom_call.1} parent=11 // pred_fallthru
        _
    $region12: #{tpu_custom_call.1} parent=5 // pred_fallthru
      _
    %p275 = scmp.lt.s32.totalorder %s16, 2
    // Predicated region
    $region45: #{tpu_custom_call.1} parent=5 // pred_check
      %p276 = pneg %p275
    $region46: #{tpu_custom_call.1} parent=5 // pred_check_branch
      %278 = sbr.rel (%p276) target = $region48
    $region47: #{tpu_custom_call.1} parent=5 // pred_region
      // Predicated region
      $region49: #{tpu_custom_call.1} parent=47 // pred_check
        %p279 = pneg %p36
      $region50: #{tpu_custom_call.1} parent=47 // pred_check_branch
        %281 = sbr.rel (%p279) target = $region52
      $region51: #{tpu_custom_call.1} parent=47 // pred_region
        %s282 = smul.u32 16, %s16
        %p283 = scmp.lt.s32.totalorder %s282, 31
        %s284 = scalar_select %p283, %s282, 31
        %s285 = smul.addr %s284, 7
        %s286 = smul.addr %s285, 8
        %s287 = scalar_lea.vmem %s0, %s286
        %s288 = smul.u32 16, %s16
      $region52: #{tpu_custom_call.1} parent=47 // pred_fallthru
        _
    $region48: #{tpu_custom_call.1} parent=5 // pred_fallthru
      _
    %p289 = scmp.le.s32.totalorder 1, %s16
    %p290 = scmp.lt.s32.totalorder %s16, 3
    %p291 = pnand %p289, %p290
    %p292 = pneg %p291
    // Predicated region
    $region53: #{tpu_custom_call.1} parent=5 // pred_check
      _
    $region54: #{tpu_custom_call.1} parent=5 // pred_check_branch
      %294 = sbr.rel (%p291) target = $region56
    $region55: #{tpu_custom_call.1} parent=5 // pred_region
      %s295 = ssub.s32 %s16, 1
      %s296 = smul.u32 16, %s21
      %p297 = scmp.lt.s32.totalorder %s296, 31
      %s298 = scalar_select %p297, %s296, 31
      %s299 = smul.addr %s298, 7
      %s300 = smul.addr %s299, 8
      %s301 = scalar_lea.vmem %s0, %s300
      %p302 = pneg %p42
      %p303 = pneg %p39
      %p304 = pneg %p63
      %p305 = pneg %p60
      %p306 = pneg %p84
      %p307 = pneg %p81
      %p308 = pneg %p105
      %p309 = pneg %p102
      %p310 = pneg %p126
      %p311 = pneg %p123
      %p312 = pneg %p147
      %p313 = pneg %p144
      %p314 = pneg %p168
      %p315 = pneg %p165
      %p316 = pneg %p189
      %p317 = pneg %p186
      %p318 = pneg %p210
      %p319 = pneg %p207
      %p320 = pneg %p236
      %p321 = pneg %p233
      %s322 = smul.u32 16, %s21
      %p323 = scmp.lt.s32.totalorder %s322, 31
      %s324 = scalar_select %p323, %s322, 31
      %s325 = smul.addr %s324, 8
      %s326 = scalar_lea.vmem %s9, %s325
      %s327 = smul.u32 16, %s21
      %p328 = scmp.lt.s32.totalorder %s327, 31
      %s329 = scalar_select %p328, %s327, 31
      %s330 = smul.addr %s329, 7
      %s331 = smul.addr %s330, 8
      %s332 = scalar_lea.vmem %s0, %s331
      %s333 = smul.u32 16, %s21
      %s334 = smul.u32 16, %s21
      %p335 = scmp.lt.s32.totalorder %s334, 31
      %s336 = scalar_select %p335, %s334, 31
      %s337 = smul.addr %s336, 8
      %s338 = scalar_lea.vmem %s9, %s337
      %s339 = smul.u32 16, %s21
      %v341 = vld [vmem:[%s332] sm:$0xff]
      %v342 = vld [vmem:[%s332 + $0x8] sm:$0xff]
      %v343 = vld [vmem:[%s332 + $0x10] sm:$0xff]
      %v344 = vld [vmem:[%s332 + $0x18] sm:$0xff]
      %v345 = vld [vmem:[%s332 + $0x20] sm:$0xff]
      %v346 = vld [vmem:[%s332 + $0x28] sm:$0xff]
      %v347 = vld [vmem:[%s332 + $0x30] sm:$0xff]
      %v348 = vld [vmem:[%s332 + $0x38] sm:$0xff]
      %v349 = vld [vmem:[%s332 + $0x40] sm:$0xff]
      %v350 = vld [vmem:[%s332 + $0x48] sm:$0xff]
      %v351 = vld [vmem:[%s332 + $0x50] sm:$0xff]
      %v352 = vld [vmem:[%s332 + $0x58] sm:$0xff]
      %v353 = vld [vmem:[%s332 + $0x60] sm:$0xff]
      %v354 = vld [vmem:[%s332 + $0x68] sm:$0xff]
      %v355 = vld [vmem:[%s332 + $0x70] sm:$0xff]
      %v356 = vld [vmem:[%s332 + $0x78] sm:$0xff]
      %v357 = vld [vmem:[%s332 + $0x80] sm:$0xff]
      %v358 = vld [vmem:[%s332 + $0x88] sm:$0xff]
      %v359 = vld [vmem:[%s332 + $0x90] sm:$0xff]
      %v360 = vld [vmem:[%s332 + $0x98] sm:$0xff]
      %v361 = vld [vmem:[%s332 + $0xa0] sm:$0xff]
      %v362 = vld [vmem:[%s332 + $0xa8] sm:$0xff]
      %v363 = vld [vmem:[%s332 + $0xb0] sm:$0xff]
      %v364 = vld [vmem:[%s332 + $0xb8] sm:$0xff]
      %v365 = vld [vmem:[%s332 + $0xc0] sm:$0xff]
      %v366 = vld [vmem:[%s332 + $0xc8] sm:$0xff]
      %v367 = vld [vmem:[%s332 + $0xd0] sm:$0xff]
      %v368 = vld [vmem:[%s332 + $0xd8] sm:$0xff]
      %v369 = vld [vmem:[%s332 + $0xe0] sm:$0xff]
      %v370 = vld [vmem:[%s332 + $0xe8] sm:$0xff]
      %v371 = vld [vmem:[%s332 + $0xf0] sm:$0xff]
      %v372 = vld [vmem:[%s332 + $0xf8] sm:$0xff]
      %v373 = vld [vmem:[%s332 + $0x100] sm:$0xff]
      %v374 = vld [vmem:[%s332 + $0x108] sm:$0xff]
      %v375 = vld [vmem:[%s332 + $0x110] sm:$0xff]
      %v376 = vld [vmem:[%s332 + $0x118] sm:$0xff]
      %v377 = vld [vmem:[%s332 + $0x120] sm:$0xff]
      %v378 = vld [vmem:[%s332 + $0x128] sm:$0xff]
      %v379 = vld [vmem:[%s332 + $0x130] sm:$0xff]
      %v380 = vld [vmem:[%s332 + $0x138] sm:$0xff]
      %v381 = vld [vmem:[%s332 + $0x140] sm:$0xff]
      %v382 = vld [vmem:[%s332 + $0x148] sm:$0xff]
      %v383 = vld [vmem:[%s332 + $0x150] sm:$0xff]
      %v384 = vld [vmem:[%s332 + $0x158] sm:$0xff]
      %v385 = vld [vmem:[%s332 + $0x160] sm:$0xff]
      %v386 = vld [vmem:[%s332 + $0x168] sm:$0xff]
      %v387 = vld [vmem:[%s332 + $0x170] sm:$0xff]
      %v388 = vld [vmem:[%s332 + $0x178] sm:$0xff]
      %v389 = vld [vmem:[%s332 + $0x180] sm:$0xff]
      %v390 = vld [vmem:[%s332 + $0x188] sm:$0xff]
      %v391 = vld [vmem:[%s332 + $0x190] sm:$0xff]
      %v392 = vld [vmem:[%s332 + $0x198] sm:$0xff]
      %v393 = vld [vmem:[%s332 + $0x1a0] sm:$0xff]
      %v394 = vld [vmem:[%s332 + $0x1a8] sm:$0xff]
      %v395 = vld [vmem:[%s332 + $0x1b0] sm:$0xff]
      %v396 = vld [vmem:[%s332 + $0x1b8] sm:$0xff]
      %v397 = vld [vmem:[%s332 + $0x1c0] sm:$0xff]
      %v398 = vld [vmem:[%s332 + $0x1c8] sm:$0xff]
      %v399 = vld [vmem:[%s332 + $0x1d0] sm:$0xff]
      %v400 = vld [vmem:[%s332 + $0x1d8] sm:$0xff]
      %v401 = vld [vmem:[%s332 + $0x1e0] sm:$0xff]
      %v402 = vld [vmem:[%s332 + $0x1e8] sm:$0xff]
      %v403 = vld [vmem:[%s332 + $0x1f0] sm:$0xff]
      %v404 = vld [vmem:[%s332 + $0x1f8] sm:$0xff]
      %v405 = vld [vmem:[%s332 + $0x200] sm:$0xff]
      %v406 = vld [vmem:[%s332 + $0x208] sm:$0xff]
      %v407 = vld [vmem:[%s332 + $0x210] sm:$0xff]
      %v408 = vld [vmem:[%s332 + $0x218] sm:$0xff]
      %v409 = vld [vmem:[%s332 + $0x220] sm:$0xff]
      %v410 = vld [vmem:[%s332 + $0x228] sm:$0xff]
      %v411 = vld [vmem:[%s332 + $0x230] sm:$0xff]
      %v412 = vld [vmem:[%s332 + $0x238] sm:$0xff]
      %v413 = vld [vmem:[%s332 + $0x240] sm:$0xff]
      %v414 = vld [vmem:[%s332 + $0x248] sm:$0xff]
      %v415 = vld [vmem:[%s332 + $0x250] sm:$0xff]
      %v416 = vld [vmem:[%s332 + $0x258] sm:$0xff]
      %v417 = vld [vmem:[%s332 + $0x260] sm:$0xff]
      %v418 = vld [vmem:[%s332 + $0x268] sm:$0xff]
      %v419 = vld [vmem:[%s332 + $0x270] sm:$0xff]
      %v420 = vld [vmem:[%s332 + $0x278] sm:$0xff]
      %v421 = vld [vmem:[%s332 + $0x280] sm:$0xff]
      %v422 = vld [vmem:[%s332 + $0x288] sm:$0xff]
      %v423 = vld [vmem:[%s332 + $0x290] sm:$0xff]
      %v424 = vld [vmem:[%s332 + $0x298] sm:$0xff]
      %v425 = vld [vmem:[%s332 + $0x2a0] sm:$0xff]
      %v426 = vld [vmem:[%s332 + $0x2a8] sm:$0xff]
      %v427 = vld [vmem:[%s332 + $0x2b0] sm:$0xff]
      %v428 = vld [vmem:[%s332 + $0x2b8] sm:$0xff]
      %v429 = vld [vmem:[%s332 + $0x2c0] sm:$0xff]
      %v430 = vld [vmem:[%s332 + $0x2c8] sm:$0xff]
      %v431 = vld [vmem:[%s332 + $0x2d0] sm:$0xff]
      %v432 = vld [vmem:[%s332 + $0x2d8] sm:$0xff]
      %v433 = vld [vmem:[%s332 + $0x2e0] sm:$0xff]
      %v434 = vld [vmem:[%s332 + $0x2e8] sm:$0xff]
      %v435 = vld [vmem:[%s332 + $0x2f0] sm:$0xff]
      %v436 = vld [vmem:[%s332 + $0x2f8] sm:$0xff]
      %v437 = vld [vmem:[%s332 + $0x300] sm:$0xff]
      %v438 = vld [vmem:[%s332 + $0x308] sm:$0xff]
      %v439 = vld [vmem:[%s332 + $0x310] sm:$0xff]
      %v440 = vld [vmem:[%s332 + $0x318] sm:$0xff]
      %v441 = vld [vmem:[%s332 + $0x320] sm:$0xff]
      %v442 = vld [vmem:[%s332 + $0x328] sm:$0xff]
      %v443 = vld [vmem:[%s332 + $0x330] sm:$0xff]
      %v444 = vld [vmem:[%s332 + $0x338] sm:$0xff]
      %v445 = vld [vmem:[%s332 + $0x340] sm:$0xff]
      %v446 = vld [vmem:[%s332 + $0x348] sm:$0xff]
      %v447 = vld [vmem:[%s332 + $0x350] sm:$0xff]
      %v448 = vld [vmem:[%s332 + $0x358] sm:$0xff]
      %v449 = vld [vmem:[%s332 + $0x360] sm:$0xff]
      %v450 = vld [vmem:[%s332 + $0x368] sm:$0xff]
      %v451 = vld [vmem:[%s332 + $0x370] sm:$0xff]
      %v452 = vld [vmem:[%s332 + $0x378] sm:$0xff]
      %v453 = vpack.c.bf16 %v348, %v341
      %v454 = vpack.c.bf16 %v349, %v342
      %v455 = vpack.c.bf16 %v350, %v343
      %v456 = vpack.c.bf16 %v351, %v344
      %v457 = vpack.c.bf16 %v352, %v345
      %v458 = vpack.c.bf16 %v353, %v346
      %v459 = vpack.c.bf16 %v354, %v347
      %v460 = vpack.c.bf16 %v362, %v355
      %v461 = vpack.c.bf16 %v363, %v356
      %v462 = vpack.c.bf16 %v364, %v357
      %v463 = vpack.c.bf16 %v365, %v358
      %v464 = vpack.c.bf16 %v366, %v359
      %v465 = vpack.c.bf16 %v367, %v360
      %v466 = vpack.c.bf16 %v368, %v361
      %v467 = vpack.c.bf16 %v376, %v369
      %v468 = vpack.c.bf16 %v377, %v370
      %v469 = vpack.c.bf16 %v378, %v371
      %v470 = vpack.c.bf16 %v379, %v372
      %v471 = vpack.c.bf16 %v380, %v373
      %v472 = vpack.c.bf16 %v381, %v374
      %v473 = vpack.c.bf16 %v382, %v375
      %v474 = vpack.c.bf16 %v390, %v383
      %v475 = vpack.c.bf16 %v391, %v384
      %v476 = vpack.c.bf16 %v392, %v385
      %v477 = vpack.c.bf16 %v393, %v386
      %v478 = vpack.c.bf16 %v394, %v387
      %v479 = vpack.c.bf16 %v395, %v388
      %v480 = vpack.c.bf16 %v396, %v389
      %v481 = vpack.c.bf16 %v404, %v397
      %v482 = vpack.c.bf16 %v405, %v398
      %v483 = vpack.c.bf16 %v406, %v399
      %v484 = vpack.c.bf16 %v407, %v400
      %v485 = vpack.c.bf16 %v408, %v401
      %v486 = vpack.c.bf16 %v409, %v402
      %v487 = vpack.c.bf16 %v410, %v403
      %v488 = vpack.c.bf16 %v418, %v411
      %v489 = vpack.c.bf16 %v419, %v412
      %v490 = vpack.c.bf16 %v420, %v413
      %v491 = vpack.c.bf16 %v421, %v414
      %v492 = vpack.c.bf16 %v422, %v415
      %v493 = vpack.c.bf16 %v423, %v416
      %v494 = vpack.c.bf16 %v424, %v417
      %v495 = vpack.c.bf16 %v432, %v425
      %v496 = vpack.c.bf16 %v433, %v426
      %v497 = vpack.c.bf16 %v434, %v427
      %v498 = vpack.c.bf16 %v435, %v428
      %v499 = vpack.c.bf16 %v436, %v429
      %v500 = vpack.c.bf16 %v437, %v430
      %v501 = vpack.c.bf16 %v438, %v431
      %v502 = vpack.c.bf16 %v446, %v439
      %v503 = vpack.c.bf16 %v447, %v440
      %v504 = vpack.c.bf16 %v448, %v441
      %v505 = vpack.c.bf16 %v449, %v442
      %v506 = vpack.c.bf16 %v450, %v443
      %v507 = vpack.c.bf16 %v451, %v444
      %v508 = vpack.c.bf16 %v452, %v445
      %v509 = vld [vmem:[%s1] sm:$0xff]
      %v510 = vld [vmem:[%s1 + $0x8] sm:$0xff]
      %v511 = vld [vmem:[%s1 + $0x10] sm:$0xff]
      %v512 = vld [vmem:[%s1 + $0x18] sm:$0xff]
      %v513 = vld [vmem:[%s1 + $0x20] sm:$0xff]
      %v514 = vld [vmem:[%s1 + $0x28] sm:$0xff]
      %v515 = vld [vmem:[%s1 + $0x30] sm:$0xff]
      %v516 = vld [vmem:[%s1 + $0x38] sm:$0xff]
      %v517 = vld [vmem:[%s1 + $0x40] sm:$0xff]
      %v518 = vld [vmem:[%s1 + $0x48] sm:$0xff]
      %v519 = vld [vmem:[%s1 + $0x50] sm:$0xff]
      %v520 = vld [vmem:[%s1 + $0x58] sm:$0xff]
      %v521 = vld [vmem:[%s1 + $0x60] sm:$0xff]
      %v522 = vld [vmem:[%s1 + $0x68] sm:$0xff]
      %v523 = vld [vmem:[%s1 + $0x70] sm:$0xff]
      %v524 = vld [vmem:[%s1 + $0x78] sm:$0xff]
      %v525 = vld [vmem:[%s1 + $0x80] sm:$0xff]
      %v526 = vld [vmem:[%s1 + $0x88] sm:$0xff]
      %v527 = vld [vmem:[%s1 + $0x90] sm:$0xff]
      %v528 = vld [vmem:[%s1 + $0x98] sm:$0xff]
      %v529 = vld [vmem:[%s1 + $0xa0] sm:$0xff]
      %v530 = vld [vmem:[%s1 + $0xa8] sm:$0xff]
      %v531 = vld [vmem:[%s1 + $0xb0] sm:$0xff]
      %v532 = vld [vmem:[%s1 + $0xb8] sm:$0xff]
      %v533 = vld [vmem:[%s1 + $0xc0] sm:$0xff]
      %v534 = vld [vmem:[%s1 + $0xc8] sm:$0xff]
      %v535 = vld [vmem:[%s1 + $0xd0] sm:$0xff]
      %v536 = vld [vmem:[%s1 + $0xd8] sm:$0xff]
      %v537 = vld [vmem:[%s1 + $0xe0] sm:$0xff]
      %v538 = vld [vmem:[%s1 + $0xe8] sm:$0xff]
      %v539 = vld [vmem:[%s1 + $0xf0] sm:$0xff]
      %v540 = vld [vmem:[%s1 + $0xf8] sm:$0xff]
      %v541 = vld [vmem:[%s1 + $0x100] sm:$0xff]
      %v542 = vld [vmem:[%s1 + $0x108] sm:$0xff]
      %v543 = vld [vmem:[%s1 + $0x110] sm:$0xff]
      %v544 = vld [vmem:[%s1 + $0x118] sm:$0xff]
      %v545 = vld [vmem:[%s1 + $0x120] sm:$0xff]
      %v546 = vld [vmem:[%s1 + $0x128] sm:$0xff]
      %v547 = vld [vmem:[%s1 + $0x130] sm:$0xff]
      %v548 = vld [vmem:[%s1 + $0x138] sm:$0xff]
      %v549 = vld [vmem:[%s1 + $0x140] sm:$0xff]
      %v550 = vld [vmem:[%s1 + $0x148] sm:$0xff]
      %v551 = vld [vmem:[%s1 + $0x150] sm:$0xff]
      %v552 = vld [vmem:[%s1 + $0x158] sm:$0xff]
      %v553 = vld [vmem:[%s1 + $0x160] sm:$0xff]
      %v554 = vld [vmem:[%s1 + $0x168] sm:$0xff]
      %v555 = vld [vmem:[%s1 + $0x170] sm:$0xff]
      %v556 = vld [vmem:[%s1 + $0x178] sm:$0xff]
      %v557 = vld [vmem:[%s1 + $0x180] sm:$0xff]
      %v558 = vld [vmem:[%s1 + $0x188] sm:$0xff]
      %v559 = vld [vmem:[%s1 + $0x190] sm:$0xff]
      %v560 = vld [vmem:[%s1 + $0x198] sm:$0xff]
      %v561 = vld [vmem:[%s1 + $0x1a0] sm:$0xff]
      %v562 = vld [vmem:[%s1 + $0x1a8] sm:$0xff]
      %v563 = vld [vmem:[%s1 + $0x1b0] sm:$0xff]
      %v564 = vld [vmem:[%s1 + $0x1b8] sm:$0xff]
      %v565 = vld [vmem:[%s1 + $0x1c0] sm:$0xff]
      %v566 = vld [vmem:[%s1 + $0x1c8] sm:$0xff]
      %v567 = vld [vmem:[%s1 + $0x1d0] sm:$0xff]
      %v568 = vld [vmem:[%s1 + $0x1d8] sm:$0xff]
      %v569 = vld [vmem:[%s1 + $0x1e0] sm:$0xff]
      %v570 = vld [vmem:[%s1 + $0x1e8] sm:$0xff]
      %v571 = vld [vmem:[%s1 + $0x1f0] sm:$0xff]
      %v572 = vld [vmem:[%s1 + $0x1f8] sm:$0xff]
      %v573 = vld [vmem:[%s1 + $0x200] sm:$0xff]
      %v574 = vld [vmem:[%s1 + $0x208] sm:$0xff]
      %v575 = vld [vmem:[%s1 + $0x210] sm:$0xff]
      %v576 = vld [vmem:[%s1 + $0x218] sm:$0xff]
      %v577 = vld [vmem:[%s1 + $0x220] sm:$0xff]
      %v578 = vld [vmem:[%s1 + $0x228] sm:$0xff]
      %v579 = vld [vmem:[%s1 + $0x230] sm:$0xff]
      %v580 = vld [vmem:[%s1 + $0x238] sm:$0xff]
      %v581 = vld [vmem:[%s1 + $0x240] sm:$0xff]
      %v582 = vld [vmem:[%s1 + $0x248] sm:$0xff]
      %v583 = vld [vmem:[%s1 + $0x250] sm:$0xff]
      %v584 = vld [vmem:[%s1 + $0x258] sm:$0xff]
      %v585 = vld [vmem:[%s1 + $0x260] sm:$0xff]
      %v586 = vld [vmem:[%s1 + $0x268] sm:$0xff]
      %v587 = vld [vmem:[%s1 + $0x270] sm:$0xff]
      %v588 = vld [vmem:[%s1 + $0x278] sm:$0xff]
      %v589 = vld [vmem:[%s1 + $0x280] sm:$0xff]
      %v590 = vld [vmem:[%s1 + $0x288] sm:$0xff]
      %v591 = vld [vmem:[%s1 + $0x290] sm:$0xff]
      %v592 = vld [vmem:[%s1 + $0x298] sm:$0xff]
      %v593 = vld [vmem:[%s1 + $0x2a0] sm:$0xff]
      %v594 = vld [vmem:[%s1 + $0x2a8] sm:$0xff]
      %v595 = vld [vmem:[%s1 + $0x2b0] sm:$0xff]
      %v596 = vld [vmem:[%s1 + $0x2b8] sm:$0xff]
      %v597 = vld [vmem:[%s1 + $0x2c0] sm:$0xff]
      %v598 = vld [vmem:[%s1 + $0x2c8] sm:$0xff]
      %v599 = vld [vmem:[%s1 + $0x2d0] sm:$0xff]
      %v600 = vld [vmem:[%s1 + $0x2d8] sm:$0xff]
      %v601 = vld [vmem:[%s1 + $0x2e0] sm:$0xff]
      %v602 = vld [vmem:[%s1 + $0x2e8] sm:$0xff]
      %v603 = vld [vmem:[%s1 + $0x2f0] sm:$0xff]
      %v604 = vld [vmem:[%s1 + $0x2f8] sm:$0xff]
      %v605 = vld [vmem:[%s1 + $0x300] sm:$0xff]
      %v606 = vld [vmem:[%s1 + $0x308] sm:$0xff]
      %v607 = vld [vmem:[%s1 + $0x310] sm:$0xff]
      %v608 = vld [vmem:[%s1 + $0x318] sm:$0xff]
      %v609 = vld [vmem:[%s1 + $0x320] sm:$0xff]
      %v610 = vld [vmem:[%s1 + $0x328] sm:$0xff]
      %v611 = vld [vmem:[%s1 + $0x330] sm:$0xff]
      %v612 = vld [vmem:[%s1 + $0x338] sm:$0xff]
      %v613 = vld [vmem:[%s1 + $0x340] sm:$0xff]
      %v614 = vld [vmem:[%s1 + $0x348] sm:$0xff]
      %v615 = vld [vmem:[%s1 + $0x350] sm:$0xff]
      %v616 = vld [vmem:[%s1 + $0x358] sm:$0xff]
      %v617 = vld [vmem:[%s1 + $0x360] sm:$0xff]
      %v618 = vld [vmem:[%s1 + $0x368] sm:$0xff]
      %v619 = vld [vmem:[%s1 + $0x370] sm:$0xff]
      %v620 = vld [vmem:[%s1 + $0x378] sm:$0xff]
      %v621 = vld [vmem:[%s1 + $0x380] sm:$0xff]
      %v622 = vld [vmem:[%s1 + $0x388] sm:$0xff]
      %v623 = vld [vmem:[%s1 + $0x390] sm:$0xff]
      %v624 = vld [vmem:[%s1 + $0x398] sm:$0xff]
      %v625 = vld [vmem:[%s1 + $0x3a0] sm:$0xff]
      %v626 = vld [vmem:[%s1 + $0x3a8] sm:$0xff]
      %v627 = vld [vmem:[%s1 + $0x3b0] sm:$0xff]
      %v628 = vld [vmem:[%s1 + $0x3b8] sm:$0xff]
      %v629 = vld [vmem:[%s1 + $0x3c0] sm:$0xff]
      %v630 = vld [vmem:[%s1 + $0x3c8] sm:$0xff]
      %v631 = vld [vmem:[%s1 + $0x3d0] sm:$0xff]
      %v632 = vld [vmem:[%s1 + $0x3d8] sm:$0xff]
      %v633 = vld [vmem:[%s1 + $0x3e0] sm:$0xff]
      %v634 = vld [vmem:[%s1 + $0x3e8] sm:$0xff]
      %v635 = vld [vmem:[%s1 + $0x3f0] sm:$0xff]
      %v636 = vld [vmem:[%s1 + $0x3f8] sm:$0xff]
      %v637 = vld [vmem:[%s1 + $0x400] sm:$0xff]
      %v638 = vld [vmem:[%s1 + $0x408] sm:$0xff]
      %v639 = vld [vmem:[%s1 + $0x410] sm:$0xff]
      %v640 = vld [vmem:[%s1 + $0x418] sm:$0xff]
      %v641 = vld [vmem:[%s1 + $0x420] sm:$0xff]
      %v642 = vld [vmem:[%s1 + $0x428] sm:$0xff]
      %v643 = vld [vmem:[%s1 + $0x430] sm:$0xff]
      %v644 = vld [vmem:[%s1 + $0x438] sm:$0xff]
      %v645 = vld [vmem:[%s1 + $0x440] sm:$0xff]
      %v646 = vld [vmem:[%s1 + $0x448] sm:$0xff]
      %v647 = vld [vmem:[%s1 + $0x450] sm:$0xff]
      %v648 = vld [vmem:[%s1 + $0x458] sm:$0xff]
      %v649 = vld [vmem:[%s1 + $0x460] sm:$0xff]
      %v650 = vld [vmem:[%s1 + $0x468] sm:$0xff]
      %v651 = vld [vmem:[%s1 + $0x470] sm:$0xff]
      %v652 = vld [vmem:[%s1 + $0x478] sm:$0xff]
      %v653 = vld [vmem:[%s1 + $0x480] sm:$0xff]
      %v654 = vld [vmem:[%s1 + $0x488] sm:$0xff]
      %v655 = vld [vmem:[%s1 + $0x490] sm:$0xff]
      %v656 = vld [vmem:[%s1 + $0x498] sm:$0xff]
      %v657 = vld [vmem:[%s1 + $0x4a0] sm:$0xff]
      %v658 = vld [vmem:[%s1 + $0x4a8] sm:$0xff]
      %v659 = vld [vmem:[%s1 + $0x4b0] sm:$0xff]
      %v660 = vld [vmem:[%s1 + $0x4b8] sm:$0xff]
      %v661 = vld [vmem:[%s1 + $0x4c0] sm:$0xff]
      %v662 = vld [vmem:[%s1 + $0x4c8] sm:$0xff]
      %v663 = vld [vmem:[%s1 + $0x4d0] sm:$0xff]
      %v664 = vld [vmem:[%s1 + $0x4d8] sm:$0xff]
      %v665 = vld [vmem:[%s1 + $0x4e0] sm:$0xff]
      %v666 = vld [vmem:[%s1 + $0x4e8] sm:$0xff]
      %v667 = vld [vmem:[%s1 + $0x4f0] sm:$0xff]
      %v668 = vld [vmem:[%s1 + $0x4f8] sm:$0xff]
      %v669 = vld [vmem:[%s1 + $0x500] sm:$0xff]
      %v670 = vld [vmem:[%s1 + $0x508] sm:$0xff]
      %v671 = vld [vmem:[%s1 + $0x510] sm:$0xff]
      %v672 = vld [vmem:[%s1 + $0x518] sm:$0xff]
      %v673 = vld [vmem:[%s1 + $0x520] sm:$0xff]
      %v674 = vld [vmem:[%s1 + $0x528] sm:$0xff]
      %v675 = vld [vmem:[%s1 + $0x530] sm:$0xff]
      %v676 = vld [vmem:[%s1 + $0x538] sm:$0xff]
      %v677 = vld [vmem:[%s1 + $0x540] sm:$0xff]
      %v678 = vld [vmem:[%s1 + $0x548] sm:$0xff]
      %v679 = vld [vmem:[%s1 + $0x550] sm:$0xff]
      %v680 = vld [vmem:[%s1 + $0x558] sm:$0xff]
      %v681 = vld [vmem:[%s1 + $0x560] sm:$0xff]
      %v682 = vld [vmem:[%s1 + $0x568] sm:$0xff]
      %v683 = vld [vmem:[%s1 + $0x570] sm:$0xff]
      %v684 = vld [vmem:[%s1 + $0x578] sm:$0xff]
      %v685 = vld [vmem:[%s1 + $0x580] sm:$0xff]
      %v686 = vld [vmem:[%s1 + $0x588] sm:$0xff]
      %v687 = vld [vmem:[%s1 + $0x590] sm:$0xff]
      %v688 = vld [vmem:[%s1 + $0x598] sm:$0xff]
      %v689 = vld [vmem:[%s1 + $0x5a0] sm:$0xff]
      %v690 = vld [vmem:[%s1 + $0x5a8] sm:$0xff]
      %v691 = vld [vmem:[%s1 + $0x5b0] sm:$0xff]
      %v692 = vld [vmem:[%s1 + $0x5b8] sm:$0xff]
      %v693 = vld [vmem:[%s1 + $0x5c0] sm:$0xff]
      %v694 = vld [vmem:[%s1 + $0x5c8] sm:$0xff]
      %v695 = vld [vmem:[%s1 + $0x5d0] sm:$0xff]
      %v696 = vld [vmem:[%s1 + $0x5d8] sm:$0xff]
      %v697 = vld [vmem:[%s1 + $0x5e0] sm:$0xff]
      %v698 = vld [vmem:[%s1 + $0x5e8] sm:$0xff]
      %v699 = vld [vmem:[%s1 + $0x5f0] sm:$0xff]
      %v700 = vld [vmem:[%s1 + $0x5f8] sm:$0xff]
      %v701 = vld [vmem:[%s1 + $0x600] sm:$0xff]
      %v702 = vld [vmem:[%s1 + $0x608] sm:$0xff]
      %v703 = vld [vmem:[%s1 + $0x610] sm:$0xff]
      %v704 = vld [vmem:[%s1 + $0x618] sm:$0xff]
      %v705 = vld [vmem:[%s2] sm:$0xf]
      %v707 = vlaneseq
      %v708 = vshrl.u32 %v707, 7
      %v709 = vsub.s32 0, %v708
      %v710 = vrot.slane %v705, %v709
      %v711 = vlaneseq
      %v712 = vshrl.u32 %v711, 7
      %v713 = vsub.s32 1, %v712
      %v714 = vrot.slane %v705, %v713
      %v715 = vlaneseq
      %v716 = vshrl.u32 %v715, 7
      %v717 = vsub.s32 2, %v716
      %v718 = vrot.slane %v705, %v717
      %v719 = vlaneseq
      %v720 = vshrl.u32 %v719, 7
      %v721 = vsub.s32 3, %v720
      %v722 = vrot.slane %v705, %v721
      %v923 = vunpack.c.l.b16 %v509
      %v924 = vunpack.c.h.b16 %v509
      %v925 = vunpack.c.l.b16 %v510
      %v926 = vunpack.c.h.b16 %v510
      %v927 = vunpack.c.l.b16 %v511
      %v928 = vunpack.c.h.b16 %v511
      %v929 = vunpack.c.l.b16 %v512
      %v930 = vunpack.c.h.b16 %v512
      %v931 = vunpack.c.l.b16 %v513
      %v932 = vunpack.c.h.b16 %v513
      %v933 = vunpack.c.l.b16 %v514
      %v934 = vunpack.c.h.b16 %v514
      %v935 = vunpack.c.l.b16 %v515
      %v936 = vunpack.c.h.b16 %v515
      %v937 = vunpack.c.l.b16 %v516
      %v938 = vunpack.c.h.b16 %v516
      %v939 = vunpack.c.l.b16 %v517
      %v940 = vunpack.c.h.b16 %v517
      %v941 = vunpack.c.l.b16 %v518
      %v942 = vunpack.c.h.b16 %v518
      %v943 = vunpack.c.l.b16 %v519
      %v944 = vunpack.c.h.b16 %v519
      %v945 = vunpack.c.l.b16 %v520
      %v946 = vunpack.c.h.b16 %v520
      %v947 = vunpack.c.l.b16 %v521
      %v948 = vunpack.c.h.b16 %v521
      %v949 = vunpack.c.l.b16 %v522
      %v950 = vunpack.c.h.b16 %v522
      %v951 = vunpack.c.l.b16 %v523
      %v952 = vunpack.c.h.b16 %v523
      %v953 = vunpack.c.l.b16 %v524
      %v954 = vunpack.c.h.b16 %v524
      %v955 = vunpack.c.l.b16 %v525
      %v956 = vunpack.c.h.b16 %v525
      %v957 = vunpack.c.l.b16 %v526
      %v958 = vunpack.c.h.b16 %v526
      %v959 = vunpack.c.l.b16 %v527
      %v960 = vunpack.c.h.b16 %v527
      %v961 = vunpack.c.l.b16 %v528
      %v962 = vunpack.c.h.b16 %v528
      %v963 = vunpack.c.l.b16 %v529
      %v964 = vunpack.c.h.b16 %v529
      %v965 = vunpack.c.l.b16 %v530
      %v966 = vunpack.c.h.b16 %v530
      %v967 = vunpack.c.l.b16 %v531
      %v968 = vunpack.c.h.b16 %v531
      %v969 = vunpack.c.l.b16 %v532
      %v970 = vunpack.c.h.b16 %v532
      %v971 = vunpack.c.l.b16 %v533
      %v972 = vunpack.c.h.b16 %v533
      %v973 = vunpack.c.l.b16 %v534
      %v974 = vunpack.c.h.b16 %v534
      %v975 = vunpack.c.l.b16 %v535
      %v976 = vunpack.c.h.b16 %v535
      %v977 = vunpack.c.l.b16 %v536
      %v978 = vunpack.c.h.b16 %v536
      %v979 = vunpack.c.l.b16 %v537
      %v980 = vunpack.c.h.b16 %v537
      %v981 = vunpack.c.l.b16 %v538
      %v982 = vunpack.c.h.b16 %v538
      %v983 = vunpack.c.l.b16 %v539
      %v984 = vunpack.c.h.b16 %v539
      %v985 = vunpack.c.l.b16 %v540
      %v986 = vunpack.c.h.b16 %v540
      %v987 = vunpack.c.l.b16 %v541
      %v988 = vunpack.c.h.b16 %v541
      %v989 = vunpack.c.l.b16 %v542
      %v990 = vunpack.c.h.b16 %v542
      %v991 = vunpack.c.l.b16 %v543
      %v992 = vunpack.c.h.b16 %v543
      %v993 = vunpack.c.l.b16 %v544
      %v994 = vunpack.c.h.b16 %v544
      %v995 = vunpack.c.l.b16 %v545
      %v996 = vunpack.c.h.b16 %v545
      %v997 = vunpack.c.l.b16 %v546
      %v998 = vunpack.c.h.b16 %v546
      %v999 = vunpack.c.l.b16 %v547
      %v1000 = vunpack.c.h.b16 %v547
      %v1001 = vunpack.c.l.b16 %v548
      %v1002 = vunpack.c.h.b16 %v548
      %v1003 = vunpack.c.l.b16 %v549
      %v1004 = vunpack.c.h.b16 %v549
      %v1005 = vunpack.c.l.b16 %v550
      %v1006 = vunpack.c.h.b16 %v550
      %v1007 = vunpack.c.l.b16 %v551
      %v1008 = vunpack.c.h.b16 %v551
      %v1009 = vunpack.c.l.b16 %v552
      %v1010 = vunpack.c.h.b16 %v552
      %v1011 = vunpack.c.l.b16 %v553
      %v1012 = vunpack.c.h.b16 %v553
      %v1013 = vunpack.c.l.b16 %v554
      %v1014 = vunpack.c.h.b16 %v554
      %v1015 = vunpack.c.l.b16 %v555
      %v1016 = vunpack.c.h.b16 %v555
      %v1017 = vunpack.c.l.b16 %v556
      %v1018 = vunpack.c.h.b16 %v556
      %v1019 = vunpack.c.l.b16 %v557
      %v1020 = vunpack.c.h.b16 %v557
      %v1021 = vunpack.c.l.b16 %v558
      %v1022 = vunpack.c.h.b16 %v558
      %v1023 = vunpack.c.l.b16 %v559
      %v1024 = vunpack.c.h.b16 %v559
      %v1025 = vunpack.c.l.b16 %v560
      %v1026 = vunpack.c.h.b16 %v560
      %v1027 = vunpack.c.l.b16 %v561
      %v1028 = vunpack.c.h.b16 %v561
      %v1029 = vunpack.c.l.b16 %v562
      %v1030 = vunpack.c.h.b16 %v562
      %v1031 = vunpack.c.l.b16 %v563
      %v1032 = vunpack.c.h.b16 %v563
      %v1033 = vunpack.c.l.b16 %v564
      %v1034 = vunpack.c.h.b16 %v564
      %v1035 = vunpack.c.l.b16 %v565
      %v1036 = vunpack.c.h.b16 %v565
      %v1037 = vunpack.c.l.b16 %v566
      %v1038 = vunpack.c.h.b16 %v566
      %v1039 = vunpack.c.l.b16 %v567
      %v1040 = vunpack.c.h.b16 %v567
      %v1041 = vunpack.c.l.b16 %v568
      %v1042 = vunpack.c.h.b16 %v568
      %v1043 = vunpack.c.l.b16 %v569
      %v1044 = vunpack.c.h.b16 %v569
      %v1045 = vunpack.c.l.b16 %v570
      %v1046 = vunpack.c.h.b16 %v570
      %v1047 = vunpack.c.l.b16 %v571
      %v1048 = vunpack.c.h.b16 %v571
      %v1049 = vunpack.c.l.b16 %v572
      %v1050 = vunpack.c.h.b16 %v572
      %v1051 = vunpack.c.l.b16 %v573
      %v1052 = vunpack.c.h.b16 %v573
      %v1053 = vunpack.c.l.b16 %v574
      %v1054 = vunpack.c.h.b16 %v574
      %v1055 = vunpack.c.l.b16 %v575
      %v1056 = vunpack.c.h.b16 %v575
      %v1057 = vunpack.c.l.b16 %v576
      %v1058 = vunpack.c.h.b16 %v576
      %v1059 = vunpack.c.l.b16 %v577
      %v1060 = vunpack.c.h.b16 %v577
      %v1061 = vunpack.c.l.b16 %v578
      %v1062 = vunpack.c.h.b16 %v578
      %v1063 = vunpack.c.l.b16 %v579
      %v1064 = vunpack.c.h.b16 %v579
      %v1065 = vunpack.c.l.b16 %v580
      %v1066 = vunpack.c.h.b16 %v580
      %v1067 = vunpack.c.l.b16 %v581
      %v1068 = vunpack.c.h.b16 %v581
      %v1069 = vunpack.c.l.b16 %v582
      %v1070 = vunpack.c.h.b16 %v582
      %v1071 = vunpack.c.l.b16 %v583
      %v1072 = vunpack.c.h.b16 %v583
      %v1073 = vunpack.c.l.b16 %v584
      %v1074 = vunpack.c.h.b16 %v584
      %v1075 = vunpack.c.l.b16 %v585
      %v1076 = vunpack.c.h.b16 %v585
      %v1077 = vunpack.c.l.b16 %v586
      %v1078 = vunpack.c.h.b16 %v586
      %v1079 = vunpack.c.l.b16 %v587
      %v1080 = vunpack.c.h.b16 %v587
      %v1081 = vunpack.c.l.b16 %v588
      %v1082 = vunpack.c.h.b16 %v588
      %v1083 = vunpack.c.l.b16 %v589
      %v1084 = vunpack.c.h.b16 %v589
      %v1085 = vunpack.c.l.b16 %v590
      %v1086 = vunpack.c.h.b16 %v590
      %v1087 = vunpack.c.l.b16 %v591
      %v1088 = vunpack.c.h.b16 %v591
      %v1089 = vunpack.c.l.b16 %v592
      %v1090 = vunpack.c.h.b16 %v592
      %v1091 = vunpack.c.l.b16 %v593
      %v1092 = vunpack.c.h.b16 %v593
      %v1093 = vunpack.c.l.b16 %v594
      %v1094 = vunpack.c.h.b16 %v594
      %v1095 = vunpack.c.l.b16 %v595
      %v1096 = vunpack.c.h.b16 %v595
      %v1097 = vunpack.c.l.b16 %v596
      %v1098 = vunpack.c.h.b16 %v596
      %v1099 = vunpack.c.l.b16 %v597
      %v1100 = vunpack.c.h.b16 %v597
      %v1101 = vunpack.c.l.b16 %v598
      %v1102 = vunpack.c.h.b16 %v598
      %v1103 = vunpack.c.l.b16 %v599
      %v1104 = vunpack.c.h.b16 %v599
      %v1105 = vunpack.c.l.b16 %v600
      %v1106 = vunpack.c.h.b16 %v600
      %v1107 = vunpack.c.l.b16 %v601
      %v1108 = vunpack.c.h.b16 %v601
      %v1109 = vunpack.c.l.b16 %v602
      %v1110 = vunpack.c.h.b16 %v602
      %v1111 = vunpack.c.l.b16 %v603
      %v1112 = vunpack.c.h.b16 %v603
      %v1113 = vunpack.c.l.b16 %v604
      %v1114 = vunpack.c.h.b16 %v604
      %v1115 = vunpack.c.l.b16 %v605
      %v1116 = vunpack.c.h.b16 %v605
      %v1117 = vunpack.c.l.b16 %v606
      %v1118 = vunpack.c.h.b16 %v606
      %v1119 = vunpack.c.l.b16 %v607
      %v1120 = vunpack.c.h.b16 %v607
      %v1121 = vunpack.c.l.b16 %v608
      %v1122 = vunpack.c.h.b16 %v608
      %v1123 = vunpack.c.l.b16 %v609
      %v1124 = vunpack.c.h.b16 %v609
      %v1125 = vunpack.c.l.b16 %v610
      %v1126 = vunpack.c.h.b16 %v610
      %v1127 = vunpack.c.l.b16 %v611
      %v1128 = vunpack.c.h.b16 %v611
      %v1129 = vunpack.c.l.b16 %v612
      %v1130 = vunpack.c.h.b16 %v612
      %v1131 = vunpack.c.l.b16 %v613
      %v1132 = vunpack.c.h.b16 %v613
      %v1133 = vunpack.c.l.b16 %v614
      %v1134 = vunpack.c.h.b16 %v614
      %v1135 = vunpack.c.l.b16 %v615
      %v1136 = vunpack.c.h.b16 %v615
      %v1137 = vunpack.c.l.b16 %v616
      %v1138 = vunpack.c.h.b16 %v616
      %v1139 = vunpack.c.l.b16 %v617
      %v1140 = vunpack.c.h.b16 %v617
      %v1141 = vunpack.c.l.b16 %v618
      %v1142 = vunpack.c.h.b16 %v618
      %v1143 = vunpack.c.l.b16 %v619
      %v1144 = vunpack.c.h.b16 %v619
      %v1145 = vunpack.c.l.b16 %v620
      %v1146 = vunpack.c.h.b16 %v620
      %v1147 = vunpack.c.l.b16 %v621
      %v1148 = vunpack.c.h.b16 %v621
      %v1149 = vunpack.c.l.b16 %v622
      %v1150 = vunpack.c.h.b16 %v622
      %v1151 = vunpack.c.l.b16 %v623
      %v1152 = vunpack.c.h.b16 %v623
      %v1153 = vunpack.c.l.b16 %v624
      %v1154 = vunpack.c.h.b16 %v624
      %v1155 = vunpack.c.l.b16 %v625
      %v1156 = vunpack.c.h.b16 %v625
      %v1157 = vunpack.c.l.b16 %v626
      %v1158 = vunpack.c.h.b16 %v626
      %v1159 = vunpack.c.l.b16 %v627
      %v1160 = vunpack.c.h.b16 %v627
      %v1161 = vunpack.c.l.b16 %v628
      %v1162 = vunpack.c.h.b16 %v628
      %v1163 = vunpack.c.l.b16 %v629
      %v1164 = vunpack.c.h.b16 %v629
      %v1165 = vunpack.c.l.b16 %v630
      %v1166 = vunpack.c.h.b16 %v630
      %v1167 = vunpack.c.l.b16 %v631
      %v1168 = vunpack.c.h.b16 %v631
      %v1169 = vunpack.c.l.b16 %v632
      %v1170 = vunpack.c.h.b16 %v632
      %v1171 = vunpack.c.l.b16 %v633
      %v1172 = vunpack.c.h.b16 %v633
      %v1173 = vunpack.c.l.b16 %v634
      %v1174 = vunpack.c.h.b16 %v634
      %v1175 = vunpack.c.l.b16 %v635
      %v1176 = vunpack.c.h.b16 %v635
      %v1177 = vunpack.c.l.b16 %v636
      %v1178 = vunpack.c.h.b16 %v636
      %v1179 = vunpack.c.l.b16 %v637
      %v1180 = vunpack.c.h.b16 %v637
      %v1181 = vunpack.c.l.b16 %v638
      %v1182 = vunpack.c.h.b16 %v638
      %v1183 = vunpack.c.l.b16 %v639
      %v1184 = vunpack.c.h.b16 %v639
      %v1185 = vunpack.c.l.b16 %v640
      %v1186 = vunpack.c.h.b16 %v640
      %v1187 = vunpack.c.l.b16 %v641
      %v1188 = vunpack.c.h.b16 %v641
      %v1189 = vunpack.c.l.b16 %v642
      %v1190 = vunpack.c.h.b16 %v642
      %v1191 = vunpack.c.l.b16 %v643
      %v1192 = vunpack.c.h.b16 %v643
      %v1193 = vunpack.c.l.b16 %v644
      %v1194 = vunpack.c.h.b16 %v644
      %v1195 = vunpack.c.l.b16 %v645
      %v1196 = vunpack.c.h.b16 %v645
      %v1197 = vunpack.c.l.b16 %v646
      %v1198 = vunpack.c.h.b16 %v646
      %v1199 = vunpack.c.l.b16 %v647
      %v1200 = vunpack.c.h.b16 %v647
      %v1201 = vunpack.c.l.b16 %v648
      %v1202 = vunpack.c.h.b16 %v648
      %v1203 = vunpack.c.l.b16 %v649
      %v1204 = vunpack.c.h.b16 %v649
      %v1205 = vunpack.c.l.b16 %v650
      %v1206 = vunpack.c.h.b16 %v650
      %v1207 = vunpack.c.l.b16 %v651
      %v1208 = vunpack.c.h.b16 %v651
      %v1209 = vunpack.c.l.b16 %v652
      %v1210 = vunpack.c.h.b16 %v652
      %v1211 = vunpack.c.l.b16 %v653
      %v1212 = vunpack.c.h.b16 %v653
      %v1213 = vunpack.c.l.b16 %v654
      %v1214 = vunpack.c.h.b16 %v654
      %v1215 = vunpack.c.l.b16 %v655
      %v1216 = vunpack.c.h.b16 %v655
      %v1217 = vunpack.c.l.b16 %v656
      %v1218 = vunpack.c.h.b16 %v656
      %v1219 = vunpack.c.l.b16 %v657
      %v1220 = vunpack.c.h.b16 %v657
      %v1221 = vunpack.c.l.b16 %v658
      %v1222 = vunpack.c.h.b16 %v658
      %v1223 = vunpack.c.l.b16 %v659
      %v1224 = vunpack.c.h.b16 %v659
      %v1225 = vunpack.c.l.b16 %v660
      %v1226 = vunpack.c.h.b16 %v660
      %v1227 = vunpack.c.l.b16 %v661
      %v1228 = vunpack.c.h.b16 %v661
      %v1229 = vunpack.c.l.b16 %v662
      %v1230 = vunpack.c.h.b16 %v662
      %v1231 = vunpack.c.l.b16 %v663
      %v1232 = vunpack.c.h.b16 %v663
      %v1233 = vunpack.c.l.b16 %v664
      %v1234 = vunpack.c.h.b16 %v664
      %v1235 = vunpack.c.l.b16 %v665
      %v1236 = vunpack.c.h.b16 %v665
      %v1237 = vunpack.c.l.b16 %v666
      %v1238 = vunpack.c.h.b16 %v666
      %v1239 = vunpack.c.l.b16 %v667
      %v1240 = vunpack.c.h.b16 %v667
      %v1241 = vunpack.c.l.b16 %v668
      %v1242 = vunpack.c.h.b16 %v668
      %v1243 = vunpack.c.l.b16 %v669
      %v1244 = vunpack.c.h.b16 %v669
      %v1245 = vunpack.c.l.b16 %v670
      %v1246 = vunpack.c.h.b16 %v670
      %v1247 = vunpack.c.l.b16 %v671
      %v1248 = vunpack.c.h.b16 %v671
      %v1249 = vunpack.c.l.b16 %v672
      %v1250 = vunpack.c.h.b16 %v672
      %v1251 = vunpack.c.l.b16 %v673
      %v1252 = vunpack.c.h.b16 %v673
      %v1253 = vunpack.c.l.b16 %v674
      %v1254 = vunpack.c.h.b16 %v674
      %v1255 = vunpack.c.l.b16 %v675
      %v1256 = vunpack.c.h.b16 %v675
      %v1257 = vunpack.c.l.b16 %v676
      %v1258 = vunpack.c.h.b16 %v676
      %v1259 = vunpack.c.l.b16 %v677
      %v1260 = vunpack.c.h.b16 %v677
      %v1261 = vunpack.c.l.b16 %v678
      %v1262 = vunpack.c.h.b16 %v678
      %v1263 = vunpack.c.l.b16 %v679
      %v1264 = vunpack.c.h.b16 %v679
      %v1265 = vunpack.c.l.b16 %v680
      %v1266 = vunpack.c.h.b16 %v680
      %v1267 = vunpack.c.l.b16 %v681
      %v1268 = vunpack.c.h.b16 %v681
      %v1269 = vunpack.c.l.b16 %v682
      %v1270 = vunpack.c.h.b16 %v682
      %v1271 = vunpack.c.l.b16 %v683
      %v1272 = vunpack.c.h.b16 %v683
      %v1273 = vunpack.c.l.b16 %v684
      %v1274 = vunpack.c.h.b16 %v684
      %v1275 = vunpack.c.l.b16 %v685
      %v1276 = vunpack.c.h.b16 %v685
      %v1277 = vunpack.c.l.b16 %v686
      %v1278 = vunpack.c.h.b16 %v686
      %v1279 = vunpack.c.l.b16 %v687
      %v1280 = vunpack.c.h.b16 %v687
      %v1281 = vunpack.c.l.b16 %v688
      %v1282 = vunpack.c.h.b16 %v688
      %v1283 = vunpack.c.l.b16 %v689
      %v1284 = vunpack.c.h.b16 %v689
      %v1285 = vunpack.c.l.b16 %v690
      %v1286 = vunpack.c.h.b16 %v690
      %v1287 = vunpack.c.l.b16 %v691
      %v1288 = vunpack.c.h.b16 %v691
      %v1289 = vunpack.c.l.b16 %v692
      %v1290 = vunpack.c.h.b16 %v692
      %v1291 = vunpack.c.l.b16 %v693
      %v1292 = vunpack.c.h.b16 %v693
      %v1293 = vunpack.c.l.b16 %v694
      %v1294 = vunpack.c.h.b16 %v694
      %v1295 = vunpack.c.l.b16 %v695
      %v1296 = vunpack.c.h.b16 %v695
      %v1297 = vunpack.c.l.b16 %v696
      %v1298 = vunpack.c.h.b16 %v696
      %v1299 = vunpack.c.l.b16 %v697
      %v1300 = vunpack.c.h.b16 %v697
      %v1301 = vunpack.c.l.b16 %v698
      %v1302 = vunpack.c.h.b16 %v698
      %v1303 = vunpack.c.l.b16 %v699
      %v1304 = vunpack.c.h.b16 %v699
      %v1305 = vunpack.c.l.b16 %v700
      %v1306 = vunpack.c.h.b16 %v700
      %v1307 = vunpack.c.l.b16 %v701
      %v1308 = vunpack.c.h.b16 %v701
      %v1309 = vunpack.c.l.b16 %v702
      %v1310 = vunpack.c.h.b16 %v702
      %v1311 = vunpack.c.l.b16 %v703
      %v1312 = vunpack.c.h.b16 %v703
      %v1313 = vunpack.c.l.b16 %v704
      %v1314 = vunpack.c.h.b16 %v704
      %v1315 = vpack.c.b16 %v927, %v923
      %v1316 = vpack.c.b16 %v928, %v924
      %v1317 = vpack.c.b16 %v929, %v925
      %v1318 = vpack.c.b16 %v930, %v926
      %v1319 = vpack.c.b16 %v935, %v931
      %v1320 = vpack.c.b16 %v936, %v932
      %v1321 = vpack.c.b16 %v937, %v933
      %v1322 = vpack.c.b16 %v938, %v934
      %v1323 = vpack.c.b16 %v943, %v939
      %v1324 = vpack.c.b16 %v944, %v940
      %v1325 = vpack.c.b16 %v945, %v941
      %v1326 = vpack.c.b16 %v946, %v942
      %v1327 = vpack.c.b16 %v951, %v947
      %v1328 = vpack.c.b16 %v952, %v948
      %v1329 = vpack.c.b16 %v953, %v949
      %v1330 = vpack.c.b16 %v954, %v950
      %v1331 = vpack.c.b16 %v959, %v955
      %v1332 = vpack.c.b16 %v960, %v956
      %v1333 = vpack.c.b16 %v961, %v957
      %v1334 = vpack.c.b16 %v962, %v958
      %v1335 = vpack.c.b16 %v967, %v963
      %v1336 = vpack.c.b16 %v968, %v964
      %v1337 = vpack.c.b16 %v969, %v965
      %v1338 = vpack.c.b16 %v970, %v966
      %v1339 = vpack.c.b16 %v975, %v971
      %v1340 = vpack.c.b16 %v976, %v972
      %v1341 = vpack.c.b16 %v977, %v973
      %v1342 = vpack.c.b16 %v978, %v974
      %v1343 = vpack.c.b16 %v983, %v979
      %v1344 = vpack.c.b16 %v984, %v980
      %v1345 = vpack.c.b16 %v985, %v981
      %v1346 = vpack.c.b16 %v986, %v982
      %v1347 = vpack.c.b16 %v991, %v987
      %v1348 = vpack.c.b16 %v992, %v988
      %v1349 = vpack.c.b16 %v993, %v989
      %v1350 = vpack.c.b16 %v994, %v990
      %v1351 = vpack.c.b16 %v999, %v995
      %v1352 = vpack.c.b16 %v1000, %v996
      %v1353 = vpack.c.b16 %v1001, %v997
      %v1354 = vpack.c.b16 %v1002, %v998
      %v1355 = vpack.c.b16 %v1007, %v1003
      %v1356 = vpack.c.b16 %v1008, %v1004
      %v1357 = vpack.c.b16 %v1009, %v1005
      %v1358 = vpack.c.b16 %v1010, %v1006
      %v1359 = vpack.c.b16 %v1015, %v1011
      %v1360 = vpack.c.b16 %v1016, %v1012
      %v1361 = vpack.c.b16 %v1017, %v1013
      %v1362 = vpack.c.b16 %v1018, %v1014
      %v1363 = vpack.c.b16 %v1023, %v1019
      %v1364 = vpack.c.b16 %v1024, %v1020
      %v1365 = vpack.c.b16 %v1025, %v1021
      %v1366 = vpack.c.b16 %v1026, %v1022
      %v1367 = vpack.c.b16 %v1031, %v1027
      %v1368 = vpack.c.b16 %v1032, %v1028
      %v1369 = vpack.c.b16 %v1033, %v1029
      %v1370 = vpack.c.b16 %v1034, %v1030
      %v1371 = vpack.c.b16 %v1039, %v1035
      %v1372 = vpack.c.b16 %v1040, %v1036
      %v1373 = vpack.c.b16 %v1041, %v1037
      %v1374 = vpack.c.b16 %v1042, %v1038
      %v1375 = vpack.c.b16 %v1047, %v1043
      %v1376 = vpack.c.b16 %v1048, %v1044
      %v1377 = vpack.c.b16 %v1049, %v1045
      %v1378 = vpack.c.b16 %v1050, %v1046
      %v1379 = vpack.c.b16 %v1055, %v1051
      %v1380 = vpack.c.b16 %v1056, %v1052
      %v1381 = vpack.c.b16 %v1057, %v1053
      %v1382 = vpack.c.b16 %v1058, %v1054
      %v1383 = vpack.c.b16 %v1063, %v1059
      %v1384 = vpack.c.b16 %v1064, %v1060
      %v1385 = vpack.c.b16 %v1065, %v1061
      %v1386 = vpack.c.b16 %v1066, %v1062
      %v1387 = vpack.c.b16 %v1071, %v1067
      %v1388 = vpack.c.b16 %v1072, %v1068
      %v1389 = vpack.c.b16 %v1073, %v1069
      %v1390 = vpack.c.b16 %v1074, %v1070
      %v1391 = vpack.c.b16 %v1079, %v1075
      %v1392 = vpack.c.b16 %v1080, %v1076
      %v1393 = vpack.c.b16 %v1081, %v1077
      %v1394 = vpack.c.b16 %v1082, %v1078
      %v1395 = vpack.c.b16 %v1087, %v1083
      %v1396 = vpack.c.b16 %v1088, %v1084
      %v1397 = vpack.c.b16 %v1089, %v1085
      %v1398 = vpack.c.b16 %v1090, %v1086
      %v1399 = vpack.c.b16 %v1095, %v1091
      %v1400 = vpack.c.b16 %v1096, %v1092
      %v1401 = vpack.c.b16 %v1097, %v1093
      %v1402 = vpack.c.b16 %v1098, %v1094
      %v1403 = vpack.c.b16 %v1103, %v1099
      %v1404 = vpack.c.b16 %v1104, %v1100
      %v1405 = vpack.c.b16 %v1105, %v1101
      %v1406 = vpack.c.b16 %v1106, %v1102
      %v1407 = vpack.c.b16 %v1111, %v1107
      %v1408 = vpack.c.b16 %v1112, %v1108
      %v1409 = vpack.c.b16 %v1113, %v1109
      %v1410 = vpack.c.b16 %v1114, %v1110
      %v1411 = vpack.c.b16 %v1119, %v1115
      %v1412 = vpack.c.b16 %v1120, %v1116
      %v1413 = vpack.c.b16 %v1121, %v1117
      %v1414 = vpack.c.b16 %v1122, %v1118
      %v1415 = vpack.c.b16 %v1127, %v1123
      %v1416 = vpack.c.b16 %v1128, %v1124
      %v1417 = vpack.c.b16 %v1129, %v1125
      %v1418 = vpack.c.b16 %v1130, %v1126
      %v1419 = vpack.c.b16 %v1135, %v1131
      %v1420 = vpack.c.b16 %v1136, %v1132
      %v1421 = vpack.c.b16 %v1137, %v1133
      %v1422 = vpack.c.b16 %v1138, %v1134
      %v1423 = vpack.c.b16 %v1143, %v1139
      %v1424 = vpack.c.b16 %v1144, %v1140
      %v1425 = vpack.c.b16 %v1145, %v1141
      %v1426 = vpack.c.b16 %v1146, %v1142
      %v1427 = vpack.c.b16 %v1151, %v1147
      %v1428 = vpack.c.b16 %v1152, %v1148
      %v1429 = vpack.c.b16 %v1153, %v1149
      %v1430 = vpack.c.b16 %v1154, %v1150
      %v1431 = vpack.c.b16 %v1159, %v1155
      %v1432 = vpack.c.b16 %v1160, %v1156
      %v1433 = vpack.c.b16 %v1161, %v1157
      %v1434 = vpack.c.b16 %v1162, %v1158
      %v1435 = vpack.c.b16 %v1167, %v1163
      %v1436 = vpack.c.b16 %v1168, %v1164
      %v1437 = vpack.c.b16 %v1169, %v1165
      %v1438 = vpack.c.b16 %v1170, %v1166
      %v1439 = vpack.c.b16 %v1175, %v1171
      %v1440 = vpack.c.b16 %v1176, %v1172
      %v1441 = vpack.c.b16 %v1177, %v1173
      %v1442 = vpack.c.b16 %v1178, %v1174
      %v1443 = vpack.c.b16 %v1183, %v1179
      %v1444 = vpack.c.b16 %v1184, %v1180
      %v1445 = vpack.c.b16 %v1185, %v1181
      %v1446 = vpack.c.b16 %v1186, %v1182
      %v1447 = vpack.c.b16 %v1191, %v1187
      %v1448 = vpack.c.b16 %v1192, %v1188
      %v1449 = vpack.c.b16 %v1193, %v1189
      %v1450 = vpack.c.b16 %v1194, %v1190
      %v1451 = vpack.c.b16 %v1199, %v1195
      %v1452 = vpack.c.b16 %v1200, %v1196
      %v1453 = vpack.c.b16 %v1201, %v1197
      %v1454 = vpack.c.b16 %v1202, %v1198
      %v1455 = vpack.c.b16 %v1207, %v1203
      %v1456 = vpack.c.b16 %v1208, %v1204
      %v1457 = vpack.c.b16 %v1209, %v1205
      %v1458 = vpack.c.b16 %v1210, %v1206
      %v1459 = vpack.c.b16 %v1215, %v1211
      %v1460 = vpack.c.b16 %v1216, %v1212
      %v1461 = vpack.c.b16 %v1217, %v1213
      %v1462 = vpack.c.b16 %v1218, %v1214
      %v1463 = vpack.c.b16 %v1223, %v1219
      %v1464 = vpack.c.b16 %v1224, %v1220
      %v1465 = vpack.c.b16 %v1225, %v1221
      %v1466 = vpack.c.b16 %v1226, %v1222
      %v1467 = vpack.c.b16 %v1231, %v1227
      %v1468 = vpack.c.b16 %v1232, %v1228
      %v1469 = vpack.c.b16 %v1233, %v1229
      %v1470 = vpack.c.b16 %v1234, %v1230
      %v1471 = vpack.c.b16 %v1239, %v1235
      %v1472 = vpack.c.b16 %v1240, %v1236
      %v1473 = vpack.c.b16 %v1241, %v1237
      %v1474 = vpack.c.b16 %v1242, %v1238
      %v1475 = vpack.c.b16 %v1247, %v1243
      %v1476 = vpack.c.b16 %v1248, %v1244
      %v1477 = vpack.c.b16 %v1249, %v1245
      %v1478 = vpack.c.b16 %v1250, %v1246
      %v1479 = vpack.c.b16 %v1255, %v1251
      %v1480 = vpack.c.b16 %v1256, %v1252
      %v1481 = vpack.c.b16 %v1257, %v1253
      %v1482 = vpack.c.b16 %v1258, %v1254
      %v1483 = vpack.c.b16 %v1263, %v1259
      %v1484 = vpack.c.b16 %v1264, %v1260
      %v1485 = vpack.c.b16 %v1265, %v1261
      %v1486 = vpack.c.b16 %v1266, %v1262
      %v1487 = vpack.c.b16 %v1271, %v1267
      %v1488 = vpack.c.b16 %v1272, %v1268
      %v1489 = vpack.c.b16 %v1273, %v1269
      %v1490 = vpack.c.b16 %v1274, %v1270
      %v1491 = vpack.c.b16 %v1279, %v1275
      %v1492 = vpack.c.b16 %v1280, %v1276
      %v1493 = vpack.c.b16 %v1281, %v1277
      %v1494 = vpack.c.b16 %v1282, %v1278
      %v1495 = vpack.c.b16 %v1287, %v1283
      %v1496 = vpack.c.b16 %v1288, %v1284
      %v1497 = vpack.c.b16 %v1289, %v1285
      %v1498 = vpack.c.b16 %v1290, %v1286
      %v1499 = vpack.c.b16 %v1295, %v1291
      %v1500 = vpack.c.b16 %v1296, %v1292
      %v1501 = vpack.c.b16 %v1297, %v1293
      %v1502 = vpack.c.b16 %v1298, %v1294
      %v1503 = vpack.c.b16 %v1303, %v1299
      %v1504 = vpack.c.b16 %v1304, %v1300
      %v1505 = vpack.c.b16 %v1305, %v1301
      %v1506 = vpack.c.b16 %v1306, %v1302
      %v1507 = vpack.c.b16 %v1311, %v1307
      %v1508 = vpack.c.b16 %v1312, %v1308
      %v1509 = vpack.c.b16 %v1313, %v1309
      %v1510 = vpack.c.b16 %v1314, %v1310
      %vm1707 = vcmask 130048
      %v1709 = vsel %vm1707, %v459, 0
      %v1712 = vsel %vm1707, %v466, 0
      %v1715 = vsel %vm1707, %v473, 0
      %v1718 = vsel %vm1707, %v480, 0
      %v1721 = vsel %vm1707, %v487, 0
      %v1724 = vsel %vm1707, %v494, 0
      %v1727 = vsel %vm1707, %v501, 0
      %v1730 = vsel %vm1707, %v508, 0
      %1732 = vmatprep.subr.bf16.mxu0 %v1316
      %1733 = vmatpush1.bf16.msra.mxu0 %v1315
      %1734 = vmatprep.subr.bf16.mxu0 %v1320
      %1735 = vmatpush1.bf16.msra.mxu0 %v1319
      %1736 = vmatprep.subr.bf16.mxu0 %v1324
      %1737 = vmatpush1.bf16.msra.mxu0 %v1323
      %1738 = vmatprep.subr.bf16.mxu0 %v1328
      %1739 = vmatpush1.bf16.msra.mxu0 %v1327
      %1740 = vmatprep.subr.bf16.mxu0 %v1332
      %1741 = vmatpush1.bf16.msra.mxu0 %v1331
      %1742 = vmatprep.subr.bf16.mxu0 %v1336
      %1743 = vmatpush1.bf16.msra.mxu0 %v1335
      %1744 = vmatprep.subr.bf16.mxu0 %v1340
      %1745 = vmatpush1.bf16.msra.mxu0 %v1339
      %1746 = vmatprep.subr.bf16.mxu0 %v1344
      %1747 = vmatpush1.bf16.msra.mxu0 %v1343
      %1748 = vmatprep.subr.bf16.mxu0 %v1348
      %1749 = vmatpush1.bf16.msra.mxu0 %v1347
      %1750 = vmatprep.subr.bf16.mxu0 %v1352
      %1751 = vmatpush1.bf16.msra.mxu0 %v1351
      %1752 = vmatprep.subr.bf16.mxu0 %v1356
      %1753 = vmatpush1.bf16.msra.mxu0 %v1355
      %1754 = vmatprep.subr.bf16.mxu0 %v1360
      %1755 = vmatpush1.bf16.msra.mxu0 %v1359
      %1756 = vmatprep.subr.bf16.mxu0 %v1364
      %1757 = vmatpush1.bf16.msra.mxu0 %v1363
      %1758 = vmatprep.subr.bf16.mxu0 %v1368
      %1759 = vmatpush1.bf16.msra.mxu0 %v1367
      %1760 = vmatprep.subr.bf16.mxu0 %v1372
      %1761 = vmatpush1.bf16.msra.mxu0 %v1371
      %1762 = vmatprep.subr.bf16.mxu0 %v1376
      %1763 = vmatpush1.bf16.msra.mxu0 %v1375
      %1764 = vmatprep.mubr.bf16.mxu0 %v454
      %1765 = vmatmul.mubr.bf16.gmra.mrb[0].mxu0 %v453
      %v1766 = vpop.f32.mrb[0].mxu0
      %v1767 = vadd.f32 %v710, %v1766
      %v1768 = vpop.f32.mrb[0].mxu0
      %v1769 = vadd.f32 %v714, %v1768
      %v1770 = vpop.f32.mrb[0].mxu0
      %v1771 = vadd.f32 %v710, %v1770
      %v1772 = vpop.f32.mrb[0].mxu0
      %v1773 = vadd.f32 %v714, %v1772
      %1774 = vmatprep.mubr.bf16.mxu0 %v461
      %1775 = vmatmul.mubr.bf16.gmra.mrb[0].mxu0 %v460
      %v1776 = vpop.f32.mrb[0].mxu0
      %v1777 = vadd.f32 %v710, %v1776
      %v1778 = vpop.f32.mrb[0].mxu0
      %v1779 = vadd.f32 %v714, %v1778
      %v1780 = vpop.f32.mrb[0].mxu0
      %v1781 = vadd.f32 %v710, %v1780
      %v1782 = vpop.f32.mrb[0].mxu0
      %v1783 = vadd.f32 %v714, %v1782
      %1784 = vmatprep.mubr.bf16.mxu0 %v468
      %1785 = vmatmul.mubr.bf16.gmra.mrb[0].mxu0 %v467
      %v1786 = vpop.f32.mrb[0].mxu0
      %v1787 = vadd.f32 %v710, %v1786
      %v1788 = vpop.f32.mrb[0].mxu0
      %v1789 = vadd.f32 %v714, %v1788
      %v1790 = vpop.f32.mrb[0].mxu0
      %v1791 = vadd.f32 %v710, %v1790
      %v1792 = vpop.f32.mrb[0].mxu0
      %v1793 = vadd.f32 %v714, %v1792
      %1794 = vmatprep.mubr.bf16.mxu0 %v475
      %1795 = vmatmul.mubr.bf16.gmra.mrb[0].mxu0 %v474
      %v1796 = vpop.f32.mrb[0].mxu0
      %v1797 = vadd.f32 %v710, %v1796
      %v1798 = vpop.f32.mrb[0].mxu0
      %v1799 = vadd.f32 %v714, %v1798
      %v1800 = vpop.f32.mrb[0].mxu0
      %v1801 = vadd.f32 %v710, %v1800
      %v1802 = vpop.f32.mrb[0].mxu0
      %v1803 = vadd.f32 %v714, %v1802
      %1804 = vmatprep.mubr.bf16.mxu0 %v482
      %1805 = vmatmul.mubr.bf16.gmra.mrb[0].mxu0 %v481
      %v1806 = vpop.f32.mrb[0].mxu0
      %v1807 = vadd.f32 %v710, %v1806
      %v1808 = vpop.f32.mrb[0].mxu0
      %v1809 = vadd.f32 %v714, %v1808
      %v1810 = vpop.f32.mrb[0].mxu0
      %v1811 = vadd.f32 %v710, %v1810
      %v1812 = vpop.f32.mrb[0].mxu0
      %v1813 = vadd.f32 %v714, %v1812
      %1814 = vmatprep.mubr.bf16.mxu0 %v489
      %1815 = vmatmul.mubr.bf16.gmra.mrb[0].mxu0 %v488
      %v1816 = vpop.f32.mrb[0].mxu0
      %v1817 = vadd.f32 %v710, %v1816
      %v1818 = vpop.f32.mrb[0].mxu0
      %v1819 = vadd.f32 %v714, %v1818
      %v1820 = vpop.f32.mrb[0].mxu0
      %v1821 = vadd.f32 %v710, %v1820
      %v1822 = vpop.f32.mrb[0].mxu0
      %v1823 = vadd.f32 %v714, %v1822
      %1824 = vmatprep.mubr.bf16.mxu0 %v496
      %1825 = vmatmul.mubr.bf16.gmra.mrb[0].mxu0 %v495
      %v1826 = vpop.f32.mrb[0].mxu0
      %v1827 = vadd.f32 %v710, %v1826
      %v1828 = vpop.f32.mrb[0].mxu0
      %v1829 = vadd.f32 %v714, %v1828
      %v1830 = vpop.f32.mrb[0].mxu0
      %v1831 = vadd.f32 %v710, %v1830
      %v1832 = vpop.f32.mrb[0].mxu0
      %v1833 = vadd.f32 %v714, %v1832
      %1834 = vmatprep.mubr.bf16.mxu0 %v503
      %1835 = vmatmul.mubr.bf16.gmra.mrb[0].mxu0 %v502
      %v1836 = vpop.f32.mrb[0].mxu0
      %v1837 = vadd.f32 %v710, %v1836
      %v1838 = vpop.f32.mrb[0].mxu0
      %v1839 = vadd.f32 %v714, %v1838
      %v1840 = vpop.f32.mrb[0].mxu0
      %v1841 = vadd.f32 %v710, %v1840
      %v1842 = vpop.f32.mrb[0].mxu0
      %v1843 = vadd.f32 %v714, %v1842
      %1844 = vdwg.mxu0
      %1845 = vmatprep.subr.bf16.mxu0 %v1380
      %1846 = vmatpush1.bf16.msra.mxu0 %v1379
      %1847 = vmatprep.subr.bf16.mxu0 %v1384
      %1848 = vmatpush1.bf16.msra.mxu0 %v1383
      %1849 = vmatprep.subr.bf16.mxu0 %v1388
      %1850 = vmatpush1.bf16.msra.mxu0 %v1387
      %1851 = vmatprep.subr.bf16.mxu0 %v1392
      %1852 = vmatpush1.bf16.msra.mxu0 %v1391
      %1853 = vmatprep.subr.bf16.mxu0 %v1396
      %1854 = vmatpush1.bf16.msra.mxu0 %v1395
      %1855 = vmatprep.subr.bf16.mxu0 %v1400
      %1856 = vmatpush1.bf16.msra.mxu0 %v1399
      %1857 = vmatprep.subr.bf16.mxu0 %v1404
      %1858 = vmatpush1.bf16.msra.mxu0 %v1403
      %1859 = vmatprep.subr.bf16.mxu0 %v1408
      %1860 = vmatpush1.bf16.msra.mxu0 %v1407
      %1861 = vmatprep.subr.bf16.mxu0 %v1412
      %1862 = vmatpush1.bf16.msra.mxu0 %v1411
      %1863 = vmatprep.subr.bf16.mxu0 %v1416
      %1864 = vmatpush1.bf16.msra.mxu0 %v1415
      %1865 = vmatprep.subr.bf16.mxu0 %v1420
      %1866 = vmatpush1.bf16.msra.mxu0 %v1419
      %1867 = vmatprep.subr.bf16.mxu0 %v1424
      %1868 = vmatpush1.bf16.msra.mxu0 %v1423
      %1869 = vmatprep.subr.bf16.mxu0 %v1428
      %1870 = vmatpush1.bf16.msra.mxu0 %v1427
      %1871 = vmatprep.subr.bf16.mxu0 %v1432
      %1872 = vmatpush1.bf16.msra.mxu0 %v1431
      %1873 = vmatprep.subr.bf16.mxu0 %v1436
      %1874 = vmatpush1.bf16.msra.mxu0 %v1435
      %1875 = vmatprep.subr.bf16.mxu0 %v1440
      %1876 = vmatpush1.bf16.msra.mxu0 %v1439
      %1877 = vmatprep.mubr.bf16.mxu0 %v456
      %1878 = vmatmul.mubr.bf16.gmra.mrb[0].mxu0 %v455
      %v1879 = vpop.f32.mrb[0].mxu0
      %v1880 = vadd.f32 %v1767, %v1879
      %v1881 = vpop.f32.mrb[0].mxu0
      %v1882 = vadd.f32 %v1769, %v1881
      %v1883 = vpop.f32.mrb[0].mxu0
      %v1884 = vadd.f32 %v1771, %v1883
      %v1885 = vpop.f32.mrb[0].mxu0
      %v1886 = vadd.f32 %v1773, %v1885
      %1887 = vmatprep.mubr.bf16.mxu0 %v463
      %1888 = vmatmul.mubr.bf16.gmra.mrb[0].mxu0 %v462
      %v1889 = vpop.f32.mrb[0].mxu0
      %v1890 = vadd.f32 %v1777, %v1889
      %v1891 = vpop.f32.mrb[0].mxu0
      %v1892 = vadd.f32 %v1779, %v1891
      %v1893 = vpop.f32.mrb[0].mxu0
      %v1894 = vadd.f32 %v1781, %v1893
      %v1895 = vpop.f32.mrb[0].mxu0
      %v1896 = vadd.f32 %v1783, %v1895
      %1897 = vmatprep.mubr.bf16.mxu0 %v470
      %1898 = vmatmul.mubr.bf16.gmra.mrb[0].mxu0 %v469
      %v1899 = vpop.f32.mrb[0].mxu0
      %v1900 = vadd.f32 %v1787, %v1899
      %v1901 = vpop.f32.mrb[0].mxu0
      %v1902 = vadd.f32 %v1789, %v1901
      %v1903 = vpop.f32.mrb[0].mxu0
      %v1904 = vadd.f32 %v1791, %v1903
      %v1905 = vpop.f32.mrb[0].mxu0
      %v1906 = vadd.f32 %v1793, %v1905
      %1907 = vmatprep.mubr.bf16.mxu0 %v477
      %1908 = vmatmul.mubr.bf16.gmra.mrb[0].mxu0 %v476
      %v1909 = vpop.f32.mrb[0].mxu0
      %v1910 = vadd.f32 %v1797, %v1909
      %v1911 = vpop.f32.mrb[0].mxu0
      %v1912 = vadd.f32 %v1799, %v1911
      %v1913 = vpop.f32.mrb[0].mxu0
      %v1914 = vadd.f32 %v1801, %v1913
      %v1915 = vpop.f32.mrb[0].mxu0
      %v1916 = vadd.f32 %v1803, %v1915
      %1917 = vmatprep.mubr.bf16.mxu0 %v484
      %1918 = vmatmul.mubr.bf16.gmra.mrb[0].mxu0 %v483
      %v1919 = vpop.f32.mrb[0].mxu0
      %v1920 = vadd.f32 %v1807, %v1919
      %v1921 = vpop.f32.mrb[0].mxu0
      %v1922 = vadd.f32 %v1809, %v1921
      %v1923 = vpop.f32.mrb[0].mxu0
      %v1924 = vadd.f32 %v1811, %v1923
      %v1925 = vpop.f32.mrb[0].mxu0
      %v1926 = vadd.f32 %v1813, %v1925
      %1927 = vmatprep.mubr.bf16.mxu0 %v491
      %1928 = vmatmul.mubr.bf16.gmra.mrb[0].mxu0 %v490
      %v1929 = vpop.f32.mrb[0].mxu0
      %v1930 = vadd.f32 %v1817, %v1929
      %v1931 = vpop.f32.mrb[0].mxu0
      %v1932 = vadd.f32 %v1819, %v1931
      %v1933 = vpop.f32.mrb[0].mxu0
      %v1934 = vadd.f32 %v1821, %v1933
      %v1935 = vpop.f32.mrb[0].mxu0
      %v1936 = vadd.f32 %v1823, %v1935
      %1937 = vmatprep.mubr.bf16.mxu0 %v498
      %1938 = vmatmul.mubr.bf16.gmra.mrb[0].mxu0 %v497
      %v1939 = vpop.f32.mrb[0].mxu0
      %v1940 = vadd.f32 %v1827, %v1939
      %v1941 = vpop.f32.mrb[0].mxu0
      %v1942 = vadd.f32 %v1829, %v1941
      %v1943 = vpop.f32.mrb[0].mxu0
      %v1944 = vadd.f32 %v1831, %v1943
      %v1945 = vpop.f32.mrb[0].mxu0
      %v1946 = vadd.f32 %v1833, %v1945
      %1947 = vmatprep.mubr.bf16.mxu0 %v505
      %1948 = vmatmul.mubr.bf16.gmra.mrb[0].mxu0 %v504
      %v1949 = vpop.f32.mrb[0].mxu0
      %v1950 = vadd.f32 %v1837, %v1949
      %v1951 = vpop.f32.mrb[0].mxu0
      %v1952 = vadd.f32 %v1839, %v1951
      %v1953 = vpop.f32.mrb[0].mxu0
      %v1954 = vadd.f32 %v1841, %v1953
      %v1955 = vpop.f32.mrb[0].mxu0
      %v1956 = vadd.f32 %v1843, %v1955
      %1957 = vdwg.mxu0
      %1958 = vmatprep.subr.bf16.mxu0 %v1444
      %1959 = vmatpush1.bf16.msra.mxu0 %v1443
      %1960 = vmatprep.subr.bf16.mxu0 %v1448
      %1961 = vmatpush1.bf16.msra.mxu0 %v1447
      %1962 = vmatprep.subr.bf16.mxu0 %v1452
      %1963 = vmatpush1.bf16.msra.mxu0 %v1451
      %1964 = vmatprep.subr.bf16.mxu0 %v1456
      %1965 = vmatpush1.bf16.msra.mxu0 %v1455
      %1966 = vmatprep.subr.bf16.mxu0 %v1460
      %1967 = vmatpush1.bf16.msra.mxu0 %v1459
      %1968 = vmatprep.subr.bf16.mxu0 %v1464
      %1969 = vmatpush1.bf16.msra.mxu0 %v1463
      %1970 = vmatprep.subr.bf16.mxu0 %v1468
      %1971 = vmatpush1.bf16.msra.mxu0 %v1467
      %1972 = vmatprep.subr.bf16.mxu0 %v1472
      %1973 = vmatpush1.bf16.msra.mxu0 %v1471
      %1974 = vmatprep.subr.bf16.mxu0 %v1476
      %1975 = vmatpush1.bf16.msra.mxu0 %v1475
      %1976 = vmatprep.subr.bf16.mxu0 %v1480
      %1977 = vmatpush1.bf16.msra.mxu0 %v1479
      %1978 = vmatprep.subr.bf16.mxu0 %v1484
      %1979 = vmatpush1.bf16.msra.mxu0 %v1483
      %1980 = vmatprep.subr.bf16.mxu0 %v1488
      %1981 = vmatpush1.bf16.msra.mxu0 %v1487
      %1982 = vmatprep.subr.bf16.mxu0 %v1492
      %1983 = vmatpush1.bf16.msra.mxu0 %v1491
      %1984 = vmatprep.subr.bf16.mxu0 %v1496
      %1985 = vmatpush1.bf16.msra.mxu0 %v1495
      %1986 = vmatprep.subr.bf16.mxu0 %v1500
      %1987 = vmatpush1.bf16.msra.mxu0 %v1499
      %1988 = vmatprep.subr.bf16.mxu0 %v1504
      %1989 = vmatpush1.bf16.msra.mxu0 %v1503
      %1990 = vmatprep.mubr.bf16.mxu0 %v458
      %1991 = vmatmul.mubr.bf16.gmra.mrb[0].mxu0 %v457
      %v1992 = vpop.f32.mrb[0].mxu0
      %v1993 = vadd.f32 %v1880, %v1992
      %v1994 = vpop.f32.mrb[0].mxu0
      %v1995 = vadd.f32 %v1882, %v1994
      %v1996 = vpop.f32.mrb[0].mxu0
      %v1997 = vadd.f32 %v1884, %v1996
      %v1998 = vpop.f32.mrb[0].mxu0
      %v1999 = vadd.f32 %v1886, %v1998
      %2000 = vmatprep.mubr.bf16.mxu0 %v465
      %2001 = vmatmul.mubr.bf16.gmra.mrb[0].mxu0 %v464
      %v2002 = vpop.f32.mrb[0].mxu0
      %v2003 = vadd.f32 %v1890, %v2002
      %v2004 = vpop.f32.mrb[0].mxu0
      %v2005 = vadd.f32 %v1892, %v2004
      %v2006 = vpop.f32.mrb[0].mxu0
      %v2007 = vadd.f32 %v1894, %v2006
      %v2008 = vpop.f32.mrb[0].mxu0
      %v2009 = vadd.f32 %v1896, %v2008
      %2010 = vmatprep.mubr.bf16.mxu0 %v472
      %2011 = vmatmul.mubr.bf16.gmra.mrb[0].mxu0 %v471
      %v2012 = vpop.f32.mrb[0].mxu0
      %v2013 = vadd.f32 %v1900, %v2012
      %v2014 = vpop.f32.mrb[0].mxu0
      %v2015 = vadd.f32 %v1902, %v2014
      %v2016 = vpop.f32.mrb[0].mxu0
      %v2017 = vadd.f32 %v1904, %v2016
      %v2018 = vpop.f32.mrb[0].mxu0
      %v2019 = vadd.f32 %v1906, %v2018
      %2020 = vmatprep.mubr.bf16.mxu0 %v479
      %2021 = vmatmul.mubr.bf16.gmra.mrb[0].mxu0 %v478
      %v2022 = vpop.f32.mrb[0].mxu0
      %v2023 = vadd.f32 %v1910, %v2022
      %v2024 = vpop.f32.mrb[0].mxu0
      %v2025 = vadd.f32 %v1912, %v2024
      %v2026 = vpop.f32.mrb[0].mxu0
      %v2027 = vadd.f32 %v1914, %v2026
      %v2028 = vpop.f32.mrb[0].mxu0
      %v2029 = vadd.f32 %v1916, %v2028
      %2030 = vmatprep.mubr.bf16.mxu0 %v486
      %2031 = vmatmul.mubr.bf16.gmra.mrb[0].mxu0 %v485
      %v2032 = vpop.f32.mrb[0].mxu0
      %v2033 = vadd.f32 %v1920, %v2032
      %v2034 = vpop.f32.mrb[0].mxu0
      %v2035 = vadd.f32 %v1922, %v2034
      %v2036 = vpop.f32.mrb[0].mxu0
      %v2037 = vadd.f32 %v1924, %v2036
      %v2038 = vpop.f32.mrb[0].mxu0
      %v2039 = vadd.f32 %v1926, %v2038
      %2040 = vmatprep.mubr.bf16.mxu0 %v493
      %2041 = vmatmul.mubr.bf16.gmra.mrb[0].mxu0 %v492
      %v2042 = vpop.f32.mrb[0].mxu0
      %v2043 = vadd.f32 %v1930, %v2042
      %v2044 = vpop.f32.mrb[0].mxu0
      %v2045 = vadd.f32 %v1932, %v2044
      %v2046 = vpop.f32.mrb[0].mxu0
      %v2047 = vadd.f32 %v1934, %v2046
      %v2048 = vpop.f32.mrb[0].mxu0
      %v2049 = vadd.f32 %v1936, %v2048
      %2050 = vmatprep.mubr.bf16.mxu0 %v500
      %2051 = vmatmul.mubr.bf16.gmra.mrb[0].mxu0 %v499
      %v2052 = vpop.f32.mrb[0].mxu0
      %v2053 = vadd.f32 %v1940, %v2052
      %v2054 = vpop.f32.mrb[0].mxu0
      %v2055 = vadd.f32 %v1942, %v2054
      %v2056 = vpop.f32.mrb[0].mxu0
      %v2057 = vadd.f32 %v1944, %v2056
      %v2058 = vpop.f32.mrb[0].mxu0
      %v2059 = vadd.f32 %v1946, %v2058
      %2060 = vmatprep.mubr.bf16.mxu0 %v507
      %2061 = vmatmul.mubr.bf16.gmra.mrb[0].mxu0 %v506
      %v2062 = vpop.f32.mrb[0].mxu0
      %v2063 = vadd.f32 %v1950, %v2062
      %v2064 = vpop.f32.mrb[0].mxu0
      %v2065 = vadd.f32 %v1952, %v2064
      %v2066 = vpop.f32.mrb[0].mxu0
      %v2067 = vadd.f32 %v1954, %v2066
      %v2068 = vpop.f32.mrb[0].mxu0
      %v2069 = vadd.f32 %v1956, %v2068
      %2070 = vdwg.mxu0
      %2071 = vmatprep.subr.bf16.mxu0 %v1508
      %2072 = vmatpush1.bf16.msra.mxu0 %v1507
      %2073 = vmatprep.subr.bf16.mxu0 0
      %2074 = vmatpush1.bf16.msra.mxu0 0
      %2075 = vmatprep.subr.bf16.mxu0 0
      %2076 = vmatpush1.bf16.msra.mxu0 0
      %2077 = vmatprep.subr.bf16.mxu0 0
      %2078 = vmatpush1.bf16.msra.mxu0 0
      %2079 = vmatprep.subr.bf16.mxu0 0
      %2080 = vmatpush1.bf16.msra.mxu0 0
      %2081 = vmatprep.subr.bf16.mxu0 0
      %2082 = vmatpush1.bf16.msra.mxu0 0
      %2083 = vmatprep.subr.bf16.mxu0 0
      %2084 = vmatpush1.bf16.msra.mxu0 0
      %2085 = vmatprep.subr.bf16.mxu0 0
      %2086 = vmatpush1.bf16.msra.mxu0 0
      %2087 = vmatprep.subr.bf16.mxu0 0
      %2088 = vmatpush1.bf16.msra.mxu0 0
      %2089 = vmatprep.subr.bf16.mxu0 0
      %2090 = vmatpush1.bf16.msra.mxu0 0
      %2091 = vmatprep.subr.bf16.mxu0 0
      %2092 = vmatpush1.bf16.msra.mxu0 0
      %2093 = vmatprep.subr.bf16.mxu0 0
      %2094 = vmatpush1.bf16.msra.mxu0 0
      %2095 = vmatprep.subr.bf16.mxu0 0
      %2096 = vmatpush1.bf16.msra.mxu0 0
      %2097 = vmatprep.subr.bf16.mxu0 0
      %2098 = vmatpush1.bf16.msra.mxu0 0
      %2099 = vmatprep.subr.bf16.mxu0 0
      %2100 = vmatpush1.bf16.msra.mxu0 0
      %2101 = vmatprep.subr.bf16.mxu0 0
      %2102 = vmatpush1.bf16.msra.mxu0 0
      %2103 = vmatprep.mubr.bf16.mxu0 0
      %2104 = vmatmul.mubr.bf16.gmra.mrb[0].mxu0 %v1709
      %v2105 = vpop.f32.mrb[0].mxu0
      %v2106 = vadd.f32 %v1993, %v2105
      %v2107 = vpop.f32.mrb[0].mxu0
      %v2108 = vadd.f32 %v1995, %v2107
      %v2109 = vpop.f32.mrb[0].mxu0
      %v2110 = vadd.f32 %v1997, %v2109
      %v2111 = vpop.f32.mrb[0].mxu0
      %v2112 = vadd.f32 %v1999, %v2111
      %2113 = vmatprep.mubr.bf16.mxu0 0
      %2114 = vmatmul.mubr.bf16.gmra.mrb[0].mxu0 %v1712
      %v2115 = vpop.f32.mrb[0].mxu0
      %v2116 = vadd.f32 %v2003, %v2115
      %v2117 = vpop.f32.mrb[0].mxu0
      %v2118 = vadd.f32 %v2005, %v2117
      %v2119 = vpop.f32.mrb[0].mxu0
      %v2120 = vadd.f32 %v2007, %v2119
      %v2121 = vpop.f32.mrb[0].mxu0
      %v2122 = vadd.f32 %v2009, %v2121
      %2123 = vmatprep.mubr.bf16.mxu0 0
      %2124 = vmatmul.mubr.bf16.gmra.mrb[0].mxu0 %v1715
      %v2125 = vpop.f32.mrb[0].mxu0
      %v2126 = vadd.f32 %v2013, %v2125
      %v2127 = vpop.f32.mrb[0].mxu0
      %v2128 = vadd.f32 %v2015, %v2127
      %v2129 = vpop.f32.mrb[0].mxu0
      %v2130 = vadd.f32 %v2017, %v2129
      %v2131 = vpop.f32.mrb[0].mxu0
      %v2132 = vadd.f32 %v2019, %v2131
      %2133 = vmatprep.mubr.bf16.mxu0 0
      %2134 = vmatmul.mubr.bf16.gmra.mrb[0].mxu0 %v1718
      %v2135 = vpop.f32.mrb[0].mxu0
      %v2136 = vadd.f32 %v2023, %v2135
      %v2137 = vpop.f32.mrb[0].mxu0
      %v2138 = vadd.f32 %v2025, %v2137
      %v2139 = vpop.f32.mrb[0].mxu0
      %v2140 = vadd.f32 %v2027, %v2139
      %v2141 = vpop.f32.mrb[0].mxu0
      %v2142 = vadd.f32 %v2029, %v2141
      %2143 = vmatprep.mubr.bf16.mxu0 0
      %2144 = vmatmul.mubr.bf16.gmra.mrb[0].mxu0 %v1721
      %v2145 = vpop.f32.mrb[0].mxu0
      %v2146 = vadd.f32 %v2033, %v2145
      %v2147 = vpop.f32.mrb[0].mxu0
      %v2148 = vadd.f32 %v2035, %v2147
      %v2149 = vpop.f32.mrb[0].mxu0
      %v2150 = vadd.f32 %v2037, %v2149
      %v2151 = vpop.f32.mrb[0].mxu0
      %v2152 = vadd.f32 %v2039, %v2151
      %2153 = vmatprep.mubr.bf16.mxu0 0
      %2154 = vmatmul.mubr.bf16.gmra.mrb[0].mxu0 %v1724
      %v2155 = vpop.f32.mrb[0].mxu0
      %v2156 = vadd.f32 %v2043, %v2155
      %v2157 = vpop.f32.mrb[0].mxu0
      %v2158 = vadd.f32 %v2045, %v2157
      %v2159 = vpop.f32.mrb[0].mxu0
      %v2160 = vadd.f32 %v2047, %v2159
      %v2161 = vpop.f32.mrb[0].mxu0
      %v2162 = vadd.f32 %v2049, %v2161
      %2163 = vmatprep.mubr.bf16.mxu0 0
      %2164 = vmatmul.mubr.bf16.gmra.mrb[0].mxu0 %v1727
      %v2165 = vpop.f32.mrb[0].mxu0
      %v2166 = vadd.f32 %v2053, %v2165
      %v2167 = vpop.f32.mrb[0].mxu0
      %v2168 = vadd.f32 %v2055, %v2167
      %v2169 = vpop.f32.mrb[0].mxu0
      %v2170 = vadd.f32 %v2057, %v2169
      %v2171 = vpop.f32.mrb[0].mxu0
      %v2172 = vadd.f32 %v2059, %v2171
      %2173 = vmatprep.mubr.bf16.mxu0 0
      %2174 = vmatmul.mubr.bf16.gmra.mrb[0].mxu0 %v1730
      %v2175 = vpop.f32.mrb[0].mxu0
      %v2176 = vadd.f32 %v2063, %v2175
      %v2177 = vpop.f32.mrb[0].mxu0
      %v2178 = vadd.f32 %v2065, %v2177
      %v2179 = vpop.f32.mrb[0].mxu0
      %v2180 = vadd.f32 %v2067, %v2179
      %v2181 = vpop.f32.mrb[0].mxu0
      %v2182 = vadd.f32 %v2069, %v2181
      %2183 = vdwg.mxu0
      %2184 = vmatprep.subr.bf16.mxu0 %v1318
      %2185 = vmatpush1.bf16.msra.mxu0 %v1317
      %2186 = vmatprep.subr.bf16.mxu0 %v1322
      %2187 = vmatpush1.bf16.msra.mxu0 %v1321
      %2188 = vmatprep.subr.bf16.mxu0 %v1326
      %2189 = vmatpush1.bf16.msra.mxu0 %v1325
      %2190 = vmatprep.subr.bf16.mxu0 %v1330
      %2191 = vmatpush1.bf16.msra.mxu0 %v1329
      %2192 = vmatprep.subr.bf16.mxu0 %v1334
      %2193 = vmatpush1.bf16.msra.mxu0 %v1333
      %2194 = vmatprep.subr.bf16.mxu0 %v1338
      %2195 = vmatpush1.bf16.msra.mxu0 %v1337
      %2196 = vmatprep.subr.bf16.mxu0 %v1342
      %2197 = vmatpush1.bf16.msra.mxu0 %v1341
      %2198 = vmatprep.subr.bf16.mxu0 %v1346
      %2199 = vmatpush1.bf16.msra.mxu0 %v1345
      %2200 = vmatprep.subr.bf16.mxu0 %v1350
      %2201 = vmatpush1.bf16.msra.mxu0 %v1349
      %2202 = vmatprep.subr.bf16.mxu0 %v1354
      %2203 = vmatpush1.bf16.msra.mxu0 %v1353
      %2204 = vmatprep.subr.bf16.mxu0 %v1358
      %2205 = vmatpush1.bf16.msra.mxu0 %v1357
      %2206 = vmatprep.subr.bf16.mxu0 %v1362
      %2207 = vmatpush1.bf16.msra.mxu0 %v1361
      %2208 = vmatprep.subr.bf16.mxu0 %v1366
      %2209 = vmatpush1.bf16.msra.mxu0 %v1365
      %2210 = vmatprep.subr.bf16.mxu0 %v1370
      %2211 = vmatpush1.bf16.msra.mxu0 %v1369
      %2212 = vmatprep.subr.bf16.mxu0 %v1374
      %2213 = vmatpush1.bf16.msra.mxu0 %v1373
      %2214 = vmatprep.subr.bf16.mxu0 %v1378
      %2215 = vmatpush1.bf16.msra.mxu0 %v1377
      %2216 = vmatprep.mubr.bf16.mxu0 %v454
      %2217 = vmatmul.mubr.bf16.gmra.mrb[0].mxu0 %v453
      %v2218 = vpop.f32.mrb[0].mxu0
      %v2219 = vadd.f32 %v718, %v2218
      %v2220 = vpop.f32.mrb[0].mxu0
      %v2221 = vadd.f32 %v722, %v2220
      %v2222 = vpop.f32.mrb[0].mxu0
      %v2223 = vadd.f32 %v718, %v2222
      %v2224 = vpop.f32.mrb[0].mxu0
      %v2225 = vadd.f32 %v722, %v2224
      %2226 = vmatprep.mubr.bf16.mxu0 %v461
      %2227 = vmatmul.mubr.bf16.gmra.mrb[0].mxu0 %v460
      %v2228 = vpop.f32.mrb[0].mxu0
      %v2229 = vadd.f32 %v718, %v2228
      %v2230 = vpop.f32.mrb[0].mxu0
      %v2231 = vadd.f32 %v722, %v2230
      %v2232 = vpop.f32.mrb[0].mxu0
      %v2233 = vadd.f32 %v718, %v2232
      %v2234 = vpop.f32.mrb[0].mxu0
      %v2235 = vadd.f32 %v722, %v2234
      %2236 = vmatprep.mubr.bf16.mxu0 %v468
      %2237 = vmatmul.mubr.bf16.gmra.mrb[0].mxu0 %v467
      %v2238 = vpop.f32.mrb[0].mxu0
      %v2239 = vadd.f32 %v718, %v2238
      %v2240 = vpop.f32.mrb[0].mxu0
      %v2241 = vadd.f32 %v722, %v2240
      %v2242 = vpop.f32.mrb[0].mxu0
      %v2243 = vadd.f32 %v718, %v2242
      %v2244 = vpop.f32.mrb[0].mxu0
      %v2245 = vadd.f32 %v722, %v2244
      %2246 = vmatprep.mubr.bf16.mxu0 %v475
      %2247 = vmatmul.mubr.bf16.gmra.mrb[0].mxu0 %v474
      %v2248 = vpop.f32.mrb[0].mxu0
      %v2249 = vadd.f32 %v718, %v2248
      %v2250 = vpop.f32.mrb[0].mxu0
      %v2251 = vadd.f32 %v722, %v2250
      %v2252 = vpop.f32.mrb[0].mxu0
      %v2253 = vadd.f32 %v718, %v2252
      %v2254 = vpop.f32.mrb[0].mxu0
      %v2255 = vadd.f32 %v722, %v2254
      %2256 = vmatprep.mubr.bf16.mxu0 %v482
      %2257 = vmatmul.mubr.bf16.gmra.mrb[0].mxu0 %v481
      %v2258 = vpop.f32.mrb[0].mxu0
      %v2259 = vadd.f32 %v718, %v2258
      %v2260 = vpop.f32.mrb[0].mxu0
      %v2261 = vadd.f32 %v722, %v2260
      %v2262 = vpop.f32.mrb[0].mxu0
      %v2263 = vadd.f32 %v718, %v2262
      %v2264 = vpop.f32.mrb[0].mxu0
      %v2265 = vadd.f32 %v722, %v2264
      %2266 = vmatprep.mubr.bf16.mxu0 %v489
      %2267 = vmatmul.mubr.bf16.gmra.mrb[0].mxu0 %v488
      %v2268 = vpop.f32.mrb[0].mxu0
      %v2269 = vadd.f32 %v718, %v2268
      %v2270 = vpop.f32.mrb[0].mxu0
      %v2271 = vadd.f32 %v722, %v2270
      %v2272 = vpop.f32.mrb[0].mxu0
      %v2273 = vadd.f32 %v718, %v2272
      %v2274 = vpop.f32.mrb[0].mxu0
      %v2275 = vadd.f32 %v722, %v2274
      %2276 = vmatprep.mubr.bf16.mxu0 %v496
      %2277 = vmatmul.mubr.bf16.gmra.mrb[0].mxu0 %v495
      %v2278 = vpop.f32.mrb[0].mxu0
      %v2279 = vadd.f32 %v718, %v2278
      %v2280 = vpop.f32.mrb[0].mxu0
      %v2281 = vadd.f32 %v722, %v2280
      %v2282 = vpop.f32.mrb[0].mxu0
      %v2283 = vadd.f32 %v718, %v2282
      %v2284 = vpop.f32.mrb[0].mxu0
      %v2285 = vadd.f32 %v722, %v2284
      %2286 = vmatprep.mubr.bf16.mxu0 %v503
      %2287 = vmatmul.mubr.bf16.gmra.mrb[0].mxu0 %v502
      %v2288 = vpop.f32.mrb[0].mxu0
      %v2289 = vadd.f32 %v718, %v2288
      %v2290 = vpop.f32.mrb[0].mxu0
      %v2291 = vadd.f32 %v722, %v2290
      %v2292 = vpop.f32.mrb[0].mxu0
      %v2293 = vadd.f32 %v718, %v2292
      %v2294 = vpop.f32.mrb[0].mxu0
      %v2295 = vadd.f32 %v722, %v2294
      %2296 = vdwg.mxu0
      %2297 = vmatprep.subr.bf16.mxu0 %v1382
      %2298 = vmatpush1.bf16.msra.mxu0 %v1381
      %2299 = vmatprep.subr.bf16.mxu0 %v1386
      %2300 = vmatpush1.bf16.msra.mxu0 %v1385
      %2301 = vmatprep.subr.bf16.mxu0 %v1390
      %2302 = vmatpush1.bf16.msra.mxu0 %v1389
      %2303 = vmatprep.subr.bf16.mxu0 %v1394
      %2304 = vmatpush1.bf16.msra.mxu0 %v1393
      %2305 = vmatprep.subr.bf16.mxu0 %v1398
      %2306 = vmatpush1.bf16.msra.mxu0 %v1397
      %2307 = vmatprep.subr.bf16.mxu0 %v1402
      %2308 = vmatpush1.bf16.msra.mxu0 %v1401
      %2309 = vmatprep.subr.bf16.mxu0 %v1406
      %2310 = vmatpush1.bf16.msra.mxu0 %v1405
      %2311 = vmatprep.subr.bf16.mxu0 %v1410
      %2312 = vmatpush1.bf16.msra.mxu0 %v1409
      %2313 = vmatprep.subr.bf16.mxu0 %v1414
      %2314 = vmatpush1.bf16.msra.mxu0 %v1413
      %2315 = vmatprep.subr.bf16.mxu0 %v1418
      %2316 = vmatpush1.bf16.msra.mxu0 %v1417
      %2317 = vmatprep.subr.bf16.mxu0 %v1422
      %2318 = vmatpush1.bf16.msra.mxu0 %v1421
      %2319 = vmatprep.subr.bf16.mxu0 %v1426
      %2320 = vmatpush1.bf16.msra.mxu0 %v1425
      %2321 = vmatprep.subr.bf16.mxu0 %v1430
      %2322 = vmatpush1.bf16.msra.mxu0 %v1429
      %2323 = vmatprep.subr.bf16.mxu0 %v1434
      %2324 = vmatpush1.bf16.msra.mxu0 %v1433
      %2325 = vmatprep.subr.bf16.mxu0 %v1438
      %2326 = vmatpush1.bf16.msra.mxu0 %v1437
      %2327 = vmatprep.subr.bf16.mxu0 %v1442
      %2328 = vmatpush1.bf16.msra.mxu0 %v1441
      %2329 = vmatprep.mubr.bf16.mxu0 %v456
      %2330 = vmatmul.mubr.bf16.gmra.mrb[0].mxu0 %v455
      %v2331 = vpop.f32.mrb[0].mxu0
      %v2332 = vadd.f32 %v2219, %v2331
      %v2333 = vpop.f32.mrb[0].mxu0
      %v2334 = vadd.f32 %v2221, %v2333
      %v2335 = vpop.f32.mrb[0].mxu0
      %v2336 = vadd.f32 %v2223, %v2335
      %v2337 = vpop.f32.mrb[0].mxu0
      %v2338 = vadd.f32 %v2225, %v2337
      %2339 = vmatprep.mubr.bf16.mxu0 %v463
      %2340 = vmatmul.mubr.bf16.gmra.mrb[0].mxu0 %v462
      %v2341 = vpop.f32.mrb[0].mxu0
      %v2342 = vadd.f32 %v2229, %v2341
      %v2343 = vpop.f32.mrb[0].mxu0
      %v2344 = vadd.f32 %v2231, %v2343
      %v2345 = vpop.f32.mrb[0].mxu0
      %v2346 = vadd.f32 %v2233, %v2345
      %v2347 = vpop.f32.mrb[0].mxu0
      %v2348 = vadd.f32 %v2235, %v2347
      %2349 = vmatprep.mubr.bf16.mxu0 %v470
      %2350 = vmatmul.mubr.bf16.gmra.mrb[0].mxu0 %v469
      %v2351 = vpop.f32.mrb[0].mxu0
      %v2352 = vadd.f32 %v2239, %v2351
      %v2353 = vpop.f32.mrb[0].mxu0
      %v2354 = vadd.f32 %v2241, %v2353
      %v2355 = vpop.f32.mrb[0].mxu0
      %v2356 = vadd.f32 %v2243, %v2355
      %v2357 = vpop.f32.mrb[0].mxu0
      %v2358 = vadd.f32 %v2245, %v2357
      %2359 = vmatprep.mubr.bf16.mxu0 %v477
      %2360 = vmatmul.mubr.bf16.gmra.mrb[0].mxu0 %v476
      %v2361 = vpop.f32.mrb[0].mxu0
      %v2362 = vadd.f32 %v2249, %v2361
      %v2363 = vpop.f32.mrb[0].mxu0
      %v2364 = vadd.f32 %v2251, %v2363
      %v2365 = vpop.f32.mrb[0].mxu0
      %v2366 = vadd.f32 %v2253, %v2365
      %v2367 = vpop.f32.mrb[0].mxu0
      %v2368 = vadd.f32 %v2255, %v2367
      %2369 = vmatprep.mubr.bf16.mxu0 %v484
      %2370 = vmatmul.mubr.bf16.gmra.mrb[0].mxu0 %v483
      %v2371 = vpop.f32.mrb[0].mxu0
      %v2372 = vadd.f32 %v2259, %v2371
      %v2373 = vpop.f32.mrb[0].mxu0
      %v2374 = vadd.f32 %v2261, %v2373
      %v2375 = vpop.f32.mrb[0].mxu0
      %v2376 = vadd.f32 %v2263, %v2375
      %v2377 = vpop.f32.mrb[0].mxu0
      %v2378 = vadd.f32 %v2265, %v2377
      %2379 = vmatprep.mubr.bf16.mxu0 %v491
      %2380 = vmatmul.mubr.bf16.gmra.mrb[0].mxu0 %v490
      %v2381 = vpop.f32.mrb[0].mxu0
      %v2382 = vadd.f32 %v2269, %v2381
      %v2383 = vpop.f32.mrb[0].mxu0
      %v2384 = vadd.f32 %v2271, %v2383
      %v2385 = vpop.f32.mrb[0].mxu0
      %v2386 = vadd.f32 %v2273, %v2385
      %v2387 = vpop.f32.mrb[0].mxu0
      %v2388 = vadd.f32 %v2275, %v2387
      %2389 = vmatprep.mubr.bf16.mxu0 %v498
      %2390 = vmatmul.mubr.bf16.gmra.mrb[0].mxu0 %v497
      %v2391 = vpop.f32.mrb[0].mxu0
      %v2392 = vadd.f32 %v2279, %v2391
      %v2393 = vpop.f32.mrb[0].mxu0
      %v2394 = vadd.f32 %v2281, %v2393
      %v2395 = vpop.f32.mrb[0].mxu0
      %v2396 = vadd.f32 %v2283, %v2395
      %v2397 = vpop.f32.mrb[0].mxu0
      %v2398 = vadd.f32 %v2285, %v2397
      %2399 = vmatprep.mubr.bf16.mxu0 %v505
      %2400 = vmatmul.mubr.bf16.gmra.mrb[0].mxu0 %v504
      %v2401 = vpop.f32.mrb[0].mxu0
      %v2402 = vadd.f32 %v2289, %v2401
      %v2403 = vpop.f32.mrb[0].mxu0
      %v2404 = vadd.f32 %v2291, %v2403
      %v2405 = vpop.f32.mrb[0].mxu0
      %v2406 = vadd.f32 %v2293, %v2405
      %v2407 = vpop.f32.mrb[0].mxu0
      %v2408 = vadd.f32 %v2295, %v2407
      %2409 = vdwg.mxu0
      %2410 = vmatprep.subr.bf16.mxu0 %v1446
      %2411 = vmatpush1.bf16.msra.mxu0 %v1445
      %2412 = vmatprep.subr.bf16.mxu0 %v1450
      %2413 = vmatpush1.bf16.msra.mxu0 %v1449
      %2414 = vmatprep.subr.bf16.mxu0 %v1454
      %2415 = vmatpush1.bf16.msra.mxu0 %v1453
      %2416 = vmatprep.subr.bf16.mxu0 %v1458
      %2417 = vmatpush1.bf16.msra.mxu0 %v1457
      %2418 = vmatprep.subr.bf16.mxu0 %v1462
      %2419 = vmatpush1.bf16.msra.mxu0 %v1461
      %2420 = vmatprep.subr.bf16.mxu0 %v1466
      %2421 = vmatpush1.bf16.msra.mxu0 %v1465
      %2422 = vmatprep.subr.bf16.mxu0 %v1470
      %2423 = vmatpush1.bf16.msra.mxu0 %v1469
      %2424 = vmatprep.subr.bf16.mxu0 %v1474
      %2425 = vmatpush1.bf16.msra.mxu0 %v1473
      %2426 = vmatprep.subr.bf16.mxu0 %v1478
      %2427 = vmatpush1.bf16.msra.mxu0 %v1477
      %2428 = vmatprep.subr.bf16.mxu0 %v1482
      %2429 = vmatpush1.bf16.msra.mxu0 %v1481
      %2430 = vmatprep.subr.bf16.mxu0 %v1486
      %2431 = vmatpush1.bf16.msra.mxu0 %v1485
      %2432 = vmatprep.subr.bf16.mxu0 %v1490
      %2433 = vmatpush1.bf16.msra.mxu0 %v1489
      %2434 = vmatprep.subr.bf16.mxu0 %v1494
      %2435 = vmatpush1.bf16.msra.mxu0 %v1493
      %2436 = vmatprep.subr.bf16.mxu0 %v1498
      %2437 = vmatpush1.bf16.msra.mxu0 %v1497
      %2438 = vmatprep.subr.bf16.mxu0 %v1502
      %2439 = vmatpush1.bf16.msra.mxu0 %v1501
      %2440 = vmatprep.subr.bf16.mxu0 %v1506
      %2441 = vmatpush1.bf16.msra.mxu0 %v1505
      %2442 = vmatprep.mubr.bf16.mxu0 %v458
      %2443 = vmatmul.mubr.bf16.gmra.mrb[0].mxu0 %v457
      %v2444 = vpop.f32.mrb[0].mxu0
      %v2445 = vadd.f32 %v2332, %v2444
      %v2446 = vpop.f32.mrb[0].mxu0
      %v2447 = vadd.f32 %v2334, %v2446
      %v2448 = vpop.f32.mrb[0].mxu0
      %v2449 = vadd.f32 %v2336, %v2448
      %v2450 = vpop.f32.mrb[0].mxu0
      %v2451 = vadd.f32 %v2338, %v2450
      %2452 = vmatprep.mubr.bf16.mxu0 %v465
      %2453 = vmatmul.mubr.bf16.gmra.mrb[0].mxu0 %v464
      %v2454 = vpop.f32.mrb[0].mxu0
      %v2455 = vadd.f32 %v2342, %v2454
      %v2456 = vpop.f32.mrb[0].mxu0
      %v2457 = vadd.f32 %v2344, %v2456
      %v2458 = vpop.f32.mrb[0].mxu0
      %v2459 = vadd.f32 %v2346, %v2458
      %v2460 = vpop.f32.mrb[0].mxu0
      %v2461 = vadd.f32 %v2348, %v2460
      %2462 = vmatprep.mubr.bf16.mxu0 %v472
      %2463 = vmatmul.mubr.bf16.gmra.mrb[0].mxu0 %v471
      %v2464 = vpop.f32.mrb[0].mxu0
      %v2465 = vadd.f32 %v2352, %v2464
      %v2466 = vpop.f32.mrb[0].mxu0
      %v2467 = vadd.f32 %v2354, %v2466
      %v2468 = vpop.f32.mrb[0].mxu0
      %v2469 = vadd.f32 %v2356, %v2468
      %v2470 = vpop.f32.mrb[0].mxu0
      %v2471 = vadd.f32 %v2358, %v2470
      %2472 = vmatprep.mubr.bf16.mxu0 %v479
      %2473 = vmatmul.mubr.bf16.gmra.mrb[0].mxu0 %v478
      %v2474 = vpop.f32.mrb[0].mxu0
      %v2475 = vadd.f32 %v2362, %v2474
      %v2476 = vpop.f32.mrb[0].mxu0
      %v2477 = vadd.f32 %v2364, %v2476
      %v2478 = vpop.f32.mrb[0].mxu0
      %v2479 = vadd.f32 %v2366, %v2478
      %v2480 = vpop.f32.mrb[0].mxu0
      %v2481 = vadd.f32 %v2368, %v2480
      %2482 = vmatprep.mubr.bf16.mxu0 %v486
      %2483 = vmatmul.mubr.bf16.gmra.mrb[0].mxu0 %v485
      %v2484 = vpop.f32.mrb[0].mxu0
      %v2485 = vadd.f32 %v2372, %v2484
      %v2486 = vpop.f32.mrb[0].mxu0
      %v2487 = vadd.f32 %v2374, %v2486
      %v2488 = vpop.f32.mrb[0].mxu0
      %v2489 = vadd.f32 %v2376, %v2488
      %v2490 = vpop.f32.mrb[0].mxu0
      %v2491 = vadd.f32 %v2378, %v2490
      %2492 = vmatprep.mubr.bf16.mxu0 %v493
      %2493 = vmatmul.mubr.bf16.gmra.mrb[0].mxu0 %v492
      %v2494 = vpop.f32.mrb[0].mxu0
      %v2495 = vadd.f32 %v2382, %v2494
      %v2496 = vpop.f32.mrb[0].mxu0
      %v2497 = vadd.f32 %v2384, %v2496
      %v2498 = vpop.f32.mrb[0].mxu0
      %v2499 = vadd.f32 %v2386, %v2498
      %v2500 = vpop.f32.mrb[0].mxu0
      %v2501 = vadd.f32 %v2388, %v2500
      %2502 = vmatprep.mubr.bf16.mxu0 %v500
      %2503 = vmatmul.mubr.bf16.gmra.mrb[0].mxu0 %v499
      %v2504 = vpop.f32.mrb[0].mxu0
      %v2505 = vadd.f32 %v2392, %v2504
      %v2506 = vpop.f32.mrb[0].mxu0
      %v2507 = vadd.f32 %v2394, %v2506
      %v2508 = vpop.f32.mrb[0].mxu0
      %v2509 = vadd.f32 %v2396, %v2508
      %v2510 = vpop.f32.mrb[0].mxu0
      %v2511 = vadd.f32 %v2398, %v2510
      %2512 = vmatprep.mubr.bf16.mxu0 %v507
      %2513 = vmatmul.mubr.bf16.gmra.mrb[0].mxu0 %v506
      %v2514 = vpop.f32.mrb[0].mxu0
      %v2515 = vadd.f32 %v2402, %v2514
      %v2516 = vpop.f32.mrb[0].mxu0
      %v2517 = vadd.f32 %v2404, %v2516
      %v2518 = vpop.f32.mrb[0].mxu0
      %v2519 = vadd.f32 %v2406, %v2518
      %v2520 = vpop.f32.mrb[0].mxu0
      %v2521 = vadd.f32 %v2408, %v2520
      %2522 = vdwg.mxu0
      %2523 = vmatprep.subr.bf16.mxu0 %v1510
      %2524 = vmatpush1.bf16.msra.mxu0 %v1509
      %2525 = vmatprep.subr.bf16.mxu0 0
      %2526 = vmatpush1.bf16.msra.mxu0 0
      %2527 = vmatprep.subr.bf16.mxu0 0
      %2528 = vmatpush1.bf16.msra.mxu0 0
      %2529 = vmatprep.subr.bf16.mxu0 0
      %2530 = vmatpush1.bf16.msra.mxu0 0
      %2531 = vmatprep.subr.bf16.mxu0 0
      %2532 = vmatpush1.bf16.msra.mxu0 0
      %2533 = vmatprep.subr.bf16.mxu0 0
      %2534 = vmatpush1.bf16.msra.mxu0 0
      %2535 = vmatprep.subr.bf16.mxu0 0
      %2536 = vmatpush1.bf16.msra.mxu0 0
      %2537 = vmatprep.subr.bf16.mxu0 0
      %2538 = vmatpush1.bf16.msra.mxu0 0
      %2539 = vmatprep.subr.bf16.mxu0 0
      %2540 = vmatpush1.bf16.msra.mxu0 0
      %2541 = vmatprep.subr.bf16.mxu0 0
      %2542 = vmatpush1.bf16.msra.mxu0 0
      %2543 = vmatprep.subr.bf16.mxu0 0
      %2544 = vmatpush1.bf16.msra.mxu0 0
      %2545 = vmatprep.subr.bf16.mxu0 0
      %2546 = vmatpush1.bf16.msra.mxu0 0
      %2547 = vmatprep.subr.bf16.mxu0 0
      %2548 = vmatpush1.bf16.msra.mxu0 0
      %2549 = vmatprep.subr.bf16.mxu0 0
      %2550 = vmatpush1.bf16.msra.mxu0 0
      %2551 = vmatprep.subr.bf16.mxu0 0
      %2552 = vmatpush1.bf16.msra.mxu0 0
      %2553 = vmatprep.subr.bf16.mxu0 0
      %2554 = vmatpush1.bf16.msra.mxu0 0
      %2555 = vmatprep.mubr.bf16.mxu0 0
      %2556 = vmatmul.mubr.bf16.gmra.mrb[0].mxu0 %v1709
      %v2557 = vpop.f32.mrb[0].mxu0
      %v2558 = vadd.f32 %v2445, %v2557
      %v2559 = vpop.f32.mrb[0].mxu0
      %v2560 = vadd.f32 %v2447, %v2559
      %v2561 = vpop.f32.mrb[0].mxu0
      %v2562 = vadd.f32 %v2449, %v2561
      %v2563 = vpop.f32.mrb[0].mxu0
      %v2564 = vadd.f32 %v2451, %v2563
      %2565 = vmatprep.mubr.bf16.mxu0 0
      %2566 = vmatmul.mubr.bf16.gmra.mrb[0].mxu0 %v1712
      %v2567 = vpop.f32.mrb[0].mxu0
      %v2568 = vadd.f32 %v2455, %v2567
      %v2569 = vpop.f32.mrb[0].mxu0
      %v2570 = vadd.f32 %v2457, %v2569
      %v2571 = vpop.f32.mrb[0].mxu0
      %v2572 = vadd.f32 %v2459, %v2571
      %v2573 = vpop.f32.mrb[0].mxu0
      %v2574 = vadd.f32 %v2461, %v2573
      %2575 = vmatprep.mubr.bf16.mxu0 0
      %2576 = vmatmul.mubr.bf16.gmra.mrb[0].mxu0 %v1715
      %v2577 = vpop.f32.mrb[0].mxu0
      %v2578 = vadd.f32 %v2465, %v2577
      %v2579 = vpop.f32.mrb[0].mxu0
      %v2580 = vadd.f32 %v2467, %v2579
      %v2581 = vpop.f32.mrb[0].mxu0
      %v2582 = vadd.f32 %v2469, %v2581
      %v2583 = vpop.f32.mrb[0].mxu0
      %v2584 = vadd.f32 %v2471, %v2583
      %2585 = vmatprep.mubr.bf16.mxu0 0
      %2586 = vmatmul.mubr.bf16.gmra.mrb[0].mxu0 %v1718
      %v2587 = vpop.f32.mrb[0].mxu0
      %v2588 = vadd.f32 %v2475, %v2587
      %v2589 = vpop.f32.mrb[0].mxu0
      %v2590 = vadd.f32 %v2477, %v2589
      %v2591 = vpop.f32.mrb[0].mxu0
      %v2592 = vadd.f32 %v2479, %v2591
      %v2593 = vpop.f32.mrb[0].mxu0
      %v2594 = vadd.f32 %v2481, %v2593
      %2595 = vmatprep.mubr.bf16.mxu0 0
      %2596 = vmatmul.mubr.bf16.gmra.mrb[0].mxu0 %v1721
      %v2597 = vpop.f32.mrb[0].mxu0
      %v2598 = vadd.f32 %v2485, %v2597
      %v2599 = vpop.f32.mrb[0].mxu0
      %v2600 = vadd.f32 %v2487, %v2599
      %v2601 = vpop.f32.mrb[0].mxu0
      %v2602 = vadd.f32 %v2489, %v2601
      %v2603 = vpop.f32.mrb[0].mxu0
      %v2604 = vadd.f32 %v2491, %v2603
      %2605 = vmatprep.mubr.bf16.mxu0 0
      %2606 = vmatmul.mubr.bf16.gmra.mrb[0].mxu0 %v1724
      %v2607 = vpop.f32.mrb[0].mxu0
      %v2608 = vadd.f32 %v2495, %v2607
      %v2609 = vpop.f32.mrb[0].mxu0
      %v2610 = vadd.f32 %v2497, %v2609
      %v2611 = vpop.f32.mrb[0].mxu0
      %v2612 = vadd.f32 %v2499, %v2611
      %v2613 = vpop.f32.mrb[0].mxu0
      %v2614 = vadd.f32 %v2501, %v2613
      %2615 = vmatprep.mubr.bf16.mxu0 0
      %2616 = vmatmul.mubr.bf16.gmra.mrb[0].mxu0 %v1727
      %v2617 = vpop.f32.mrb[0].mxu0
      %v2618 = vadd.f32 %v2505, %v2617
      %v2619 = vpop.f32.mrb[0].mxu0
      %v2620 = vadd.f32 %v2507, %v2619
      %v2621 = vpop.f32.mrb[0].mxu0
      %v2622 = vadd.f32 %v2509, %v2621
      %v2623 = vpop.f32.mrb[0].mxu0
      %v2624 = vadd.f32 %v2511, %v2623
      %2625 = vmatprep.mubr.bf16.mxu0 0
      %2626 = vmatmul.mubr.bf16.gmra.mrb[0].mxu0 %v1730
      %v2627 = vpop.f32.mrb[0].mxu0
      %v2628 = vadd.f32 %v2515, %v2627
      %v2629 = vpop.f32.mrb[0].mxu0
      %v2630 = vadd.f32 %v2517, %v2629
      %v2631 = vpop.f32.mrb[0].mxu0
      %v2632 = vadd.f32 %v2519, %v2631
      %v2633 = vpop.f32.mrb[0].mxu0
      %v2634 = vadd.f32 %v2521, %v2633
      %2635 = vdwg.mxu0
      %v2636 = vmul.f32 %v2106, 0.2
      %v2637 = vmul.f32 %v2108, 0.2
      %v2638 = vmul.f32 %v2558, 0.2
      %v2639 = vmul.f32 %v2560, 0.2
      %v2640 = vmul.f32 %v2110, 0.2
      %v2641 = vmul.f32 %v2112, 0.2
      %v2642 = vmul.f32 %v2562, 0.2
      %v2643 = vmul.f32 %v2564, 0.2
      %v2644 = vmul.f32 %v2116, 0.2
      %v2645 = vmul.f32 %v2118, 0.2
      %v2646 = vmul.f32 %v2568, 0.2
      %v2647 = vmul.f32 %v2570, 0.2
      %v2648 = vmul.f32 %v2120, 0.2
      %v2649 = vmul.f32 %v2122, 0.2
      %v2650 = vmul.f32 %v2572, 0.2
      %v2651 = vmul.f32 %v2574, 0.2
      %v2652 = vmul.f32 %v2126, 0.2
      %v2653 = vmul.f32 %v2128, 0.2
      %v2654 = vmul.f32 %v2578, 0.2
      %v2655 = vmul.f32 %v2580, 0.2
      %v2656 = vmul.f32 %v2130, 0.2
      %v2657 = vmul.f32 %v2132, 0.2
      %v2658 = vmul.f32 %v2582, 0.2
      %v2659 = vmul.f32 %v2584, 0.2
      %v2660 = vmul.f32 %v2136, 0.2
      %v2661 = vmul.f32 %v2138, 0.2
      %v2662 = vmul.f32 %v2588, 0.2
      %v2663 = vmul.f32 %v2590, 0.2
      %v2664 = vmul.f32 %v2140, 0.2
      %v2665 = vmul.f32 %v2142, 0.2
      %v2666 = vmul.f32 %v2592, 0.2
      %v2667 = vmul.f32 %v2594, 0.2
      %v2668 = vmul.f32 %v2146, 0.2
      %v2669 = vmul.f32 %v2148, 0.2
      %v2670 = vmul.f32 %v2598, 0.2
      %v2671 = vmul.f32 %v2600, 0.2
      %v2672 = vmul.f32 %v2150, 0.2
      %v2673 = vmul.f32 %v2152, 0.2
      %v2674 = vmul.f32 %v2602, 0.2
      %v2675 = vmul.f32 %v2604, 0.2
      %v2676 = vmul.f32 %v2156, 0.2
      %v2677 = vmul.f32 %v2158, 0.2
      %v2678 = vmul.f32 %v2608, 0.2
      %v2679 = vmul.f32 %v2610, 0.2
      %v2680 = vmul.f32 %v2160, 0.2
      %v2681 = vmul.f32 %v2162, 0.2
      %v2682 = vmul.f32 %v2612, 0.2
      %v2683 = vmul.f32 %v2614, 0.2
      %v2684 = vmul.f32 %v2166, 0.2
      %v2685 = vmul.f32 %v2168, 0.2
      %v2686 = vmul.f32 %v2618, 0.2
      %v2687 = vmul.f32 %v2620, 0.2
      %v2688 = vmul.f32 %v2170, 0.2
      %v2689 = vmul.f32 %v2172, 0.2
      %v2690 = vmul.f32 %v2622, 0.2
      %v2691 = vmul.f32 %v2624, 0.2
      %v2692 = vmul.f32 %v2176, 0.2
      %v2693 = vmul.f32 %v2178, 0.2
      %v2694 = vmul.f32 %v2628, 0.2
      %v2695 = vmul.f32 %v2630, 0.2
      %v2696 = vmul.f32 %v2180, 0.2
      %v2697 = vmul.f32 %v2182, 0.2
      %v2698 = vmul.f32 %v2632, 0.2
      %v2699 = vmul.f32 %v2634, 0.2
      %v2700 = vmax.f32 %v2106, %v2636
      %v2701 = vmax.f32 %v2108, %v2637
      %v2702 = vmax.f32 %v2558, %v2638
      %v2703 = vmax.f32 %v2560, %v2639
      %v2704 = vmax.f32 %v2110, %v2640
      %v2705 = vmax.f32 %v2112, %v2641
      %v2706 = vmax.f32 %v2562, %v2642
      %v2707 = vmax.f32 %v2564, %v2643
      %v2708 = vmax.f32 %v2116, %v2644
      %v2709 = vmax.f32 %v2118, %v2645
      %v2710 = vmax.f32 %v2568, %v2646
      %v2711 = vmax.f32 %v2570, %v2647
      %v2712 = vmax.f32 %v2120, %v2648
      %v2713 = vmax.f32 %v2122, %v2649
      %v2714 = vmax.f32 %v2572, %v2650
      %v2715 = vmax.f32 %v2574, %v2651
      %v2716 = vmax.f32 %v2126, %v2652
      %v2717 = vmax.f32 %v2128, %v2653
      %v2718 = vmax.f32 %v2578, %v2654
      %v2719 = vmax.f32 %v2580, %v2655
      %v2720 = vmax.f32 %v2130, %v2656
      %v2721 = vmax.f32 %v2132, %v2657
      %v2722 = vmax.f32 %v2582, %v2658
      %v2723 = vmax.f32 %v2584, %v2659
      %v2724 = vmax.f32 %v2136, %v2660
      %v2725 = vmax.f32 %v2138, %v2661
      %v2726 = vmax.f32 %v2588, %v2662
      %v2727 = vmax.f32 %v2590, %v2663
      %v2728 = vmax.f32 %v2140, %v2664
      %v2729 = vmax.f32 %v2142, %v2665
      %v2730 = vmax.f32 %v2592, %v2666
      %v2731 = vmax.f32 %v2594, %v2667
      %v2732 = vmax.f32 %v2146, %v2668
      %v2733 = vmax.f32 %v2148, %v2669
      %v2734 = vmax.f32 %v2598, %v2670
      %v2735 = vmax.f32 %v2600, %v2671
      %v2736 = vmax.f32 %v2150, %v2672
      %v2737 = vmax.f32 %v2152, %v2673
      %v2738 = vmax.f32 %v2602, %v2674
      %v2739 = vmax.f32 %v2604, %v2675
      %v2740 = vmax.f32 %v2156, %v2676
      %v2741 = vmax.f32 %v2158, %v2677
      %v2742 = vmax.f32 %v2608, %v2678
      %v2743 = vmax.f32 %v2610, %v2679
      %v2744 = vmax.f32 %v2160, %v2680
      %v2745 = vmax.f32 %v2162, %v2681
      %v2746 = vmax.f32 %v2612, %v2682
      %v2747 = vmax.f32 %v2614, %v2683
      %v2748 = vmax.f32 %v2166, %v2684
      %v2749 = vmax.f32 %v2168, %v2685
      %v2750 = vmax.f32 %v2618, %v2686
      %v2751 = vmax.f32 %v2620, %v2687
      %v2752 = vmax.f32 %v2170, %v2688
      %v2753 = vmax.f32 %v2172, %v2689
      %v2754 = vmax.f32 %v2622, %v2690
      %v2755 = vmax.f32 %v2624, %v2691
      %v2756 = vmax.f32 %v2176, %v2692
      %v2757 = vmax.f32 %v2178, %v2693
      %v2758 = vmax.f32 %v2628, %v2694
      %v2759 = vmax.f32 %v2630, %v2695
      %v2760 = vmax.f32 %v2180, %v2696
      %v2761 = vmax.f32 %v2182, %v2697
      %v2762 = vmax.f32 %v2632, %v2698
      %v2763 = vmax.f32 %v2634, %v2699
      %v2764 = vpack.c.bf16 %v2704, %v2700
      %v2765 = vpack.c.bf16 %v2705, %v2701
      %v2766 = vpack.c.bf16 %v2706, %v2702
      %v2767 = vpack.c.bf16 %v2707, %v2703
      %v2768 = vpack.c.bf16 %v2712, %v2708
      %v2769 = vpack.c.bf16 %v2713, %v2709
      %v2770 = vpack.c.bf16 %v2714, %v2710
      %v2771 = vpack.c.bf16 %v2715, %v2711
      %v2772 = vpack.c.bf16 %v2720, %v2716
      %v2773 = vpack.c.bf16 %v2721, %v2717
      %v2774 = vpack.c.bf16 %v2722, %v2718
      %v2775 = vpack.c.bf16 %v2723, %v2719
      %v2776 = vpack.c.bf16 %v2728, %v2724
      %v2777 = vpack.c.bf16 %v2729, %v2725
      %v2778 = vpack.c.bf16 %v2730, %v2726
      %v2779 = vpack.c.bf16 %v2731, %v2727
      %v2780 = vpack.c.bf16 %v2736, %v2732
      %v2781 = vpack.c.bf16 %v2737, %v2733
      %v2782 = vpack.c.bf16 %v2738, %v2734
      %v2783 = vpack.c.bf16 %v2739, %v2735
      %v2784 = vpack.c.bf16 %v2744, %v2740
      %v2785 = vpack.c.bf16 %v2745, %v2741
      %v2786 = vpack.c.bf16 %v2746, %v2742
      %v2787 = vpack.c.bf16 %v2747, %v2743
      %v2788 = vpack.c.bf16 %v2752, %v2748
      %v2789 = vpack.c.bf16 %v2753, %v2749
      %v2790 = vpack.c.bf16 %v2754, %v2750
      %v2791 = vpack.c.bf16 %v2755, %v2751
      %v2792 = vpack.c.bf16 %v2760, %v2756
      %v2793 = vpack.c.bf16 %v2761, %v2757
      %v2794 = vpack.c.bf16 %v2762, %v2758
      %v2795 = vpack.c.bf16 %v2763, %v2759
      %v2796 = vld [vmem:[%s3] sm:$0xff]
      %v2797 = vld [vmem:[%s3 + $0x8] sm:$0xff]
      %v2798 = vld [vmem:[%s3 + $0x10] sm:$0xff]
      %v2799 = vld [vmem:[%s3 + $0x18] sm:$0xff]
      %v2800 = vld [vmem:[%s3 + $0x20] sm:$0xff]
      %v2801 = vld [vmem:[%s3 + $0x28] sm:$0xff]
      %v2802 = vld [vmem:[%s3 + $0x30] sm:$0xff]
      %v2803 = vld [vmem:[%s3 + $0x38] sm:$0xff]
      %v2804 = vld [vmem:[%s3 + $0x40] sm:$0xff]
      %v2805 = vld [vmem:[%s3 + $0x48] sm:$0xff]
      %v2806 = vld [vmem:[%s3 + $0x50] sm:$0xff]
      %v2807 = vld [vmem:[%s3 + $0x58] sm:$0xff]
      %v2808 = vld [vmem:[%s3 + $0x60] sm:$0xff]
      %v2809 = vld [vmem:[%s3 + $0x68] sm:$0xff]
      %v2810 = vld [vmem:[%s3 + $0x70] sm:$0xff]
      %v2811 = vld [vmem:[%s3 + $0x78] sm:$0xff]
      %v2812 = vld [vmem:[%s3 + $0x80] sm:$0xff]
      %v2813 = vld [vmem:[%s3 + $0x88] sm:$0xff]
      %v2814 = vld [vmem:[%s3 + $0x90] sm:$0xff]
      %v2815 = vld [vmem:[%s3 + $0x98] sm:$0xff]
      %v2816 = vld [vmem:[%s3 + $0xa0] sm:$0xff]
      %v2817 = vld [vmem:[%s3 + $0xa8] sm:$0xff]
      %v2818 = vld [vmem:[%s3 + $0xb0] sm:$0xff]
      %v2819 = vld [vmem:[%s3 + $0xb8] sm:$0xff]
      %v2820 = vld [vmem:[%s3 + $0xc0] sm:$0xff]
      %v2821 = vld [vmem:[%s3 + $0xc8] sm:$0xff]
      %v2822 = vld [vmem:[%s3 + $0xd0] sm:$0xff]
      %v2823 = vld [vmem:[%s3 + $0xd8] sm:$0xff]
      %v2824 = vld [vmem:[%s3 + $0xe0] sm:$0xff]
      %v2825 = vld [vmem:[%s3 + $0xe8] sm:$0xff]
      %v2826 = vld [vmem:[%s3 + $0xf0] sm:$0xff]
      %v2827 = vld [vmem:[%s3 + $0xf8] sm:$0xff]
      %v2828 = vld [vmem:[%s3 + $0x100] sm:$0xff]
      %v2829 = vld [vmem:[%s3 + $0x108] sm:$0xff]
      %v2830 = vld [vmem:[%s3 + $0x110] sm:$0xff]
      %v2831 = vld [vmem:[%s3 + $0x118] sm:$0xff]
      %v2832 = vld [vmem:[%s3 + $0x120] sm:$0xff]
      %v2833 = vld [vmem:[%s3 + $0x128] sm:$0xff]
      %v2834 = vld [vmem:[%s3 + $0x130] sm:$0xff]
      %v2835 = vld [vmem:[%s3 + $0x138] sm:$0xff]
      %v2836 = vld [vmem:[%s3 + $0x140] sm:$0xff]
      %v2837 = vld [vmem:[%s3 + $0x148] sm:$0xff]
      %v2838 = vld [vmem:[%s3 + $0x150] sm:$0xff]
      %v2839 = vld [vmem:[%s3 + $0x158] sm:$0xff]
      %v2840 = vld [vmem:[%s3 + $0x160] sm:$0xff]
      %v2841 = vld [vmem:[%s3 + $0x168] sm:$0xff]
      %v2842 = vld [vmem:[%s3 + $0x170] sm:$0xff]
      %v2843 = vld [vmem:[%s3 + $0x178] sm:$0xff]
      %v2844 = vld [vmem:[%s3 + $0x180] sm:$0xff]
      %v2845 = vld [vmem:[%s3 + $0x188] sm:$0xff]
      %v2846 = vld [vmem:[%s3 + $0x190] sm:$0xff]
      %v2847 = vld [vmem:[%s3 + $0x198] sm:$0xff]
      %v2848 = vld [vmem:[%s3 + $0x1a0] sm:$0xff]
      %v2849 = vld [vmem:[%s3 + $0x1a8] sm:$0xff]
      %v2850 = vld [vmem:[%s3 + $0x1b0] sm:$0xff]
      %v2851 = vld [vmem:[%s3 + $0x1b8] sm:$0xff]
      %v2852 = vld [vmem:[%s3 + $0x1c0] sm:$0xff]
      %v2853 = vld [vmem:[%s3 + $0x1c8] sm:$0xff]
      %v2854 = vld [vmem:[%s3 + $0x1d0] sm:$0xff]
      %v2855 = vld [vmem:[%s3 + $0x1d8] sm:$0xff]
      %v2856 = vld [vmem:[%s3 + $0x1e0] sm:$0xff]
      %v2857 = vld [vmem:[%s3 + $0x1e8] sm:$0xff]
      %v2858 = vld [vmem:[%s3 + $0x1f0] sm:$0xff]
      %v2859 = vld [vmem:[%s3 + $0x1f8] sm:$0xff]
      %v2860 = vld [vmem:[%s4] sm:$0x3]
      %v2862 = vlaneseq
      %v2863 = vshrl.u32 %v2862, 7
      %v2864 = vsub.s32 0, %v2863
      %v2865 = vrot.slane %v2860, %v2864
      %v2866 = vlaneseq
      %v2867 = vshrl.u32 %v2866, 7
      %v2868 = vsub.s32 1, %v2867
      %v2869 = vrot.slane %v2860, %v2868
      %v2936 = vunpack.c.l.b16 %v2796
      %v2937 = vunpack.c.h.b16 %v2796
      %v2938 = vunpack.c.l.b16 %v2797
      %v2939 = vunpack.c.h.b16 %v2797
      %v2940 = vunpack.c.l.b16 %v2798
      %v2941 = vunpack.c.h.b16 %v2798
      %v2942 = vunpack.c.l.b16 %v2799
      %v2943 = vunpack.c.h.b16 %v2799
      %v2944 = vunpack.c.l.b16 %v2800
      %v2945 = vunpack.c.h.b16 %v2800
      %v2946 = vunpack.c.l.b16 %v2801
      %v2947 = vunpack.c.h.b16 %v2801
      %v2948 = vunpack.c.l.b16 %v2802
      %v2949 = vunpack.c.h.b16 %v2802
      %v2950 = vunpack.c.l.b16 %v2803
      %v2951 = vunpack.c.h.b16 %v2803
      %v2952 = vunpack.c.l.b16 %v2804
      %v2953 = vunpack.c.h.b16 %v2804
      %v2954 = vunpack.c.l.b16 %v2805
      %v2955 = vunpack.c.h.b16 %v2805
      %v2956 = vunpack.c.l.b16 %v2806
      %v2957 = vunpack.c.h.b16 %v2806
      %v2958 = vunpack.c.l.b16 %v2807
      %v2959 = vunpack.c.h.b16 %v2807
      %v2960 = vunpack.c.l.b16 %v2808
      %v2961 = vunpack.c.h.b16 %v2808
      %v2962 = vunpack.c.l.b16 %v2809
      %v2963 = vunpack.c.h.b16 %v2809
      %v2964 = vunpack.c.l.b16 %v2810
      %v2965 = vunpack.c.h.b16 %v2810
      %v2966 = vunpack.c.l.b16 %v2811
      %v2967 = vunpack.c.h.b16 %v2811
      %v2968 = vunpack.c.l.b16 %v2812
      %v2969 = vunpack.c.h.b16 %v2812
      %v2970 = vunpack.c.l.b16 %v2813
      %v2971 = vunpack.c.h.b16 %v2813
      %v2972 = vunpack.c.l.b16 %v2814
      %v2973 = vunpack.c.h.b16 %v2814
      %v2974 = vunpack.c.l.b16 %v2815
      %v2975 = vunpack.c.h.b16 %v2815
      %v2976 = vunpack.c.l.b16 %v2816
      %v2977 = vunpack.c.h.b16 %v2816
      %v2978 = vunpack.c.l.b16 %v2817
      %v2979 = vunpack.c.h.b16 %v2817
      %v2980 = vunpack.c.l.b16 %v2818
      %v2981 = vunpack.c.h.b16 %v2818
      %v2982 = vunpack.c.l.b16 %v2819
      %v2983 = vunpack.c.h.b16 %v2819
      %v2984 = vunpack.c.l.b16 %v2820
      %v2985 = vunpack.c.h.b16 %v2820
      %v2986 = vunpack.c.l.b16 %v2821
      %v2987 = vunpack.c.h.b16 %v2821
      %v2988 = vunpack.c.l.b16 %v2822
      %v2989 = vunpack.c.h.b16 %v2822
      %v2990 = vunpack.c.l.b16 %v2823
      %v2991 = vunpack.c.h.b16 %v2823
      %v2992 = vunpack.c.l.b16 %v2824
      %v2993 = vunpack.c.h.b16 %v2824
      %v2994 = vunpack.c.l.b16 %v2825
      %v2995 = vunpack.c.h.b16 %v2825
      %v2996 = vunpack.c.l.b16 %v2826
      %v2997 = vunpack.c.h.b16 %v2826
      %v2998 = vunpack.c.l.b16 %v2827
      %v2999 = vunpack.c.h.b16 %v2827
      %v3000 = vunpack.c.l.b16 %v2828
      %v3001 = vunpack.c.h.b16 %v2828
      %v3002 = vunpack.c.l.b16 %v2829
      %v3003 = vunpack.c.h.b16 %v2829
      %v3004 = vunpack.c.l.b16 %v2830
      %v3005 = vunpack.c.h.b16 %v2830
      %v3006 = vunpack.c.l.b16 %v2831
      %v3007 = vunpack.c.h.b16 %v2831
      %v3008 = vunpack.c.l.b16 %v2832
      %v3009 = vunpack.c.h.b16 %v2832
      %v3010 = vunpack.c.l.b16 %v2833
      %v3011 = vunpack.c.h.b16 %v2833
      %v3012 = vunpack.c.l.b16 %v2834
      %v3013 = vunpack.c.h.b16 %v2834
      %v3014 = vunpack.c.l.b16 %v2835
      %v3015 = vunpack.c.h.b16 %v2835
      %v3016 = vunpack.c.l.b16 %v2836
      %v3017 = vunpack.c.h.b16 %v2836
      %v3018 = vunpack.c.l.b16 %v2837
      %v3019 = vunpack.c.h.b16 %v2837
      %v3020 = vunpack.c.l.b16 %v2838
      %v3021 = vunpack.c.h.b16 %v2838
      %v3022 = vunpack.c.l.b16 %v2839
      %v3023 = vunpack.c.h.b16 %v2839
      %v3024 = vunpack.c.l.b16 %v2840
      %v3025 = vunpack.c.h.b16 %v2840
      %v3026 = vunpack.c.l.b16 %v2841
      %v3027 = vunpack.c.h.b16 %v2841
      %v3028 = vunpack.c.l.b16 %v2842
      %v3029 = vunpack.c.h.b16 %v2842
      %v3030 = vunpack.c.l.b16 %v2843
      %v3031 = vunpack.c.h.b16 %v2843
      %v3032 = vunpack.c.l.b16 %v2844
      %v3033 = vunpack.c.h.b16 %v2844
      %v3034 = vunpack.c.l.b16 %v2845
      %v3035 = vunpack.c.h.b16 %v2845
      %v3036 = vunpack.c.l.b16 %v2846
      %v3037 = vunpack.c.h.b16 %v2846
      %v3038 = vunpack.c.l.b16 %v2847
      %v3039 = vunpack.c.h.b16 %v2847
      %v3040 = vunpack.c.l.b16 %v2848
      %v3041 = vunpack.c.h.b16 %v2848
      %v3042 = vunpack.c.l.b16 %v2849
      %v3043 = vunpack.c.h.b16 %v2849
      %v3044 = vunpack.c.l.b16 %v2850
      %v3045 = vunpack.c.h.b16 %v2850
      %v3046 = vunpack.c.l.b16 %v2851
      %v3047 = vunpack.c.h.b16 %v2851
      %v3048 = vunpack.c.l.b16 %v2852
      %v3049 = vunpack.c.h.b16 %v2852
      %v3050 = vunpack.c.l.b16 %v2853
      %v3051 = vunpack.c.h.b16 %v2853
      %v3052 = vunpack.c.l.b16 %v2854
      %v3053 = vunpack.c.h.b16 %v2854
      %v3054 = vunpack.c.l.b16 %v2855
      %v3055 = vunpack.c.h.b16 %v2855
      %v3056 = vunpack.c.l.b16 %v2856
      %v3057 = vunpack.c.h.b16 %v2856
      %v3058 = vunpack.c.l.b16 %v2857
      %v3059 = vunpack.c.h.b16 %v2857
      %v3060 = vunpack.c.l.b16 %v2858
      %v3061 = vunpack.c.h.b16 %v2858
      %v3062 = vunpack.c.l.b16 %v2859
      %v3063 = vunpack.c.h.b16 %v2859
      %v3064 = vpack.c.b16 %v2938, %v2936
      %v3065 = vpack.c.b16 %v2939, %v2937
      %v3066 = vpack.c.b16 %v2942, %v2940
      %v3067 = vpack.c.b16 %v2943, %v2941
      %v3068 = vpack.c.b16 %v2946, %v2944
      %v3069 = vpack.c.b16 %v2947, %v2945
      %v3070 = vpack.c.b16 %v2950, %v2948
      %v3071 = vpack.c.b16 %v2951, %v2949
      %v3072 = vpack.c.b16 %v2954, %v2952
      %v3073 = vpack.c.b16 %v2955, %v2953
      %v3074 = vpack.c.b16 %v2958, %v2956
      %v3075 = vpack.c.b16 %v2959, %v2957
      %v3076 = vpack.c.b16 %v2962, %v2960
      %v3077 = vpack.c.b16 %v2963, %v2961
      %v3078 = vpack.c.b16 %v2966, %v2964
      %v3079 = vpack.c.b16 %v2967, %v2965
      %v3080 = vpack.c.b16 %v2970, %v2968
      %v3081 = vpack.c.b16 %v2971, %v2969
      %v3082 = vpack.c.b16 %v2974, %v2972
      %v3083 = vpack.c.b16 %v2975, %v2973
      %v3084 = vpack.c.b16 %v2978, %v2976
      %v3085 = vpack.c.b16 %v2979, %v2977
      %v3086 = vpack.c.b16 %v2982, %v2980
      %v3087 = vpack.c.b16 %v2983, %v2981
      %v3088 = vpack.c.b16 %v2986, %v2984
      %v3089 = vpack.c.b16 %v2987, %v2985
      %v3090 = vpack.c.b16 %v2990, %v2988
      %v3091 = vpack.c.b16 %v2991, %v2989
      %v3092 = vpack.c.b16 %v2994, %v2992
      %v3093 = vpack.c.b16 %v2995, %v2993
      %v3094 = vpack.c.b16 %v2998, %v2996
      %v3095 = vpack.c.b16 %v2999, %v2997
      %v3096 = vpack.c.b16 %v3002, %v3000
      %v3097 = vpack.c.b16 %v3003, %v3001
      %v3098 = vpack.c.b16 %v3006, %v3004
      %v3099 = vpack.c.b16 %v3007, %v3005
      %v3100 = vpack.c.b16 %v3010, %v3008
      %v3101 = vpack.c.b16 %v3011, %v3009
      %v3102 = vpack.c.b16 %v3014, %v3012
      %v3103 = vpack.c.b16 %v3015, %v3013
      %v3104 = vpack.c.b16 %v3018, %v3016
      %v3105 = vpack.c.b16 %v3019, %v3017
      %v3106 = vpack.c.b16 %v3022, %v3020
      %v3107 = vpack.c.b16 %v3023, %v3021
      %v3108 = vpack.c.b16 %v3026, %v3024
      %v3109 = vpack.c.b16 %v3027, %v3025
      %v3110 = vpack.c.b16 %v3030, %v3028
      %v3111 = vpack.c.b16 %v3031, %v3029
      %v3112 = vpack.c.b16 %v3034, %v3032
      %v3113 = vpack.c.b16 %v3035, %v3033
      %v3114 = vpack.c.b16 %v3038, %v3036
      %v3115 = vpack.c.b16 %v3039, %v3037
      %v3116 = vpack.c.b16 %v3042, %v3040
      %v3117 = vpack.c.b16 %v3043, %v3041
      %v3118 = vpack.c.b16 %v3046, %v3044
      %v3119 = vpack.c.b16 %v3047, %v3045
      %v3120 = vpack.c.b16 %v3050, %v3048
      %v3121 = vpack.c.b16 %v3051, %v3049
      %v3122 = vpack.c.b16 %v3054, %v3052
      %v3123 = vpack.c.b16 %v3055, %v3053
      %v3124 = vpack.c.b16 %v3058, %v3056
      %v3125 = vpack.c.b16 %v3059, %v3057
      %v3126 = vpack.c.b16 %v3062, %v3060
      %v3127 = vpack.c.b16 %v3063, %v3061
      %3192 = vmatprep.subr.bf16.mxu0 %v3065
      %3193 = vmatpush1.bf16.msra.mxu0 %v3064
      %3194 = vmatprep.subr.bf16.mxu0 %v3067
      %3195 = vmatpush1.bf16.msra.mxu0 %v3066
      %3196 = vmatprep.subr.bf16.mxu0 %v3069
      %3197 = vmatpush1.bf16.msra.mxu0 %v3068
      %3198 = vmatprep.subr.bf16.mxu0 %v3071
      %3199 = vmatpush1.bf16.msra.mxu0 %v3070
      %3200 = vmatprep.subr.bf16.mxu0 %v3073
      %3201 = vmatpush1.bf16.msra.mxu0 %v3072
      %3202 = vmatprep.subr.bf16.mxu0 %v3075
      %3203 = vmatpush1.bf16.msra.mxu0 %v3074
      %3204 = vmatprep.subr.bf16.mxu0 %v3077
      %3205 = vmatpush1.bf16.msra.mxu0 %v3076
      %3206 = vmatprep.subr.bf16.mxu0 %v3079
      %3207 = vmatpush1.bf16.msra.mxu0 %v3078
      %3208 = vmatprep.subr.bf16.mxu0 %v3081
      %3209 = vmatpush1.bf16.msra.mxu0 %v3080
      %3210 = vmatprep.subr.bf16.mxu0 %v3083
      %3211 = vmatpush1.bf16.msra.mxu0 %v3082
      %3212 = vmatprep.subr.bf16.mxu0 %v3085
      %3213 = vmatpush1.bf16.msra.mxu0 %v3084
      %3214 = vmatprep.subr.bf16.mxu0 %v3087
      %3215 = vmatpush1.bf16.msra.mxu0 %v3086
      %3216 = vmatprep.subr.bf16.mxu0 %v3089
      %3217 = vmatpush1.bf16.msra.mxu0 %v3088
      %3218 = vmatprep.subr.bf16.mxu0 %v3091
      %3219 = vmatpush1.bf16.msra.mxu0 %v3090
      %3220 = vmatprep.subr.bf16.mxu0 %v3093
      %3221 = vmatpush1.bf16.msra.mxu0 %v3092
      %3222 = vmatprep.subr.bf16.mxu0 %v3095
      %3223 = vmatpush1.bf16.msra.mxu0 %v3094
      %3224 = vmatprep.mubr.bf16.mxu0 %v2765
      %3225 = vmatmul.mubr.bf16.gmra.mrb[0].mxu0 %v2764
      %v3226 = vpop.f32.mrb[0].mxu0
      %v3227 = vadd.f32 %v2865, %v3226
      %v3228 = vpop.f32.mrb[0].mxu0
      %v3229 = vadd.f32 %v2869, %v3228
      %v3230 = vpop.f32.mrb[0].mxu0
      %v3231 = vadd.f32 %v2865, %v3230
      %v3232 = vpop.f32.mrb[0].mxu0
      %v3233 = vadd.f32 %v2869, %v3232
      %3234 = vmatprep.mubr.bf16.mxu0 %v2769
      %3235 = vmatmul.mubr.bf16.gmra.mrb[0].mxu0 %v2768
      %v3236 = vpop.f32.mrb[0].mxu0
      %v3237 = vadd.f32 %v2865, %v3236
      %v3238 = vpop.f32.mrb[0].mxu0
      %v3239 = vadd.f32 %v2869, %v3238
      %v3240 = vpop.f32.mrb[0].mxu0
      %v3241 = vadd.f32 %v2865, %v3240
      %v3242 = vpop.f32.mrb[0].mxu0
      %v3243 = vadd.f32 %v2869, %v3242
      %3244 = vmatprep.mubr.bf16.mxu0 %v2773
      %3245 = vmatmul.mubr.bf16.gmra.mrb[0].mxu0 %v2772
      %v3246 = vpop.f32.mrb[0].mxu0
      %v3247 = vadd.f32 %v2865, %v3246
      %v3248 = vpop.f32.mrb[0].mxu0
      %v3249 = vadd.f32 %v2869, %v3248
      %v3250 = vpop.f32.mrb[0].mxu0
      %v3251 = vadd.f32 %v2865, %v3250
      %v3252 = vpop.f32.mrb[0].mxu0
      %v3253 = vadd.f32 %v2869, %v3252
      %3254 = vmatprep.mubr.bf16.mxu0 %v2777
      %3255 = vmatmul.mubr.bf16.gmra.mrb[0].mxu0 %v2776
      %v3256 = vpop.f32.mrb[0].mxu0
      %v3257 = vadd.f32 %v2865, %v3256
      %v3258 = vpop.f32.mrb[0].mxu0
      %v3259 = vadd.f32 %v2869, %v3258
      %v3260 = vpop.f32.mrb[0].mxu0
      %v3261 = vadd.f32 %v2865, %v3260
      %v3262 = vpop.f32.mrb[0].mxu0
      %v3263 = vadd.f32 %v2869, %v3262
      %3264 = vmatprep.mubr.bf16.mxu0 %v2781
      %3265 = vmatmul.mubr.bf16.gmra.mrb[0].mxu0 %v2780
      %v3266 = vpop.f32.mrb[0].mxu0
      %v3267 = vadd.f32 %v2865, %v3266
      %v3268 = vpop.f32.mrb[0].mxu0
      %v3269 = vadd.f32 %v2869, %v3268
      %v3270 = vpop.f32.mrb[0].mxu0
      %v3271 = vadd.f32 %v2865, %v3270
      %v3272 = vpop.f32.mrb[0].mxu0
      %v3273 = vadd.f32 %v2869, %v3272
      %3274 = vmatprep.mubr.bf16.mxu0 %v2785
      %3275 = vmatmul.mubr.bf16.gmra.mrb[0].mxu0 %v2784
      %v3276 = vpop.f32.mrb[0].mxu0
      %v3277 = vadd.f32 %v2865, %v3276
      %v3278 = vpop.f32.mrb[0].mxu0
      %v3279 = vadd.f32 %v2869, %v3278
      %v3280 = vpop.f32.mrb[0].mxu0
      %v3281 = vadd.f32 %v2865, %v3280
      %v3282 = vpop.f32.mrb[0].mxu0
      %v3283 = vadd.f32 %v2869, %v3282
      %3284 = vmatprep.mubr.bf16.mxu0 %v2789
      %3285 = vmatmul.mubr.bf16.gmra.mrb[0].mxu0 %v2788
      %v3286 = vpop.f32.mrb[0].mxu0
      %v3287 = vadd.f32 %v2865, %v3286
      %v3288 = vpop.f32.mrb[0].mxu0
      %v3289 = vadd.f32 %v2869, %v3288
      %v3290 = vpop.f32.mrb[0].mxu0
      %v3291 = vadd.f32 %v2865, %v3290
      %v3292 = vpop.f32.mrb[0].mxu0
      %v3293 = vadd.f32 %v2869, %v3292
      %3294 = vmatprep.mubr.bf16.mxu0 %v2793
      %3295 = vmatmul.mubr.bf16.gmra.mrb[0].mxu0 %v2792
      %v3296 = vpop.f32.mrb[0].mxu0
      %v3297 = vadd.f32 %v2865, %v3296
      %v3298 = vpop.f32.mrb[0].mxu0
      %v3299 = vadd.f32 %v2869, %v3298
      %v3300 = vpop.f32.mrb[0].mxu0
      %v3301 = vadd.f32 %v2865, %v3300
      %v3302 = vpop.f32.mrb[0].mxu0
      %v3303 = vadd.f32 %v2869, %v3302
      %3304 = vdwg.mxu0
      %3305 = vmatprep.subr.bf16.mxu0 %v3097
      %3306 = vmatpush1.bf16.msra.mxu0 %v3096
      %3307 = vmatprep.subr.bf16.mxu0 %v3099
      %3308 = vmatpush1.bf16.msra.mxu0 %v3098
      %3309 = vmatprep.subr.bf16.mxu0 %v3101
      %3310 = vmatpush1.bf16.msra.mxu0 %v3100
      %3311 = vmatprep.subr.bf16.mxu0 %v3103
      %3312 = vmatpush1.bf16.msra.mxu0 %v3102
      %3313 = vmatprep.subr.bf16.mxu0 %v3105
      %3314 = vmatpush1.bf16.msra.mxu0 %v3104
      %3315 = vmatprep.subr.bf16.mxu0 %v3107
      %3316 = vmatpush1.bf16.msra.mxu0 %v3106
      %3317 = vmatprep.subr.bf16.mxu0 %v3109
      %3318 = vmatpush1.bf16.msra.mxu0 %v3108
      %3319 = vmatprep.subr.bf16.mxu0 %v3111
      %3320 = vmatpush1.bf16.msra.mxu0 %v3110
      %3321 = vmatprep.subr.bf16.mxu0 %v3113
      %3322 = vmatpush1.bf16.msra.mxu0 %v3112
      %3323 = vmatprep.subr.bf16.mxu0 %v3115
      %3324 = vmatpush1.bf16.msra.mxu0 %v3114
      %3325 = vmatprep.subr.bf16.mxu0 %v3117
      %3326 = vmatpush1.bf16.msra.mxu0 %v3116
      %3327 = vmatprep.subr.bf16.mxu0 %v3119
      %3328 = vmatpush1.bf16.msra.mxu0 %v3118
      %3329 = vmatprep.subr.bf16.mxu0 %v3121
      %3330 = vmatpush1.bf16.msra.mxu0 %v3120
      %3331 = vmatprep.subr.bf16.mxu0 %v3123
      %3332 = vmatpush1.bf16.msra.mxu0 %v3122
      %3333 = vmatprep.subr.bf16.mxu0 %v3125
      %3334 = vmatpush1.bf16.msra.mxu0 %v3124
      %3335 = vmatprep.subr.bf16.mxu0 %v3127
      %3336 = vmatpush1.bf16.msra.mxu0 %v3126
      %3337 = vmatprep.mubr.bf16.mxu0 %v2767
      %3338 = vmatmul.mubr.bf16.gmra.mrb[0].mxu0 %v2766
      %v3339 = vpop.f32.mrb[0].mxu0
      %v3340 = vadd.f32 %v3227, %v3339
      %v3341 = vpop.f32.mrb[0].mxu0
      %v3342 = vadd.f32 %v3229, %v3341
      %v3343 = vpop.f32.mrb[0].mxu0
      %v3344 = vadd.f32 %v3231, %v3343
      %v3345 = vpop.f32.mrb[0].mxu0
      %v3346 = vadd.f32 %v3233, %v3345
      %3347 = vmatprep.mubr.bf16.mxu0 %v2771
      %3348 = vmatmul.mubr.bf16.gmra.mrb[0].mxu0 %v2770
      %v3349 = vpop.f32.mrb[0].mxu0
      %v3350 = vadd.f32 %v3237, %v3349
      %v3351 = vpop.f32.mrb[0].mxu0
      %v3352 = vadd.f32 %v3239, %v3351
      %v3353 = vpop.f32.mrb[0].mxu0
      %v3354 = vadd.f32 %v3241, %v3353
      %v3355 = vpop.f32.mrb[0].mxu0
      %v3356 = vadd.f32 %v3243, %v3355
      %3357 = vmatprep.mubr.bf16.mxu0 %v2775
      %3358 = vmatmul.mubr.bf16.gmra.mrb[0].mxu0 %v2774
      %v3359 = vpop.f32.mrb[0].mxu0
      %v3360 = vadd.f32 %v3247, %v3359
      %v3361 = vpop.f32.mrb[0].mxu0
      %v3362 = vadd.f32 %v3249, %v3361
      %v3363 = vpop.f32.mrb[0].mxu0
      %v3364 = vadd.f32 %v3251, %v3363
      %v3365 = vpop.f32.mrb[0].mxu0
      %v3366 = vadd.f32 %v3253, %v3365
      %3367 = vmatprep.mubr.bf16.mxu0 %v2779
      %3368 = vmatmul.mubr.bf16.gmra.mrb[0].mxu0 %v2778
      %v3369 = vpop.f32.mrb[0].mxu0
      %v3370 = vadd.f32 %v3257, %v3369
      %v3371 = vpop.f32.mrb[0].mxu0
      %v3372 = vadd.f32 %v3259, %v3371
      %v3373 = vpop.f32.mrb[0].mxu0
      %v3374 = vadd.f32 %v3261, %v3373
      %v3375 = vpop.f32.mrb[0].mxu0
      %v3376 = vadd.f32 %v3263, %v3375
      %3377 = vmatprep.mubr.bf16.mxu0 %v2783
      %3378 = vmatmul.mubr.bf16.gmra.mrb[0].mxu0 %v2782
      %v3379 = vpop.f32.mrb[0].mxu0
      %v3380 = vadd.f32 %v3267, %v3379
      %v3381 = vpop.f32.mrb[0].mxu0
      %v3382 = vadd.f32 %v3269, %v3381
      %v3383 = vpop.f32.mrb[0].mxu0
      %v3384 = vadd.f32 %v3271, %v3383
      %v3385 = vpop.f32.mrb[0].mxu0
      %v3386 = vadd.f32 %v3273, %v3385
      %3387 = vmatprep.mubr.bf16.mxu0 %v2787
      %3388 = vmatmul.mubr.bf16.gmra.mrb[0].mxu0 %v2786
      %v3389 = vpop.f32.mrb[0].mxu0
      %v3390 = vadd.f32 %v3277, %v3389
      %v3391 = vpop.f32.mrb[0].mxu0
      %v3392 = vadd.f32 %v3279, %v3391
      %v3393 = vpop.f32.mrb[0].mxu0
      %v3394 = vadd.f32 %v3281, %v3393
      %v3395 = vpop.f32.mrb[0].mxu0
      %v3396 = vadd.f32 %v3283, %v3395
      %3397 = vmatprep.mubr.bf16.mxu0 %v2791
      %3398 = vmatmul.mubr.bf16.gmra.mrb[0].mxu0 %v2790
      %v3399 = vpop.f32.mrb[0].mxu0
      %v3400 = vadd.f32 %v3287, %v3399
      %v3401 = vpop.f32.mrb[0].mxu0
      %v3402 = vadd.f32 %v3289, %v3401
      %v3403 = vpop.f32.mrb[0].mxu0
      %v3404 = vadd.f32 %v3291, %v3403
      %v3405 = vpop.f32.mrb[0].mxu0
      %v3406 = vadd.f32 %v3293, %v3405
      %3407 = vmatprep.mubr.bf16.mxu0 %v2795
      %3408 = vmatmul.mubr.bf16.gmra.mrb[0].mxu0 %v2794
      %v3409 = vpop.f32.mrb[0].mxu0
      %v3410 = vadd.f32 %v3297, %v3409
      %v3411 = vpop.f32.mrb[0].mxu0
      %v3412 = vadd.f32 %v3299, %v3411
      %v3413 = vpop.f32.mrb[0].mxu0
      %v3414 = vadd.f32 %v3301, %v3413
      %v3415 = vpop.f32.mrb[0].mxu0
      %v3416 = vadd.f32 %v3303, %v3415
      %3417 = vdwg.mxu0
      %v3418 = vmul.f32 %v3340, 0.2
      %v3419 = vmul.f32 %v3342, 0.2
      %v3420 = vmul.f32 %v3344, 0.2
      %v3421 = vmul.f32 %v3346, 0.2
      %v3422 = vmul.f32 %v3350, 0.2
      %v3423 = vmul.f32 %v3352, 0.2
      %v3424 = vmul.f32 %v3354, 0.2
      %v3425 = vmul.f32 %v3356, 0.2
      %v3426 = vmul.f32 %v3360, 0.2
      %v3427 = vmul.f32 %v3362, 0.2
      %v3428 = vmul.f32 %v3364, 0.2
      %v3429 = vmul.f32 %v3366, 0.2
      %v3430 = vmul.f32 %v3370, 0.2
      %v3431 = vmul.f32 %v3372, 0.2
      %v3432 = vmul.f32 %v3374, 0.2
      %v3433 = vmul.f32 %v3376, 0.2
      %v3434 = vmul.f32 %v3380, 0.2
      %v3435 = vmul.f32 %v3382, 0.2
      %v3436 = vmul.f32 %v3384, 0.2
      %v3437 = vmul.f32 %v3386, 0.2
      %v3438 = vmul.f32 %v3390, 0.2
      %v3439 = vmul.f32 %v3392, 0.2
      %v3440 = vmul.f32 %v3394, 0.2
      %v3441 = vmul.f32 %v3396, 0.2
      %v3442 = vmul.f32 %v3400, 0.2
      %v3443 = vmul.f32 %v3402, 0.2
      %v3444 = vmul.f32 %v3404, 0.2
      %v3445 = vmul.f32 %v3406, 0.2
      %v3446 = vmul.f32 %v3410, 0.2
      %v3447 = vmul.f32 %v3412, 0.2
      %v3448 = vmul.f32 %v3414, 0.2
      %v3449 = vmul.f32 %v3416, 0.2
      %v3450 = vmax.f32 %v3340, %v3418
      %v3451 = vmax.f32 %v3342, %v3419
      %v3452 = vmax.f32 %v3344, %v3420
      %v3453 = vmax.f32 %v3346, %v3421
      %v3454 = vmax.f32 %v3350, %v3422
      %v3455 = vmax.f32 %v3352, %v3423
      %v3456 = vmax.f32 %v3354, %v3424
      %v3457 = vmax.f32 %v3356, %v3425
      %v3458 = vmax.f32 %v3360, %v3426
      %v3459 = vmax.f32 %v3362, %v3427
      %v3460 = vmax.f32 %v3364, %v3428
      %v3461 = vmax.f32 %v3366, %v3429
      %v3462 = vmax.f32 %v3370, %v3430
      %v3463 = vmax.f32 %v3372, %v3431
      %v3464 = vmax.f32 %v3374, %v3432
      %v3465 = vmax.f32 %v3376, %v3433
      %v3466 = vmax.f32 %v3380, %v3434
      %v3467 = vmax.f32 %v3382, %v3435
      %v3468 = vmax.f32 %v3384, %v3436
      %v3469 = vmax.f32 %v3386, %v3437
      %v3470 = vmax.f32 %v3390, %v3438
      %v3471 = vmax.f32 %v3392, %v3439
      %v3472 = vmax.f32 %v3394, %v3440
      %v3473 = vmax.f32 %v3396, %v3441
      %v3474 = vmax.f32 %v3400, %v3442
      %v3475 = vmax.f32 %v3402, %v3443
      %v3476 = vmax.f32 %v3404, %v3444
      %v3477 = vmax.f32 %v3406, %v3445
      %v3478 = vmax.f32 %v3410, %v3446
      %v3479 = vmax.f32 %v3412, %v3447
      %v3480 = vmax.f32 %v3414, %v3448
      %v3481 = vmax.f32 %v3416, %v3449
      %v3482 = vpack.c.bf16 %v3452, %v3450
      %v3483 = vpack.c.bf16 %v3453, %v3451
      %v3484 = vpack.c.bf16 %v3456, %v3454
      %v3485 = vpack.c.bf16 %v3457, %v3455
      %v3486 = vpack.c.bf16 %v3460, %v3458
      %v3487 = vpack.c.bf16 %v3461, %v3459
      %v3488 = vpack.c.bf16 %v3464, %v3462
      %v3489 = vpack.c.bf16 %v3465, %v3463
      %v3490 = vpack.c.bf16 %v3468, %v3466
      %v3491 = vpack.c.bf16 %v3469, %v3467
      %v3492 = vpack.c.bf16 %v3472, %v3470
      %v3493 = vpack.c.bf16 %v3473, %v3471
      %v3494 = vpack.c.bf16 %v3476, %v3474
      %v3495 = vpack.c.bf16 %v3477, %v3475
      %v3496 = vpack.c.bf16 %v3480, %v3478
      %v3497 = vpack.c.bf16 %v3481, %v3479
      %v3498 = vld [vmem:[%s5] sm:$0xf]
      %v3499 = vld [vmem:[%s5 + $0x4] sm:$0xf]
      %v3500 = vld [vmem:[%s5 + $0x8] sm:$0xf]
      %v3501 = vld [vmem:[%s5 + $0xc] sm:$0xf]
      %v3502 = vld [vmem:[%s5 + $0x10] sm:$0xf]
      %v3503 = vld [vmem:[%s5 + $0x14] sm:$0xf]
      %v3504 = vld [vmem:[%s5 + $0x18] sm:$0xf]
      %v3505 = vld [vmem:[%s5 + $0x1c] sm:$0xf]
      %v3506 = vld [vmem:[%s5 + $0x20] sm:$0xf]
      %v3507 = vld [vmem:[%s5 + $0x24] sm:$0xf]
      %v3508 = vld [vmem:[%s5 + $0x28] sm:$0xf]
      %v3509 = vld [vmem:[%s5 + $0x2c] sm:$0xf]
      %v3510 = vld [vmem:[%s5 + $0x30] sm:$0xf]
      %v3511 = vld [vmem:[%s5 + $0x34] sm:$0xf]
      %v3512 = vld [vmem:[%s5 + $0x38] sm:$0xf]
      %v3513 = vld [vmem:[%s5 + $0x3c] sm:$0xf]
      %v3514 = vld [vmem:[%s5 + $0x40] sm:$0xf]
      %v3515 = vld [vmem:[%s5 + $0x44] sm:$0xf]
      %v3516 = vld [vmem:[%s5 + $0x48] sm:$0xf]
      %v3517 = vld [vmem:[%s5 + $0x4c] sm:$0xf]
      %v3518 = vld [vmem:[%s5 + $0x50] sm:$0xf]
      %v3519 = vld [vmem:[%s5 + $0x54] sm:$0xf]
      %v3520 = vld [vmem:[%s5 + $0x58] sm:$0xf]
      %v3521 = vld [vmem:[%s5 + $0x5c] sm:$0xf]
      %v3522 = vld [vmem:[%s5 + $0x60] sm:$0xf]
      %v3523 = vld [vmem:[%s5 + $0x64] sm:$0xf]
      %v3524 = vld [vmem:[%s5 + $0x68] sm:$0xf]
      %v3525 = vld [vmem:[%s5 + $0x6c] sm:$0xf]
      %v3526 = vld [vmem:[%s5 + $0x70] sm:$0xf]
      %v3527 = vld [vmem:[%s5 + $0x74] sm:$0xf]
      %v3528 = vld [vmem:[%s5 + $0x78] sm:$0xf]
      %v3529 = vld [vmem:[%s5 + $0x7c] sm:$0xf]
      %v3530 = vld [vmem:[%s6] sm:$0x1]
      %v3532 = vlaneseq
      %v3533 = vshrl.u32 %v3532, 7
      %v3534 = vsub.s32 0, %v3533
      %v3535 = vrot.slane %v3530, %v3534
      %v3569 = vunpack.c.l.b16 %v3498
      %v3570 = vunpack.c.l.b16 %v3499
      %v3571 = vunpack.c.l.b16 %v3500
      %v3572 = vunpack.c.l.b16 %v3501
      %v3573 = vunpack.c.l.b16 %v3502
      %v3574 = vunpack.c.l.b16 %v3503
      %v3575 = vunpack.c.l.b16 %v3504
      %v3576 = vunpack.c.l.b16 %v3505
      %v3577 = vunpack.c.l.b16 %v3506
      %v3578 = vunpack.c.l.b16 %v3507
      %v3579 = vunpack.c.l.b16 %v3508
      %v3580 = vunpack.c.l.b16 %v3509
      %v3581 = vunpack.c.l.b16 %v3510
      %v3582 = vunpack.c.l.b16 %v3511
      %v3583 = vunpack.c.l.b16 %v3512
      %v3584 = vunpack.c.l.b16 %v3513
      %v3585 = vunpack.c.l.b16 %v3514
      %v3586 = vunpack.c.l.b16 %v3515
      %v3587 = vunpack.c.l.b16 %v3516
      %v3588 = vunpack.c.l.b16 %v3517
      %v3589 = vunpack.c.l.b16 %v3518
      %v3590 = vunpack.c.l.b16 %v3519
      %v3591 = vunpack.c.l.b16 %v3520
      %v3592 = vunpack.c.l.b16 %v3521
      %v3593 = vunpack.c.l.b16 %v3522
      %v3594 = vunpack.c.l.b16 %v3523
      %v3595 = vunpack.c.l.b16 %v3524
      %v3596 = vunpack.c.l.b16 %v3525
      %v3597 = vunpack.c.l.b16 %v3526
      %v3598 = vunpack.c.l.b16 %v3527
      %v3599 = vunpack.c.l.b16 %v3528
      %v3600 = vunpack.c.l.b16 %v3529
      %v3601 = vpack.c.b16 %v3570, %v3569
      %v3602 = vpack.c.b16 %v3572, %v3571
      %v3603 = vpack.c.b16 %v3574, %v3573
      %v3604 = vpack.c.b16 %v3576, %v3575
      %v3605 = vpack.c.b16 %v3578, %v3577
      %v3606 = vpack.c.b16 %v3580, %v3579
      %v3607 = vpack.c.b16 %v3582, %v3581
      %v3608 = vpack.c.b16 %v3584, %v3583
      %v3609 = vpack.c.b16 %v3586, %v3585
      %v3610 = vpack.c.b16 %v3588, %v3587
      %v3611 = vpack.c.b16 %v3590, %v3589
      %v3612 = vpack.c.b16 %v3592, %v3591
      %v3613 = vpack.c.b16 %v3594, %v3593
      %v3614 = vpack.c.b16 %v3596, %v3595
      %v3615 = vpack.c.b16 %v3598, %v3597
      %v3616 = vpack.c.b16 %v3600, %v3599
      %3633 = vmatprep.subr.bf16.mxu0 0
      %3634 = vmatpush1.bf16.msra.mxu0 %v3601
      %3635 = vmatprep.subr.bf16.mxu0 0
      %3636 = vmatpush1.bf16.msra.mxu0 %v3602
      %3637 = vmatprep.subr.bf16.mxu0 0
      %3638 = vmatpush1.bf16.msra.mxu0 %v3603
      %3639 = vmatprep.subr.bf16.mxu0 0
      %3640 = vmatpush1.bf16.msra.mxu0 %v3604
      %3641 = vmatprep.subr.bf16.mxu0 0
      %3642 = vmatpush1.bf16.msra.mxu0 %v3605
      %3643 = vmatprep.subr.bf16.mxu0 0
      %3644 = vmatpush1.bf16.msra.mxu0 %v3606
      %3645 = vmatprep.subr.bf16.mxu0 0
      %3646 = vmatpush1.bf16.msra.mxu0 %v3607
      %3647 = vmatprep.subr.bf16.mxu0 0
      %3648 = vmatpush1.bf16.msra.mxu0 %v3608
      %3649 = vmatprep.subr.bf16.mxu0 0
      %3650 = vmatpush1.bf16.msra.mxu0 %v3609
      %3651 = vmatprep.subr.bf16.mxu0 0
      %3652 = vmatpush1.bf16.msra.mxu0 %v3610
      %3653 = vmatprep.subr.bf16.mxu0 0
      %3654 = vmatpush1.bf16.msra.mxu0 %v3611
      %3655 = vmatprep.subr.bf16.mxu0 0
      %3656 = vmatpush1.bf16.msra.mxu0 %v3612
      %3657 = vmatprep.subr.bf16.mxu0 0
      %3658 = vmatpush1.bf16.msra.mxu0 %v3613
      %3659 = vmatprep.subr.bf16.mxu0 0
      %3660 = vmatpush1.bf16.msra.mxu0 %v3614
      %3661 = vmatprep.subr.bf16.mxu0 0
      %3662 = vmatpush1.bf16.msra.mxu0 %v3615
      %3663 = vmatprep.subr.bf16.mxu0 0
      %3664 = vmatpush1.bf16.msra.mxu0 %v3616
      %3665 = vmatprep.mubr.bf16.mxu0 %v3483
      %3666 = vmatmul.mubr.bf16.gmra.mrb[0].mxu0 %v3482
      %v3667 = vpop.f32.mrb[0].mxu0
      %v3668 = vadd.f32 %v3535, %v3667
      %v3669 = vpop.f32.mrb[0].mxu0
      %v3670 = vpop.f32.mrb[0].mxu0
      %v3671 = vadd.f32 %v3535, %v3670
      %v3672 = vpop.f32.mrb[0].mxu0
      %3673 = vmatprep.mubr.bf16.mxu0 %v3485
      %3674 = vmatmul.mubr.bf16.gmra.mrb[0].mxu0 %v3484
      %v3675 = vpop.f32.mrb[0].mxu0
      %v3676 = vadd.f32 %v3535, %v3675
      %v3677 = vpop.f32.mrb[0].mxu0
      %v3678 = vpop.f32.mrb[0].mxu0
      %v3679 = vadd.f32 %v3535, %v3678
      %v3680 = vpop.f32.mrb[0].mxu0
      %3681 = vmatprep.mubr.bf16.mxu0 %v3487
      %3682 = vmatmul.mubr.bf16.gmra.mrb[0].mxu0 %v3486
      %v3683 = vpop.f32.mrb[0].mxu0
      %v3684 = vadd.f32 %v3535, %v3683
      %v3685 = vpop.f32.mrb[0].mxu0
      %v3686 = vpop.f32.mrb[0].mxu0
      %v3687 = vadd.f32 %v3535, %v3686
      %v3688 = vpop.f32.mrb[0].mxu0
      %3689 = vmatprep.mubr.bf16.mxu0 %v3489
      %3690 = vmatmul.mubr.bf16.gmra.mrb[0].mxu0 %v3488
      %v3691 = vpop.f32.mrb[0].mxu0
      %v3692 = vadd.f32 %v3535, %v3691
      %v3693 = vpop.f32.mrb[0].mxu0
      %v3694 = vpop.f32.mrb[0].mxu0
      %v3695 = vadd.f32 %v3535, %v3694
      %v3696 = vpop.f32.mrb[0].mxu0
      %3697 = vmatprep.mubr.bf16.mxu0 %v3491
      %3698 = vmatmul.mubr.bf16.gmra.mrb[0].mxu0 %v3490
      %v3699 = vpop.f32.mrb[0].mxu0
      %v3700 = vadd.f32 %v3535, %v3699
      %v3701 = vpop.f32.mrb[0].mxu0
      %v3702 = vpop.f32.mrb[0].mxu0
      %v3703 = vadd.f32 %v3535, %v3702
      %v3704 = vpop.f32.mrb[0].mxu0
      %3705 = vmatprep.mubr.bf16.mxu0 %v3493
      %3706 = vmatmul.mubr.bf16.gmra.mrb[0].mxu0 %v3492
      %v3707 = vpop.f32.mrb[0].mxu0
      %v3708 = vadd.f32 %v3535, %v3707
      %v3709 = vpop.f32.mrb[0].mxu0
      %v3710 = vpop.f32.mrb[0].mxu0
      %v3711 = vadd.f32 %v3535, %v3710
      %v3712 = vpop.f32.mrb[0].mxu0
      %3713 = vmatprep.mubr.bf16.mxu0 %v3495
      %3714 = vmatmul.mubr.bf16.gmra.mrb[0].mxu0 %v3494
      %v3715 = vpop.f32.mrb[0].mxu0
      %v3716 = vadd.f32 %v3535, %v3715
      %v3717 = vpop.f32.mrb[0].mxu0
      %v3718 = vpop.f32.mrb[0].mxu0
      %v3719 = vadd.f32 %v3535, %v3718
      %v3720 = vpop.f32.mrb[0].mxu0
      %3721 = vmatprep.mubr.bf16.mxu0 %v3497
      %3722 = vmatmul.mubr.bf16.gmra.mrb[0].mxu0 %v3496
      %v3723 = vpop.f32.mrb[0].mxu0
      %v3724 = vadd.f32 %v3535, %v3723
      %v3725 = vpop.f32.mrb[0].mxu0
      %v3726 = vpop.f32.mrb[0].mxu0
      %v3727 = vadd.f32 %v3535, %v3726
      %v3728 = vpop.f32.mrb[0].mxu0
      %3729 = vdwg.mxu0
      %v3730 = vmul.f32 %v3668, 0.2
      %v3731 = vmul.f32 %v3671, 0.2
      %v3732 = vmul.f32 %v3676, 0.2
      %v3733 = vmul.f32 %v3679, 0.2
      %v3734 = vmul.f32 %v3684, 0.2
      %v3735 = vmul.f32 %v3687, 0.2
      %v3736 = vmul.f32 %v3692, 0.2
      %v3737 = vmul.f32 %v3695, 0.2
      %v3738 = vmul.f32 %v3700, 0.2
      %v3739 = vmul.f32 %v3703, 0.2
      %v3740 = vmul.f32 %v3708, 0.2
      %v3741 = vmul.f32 %v3711, 0.2
      %v3742 = vmul.f32 %v3716, 0.2
      %v3743 = vmul.f32 %v3719, 0.2
      %v3744 = vmul.f32 %v3724, 0.2
      %v3745 = vmul.f32 %v3727, 0.2
      %v3746 = vmax.f32 %v3668, %v3730
      %v3747 = vmax.f32 %v3671, %v3731
      %v3748 = vmax.f32 %v3676, %v3732
      %v3749 = vmax.f32 %v3679, %v3733
      %v3750 = vmax.f32 %v3684, %v3734
      %v3751 = vmax.f32 %v3687, %v3735
      %v3752 = vmax.f32 %v3692, %v3736
      %v3753 = vmax.f32 %v3695, %v3737
      %v3754 = vmax.f32 %v3700, %v3738
      %v3755 = vmax.f32 %v3703, %v3739
      %v3756 = vmax.f32 %v3708, %v3740
      %v3757 = vmax.f32 %v3711, %v3741
      %v3758 = vmax.f32 %v3716, %v3742
      %v3759 = vmax.f32 %v3719, %v3743
      %v3760 = vmax.f32 %v3724, %v3744
      %v3761 = vmax.f32 %v3727, %v3745
      %v3762 = vld [vmem:[%s7] sm:$0x1]
      %v3764 = vlaneseq
      %v3765 = vshrl.u32 %v3764, 7
      %v3766 = vsub.s32 0, %v3765
      %v3767 = vrot.slane %v3762, %v3766
      %v3769 = vmul.f32 %v3746, %v3767
      %v3770 = vmul.f32 %v3747, %v3767
      %v3771 = vmul.f32 %v3748, %v3767
      %v3772 = vmul.f32 %v3749, %v3767
      %v3773 = vmul.f32 %v3750, %v3767
      %v3774 = vmul.f32 %v3751, %v3767
      %v3775 = vmul.f32 %v3752, %v3767
      %v3776 = vmul.f32 %v3753, %v3767
      %v3777 = vmul.f32 %v3754, %v3767
      %v3778 = vmul.f32 %v3755, %v3767
      %v3779 = vmul.f32 %v3756, %v3767
      %v3780 = vmul.f32 %v3757, %v3767
      %v3781 = vmul.f32 %v3758, %v3767
      %v3782 = vmul.f32 %v3759, %v3767
      %v3783 = vmul.f32 %v3760, %v3767
      %v3784 = vmul.f32 %v3761, %v3767
      %3785 = vadd.xlane.f32.xlu0 %v3769
      %v3786 = vpop.xlane.xlu0 %3785
      %3787 = vadd.xlane.f32.xlu0 %v3770
      %v3788 = vpop.xlane.xlu0 %3787
      %3789 = vadd.xlane.f32.xlu0 %v3771
      %v3790 = vpop.xlane.xlu0 %3789
      %3791 = vadd.xlane.f32.xlu0 %v3772
      %v3792 = vpop.xlane.xlu0 %3791
      %3793 = vadd.xlane.f32.xlu0 %v3773
      %v3794 = vpop.xlane.xlu0 %3793
      %3795 = vadd.xlane.f32.xlu0 %v3774
      %v3796 = vpop.xlane.xlu0 %3795
      %3797 = vadd.xlane.f32.xlu0 %v3775
      %v3798 = vpop.xlane.xlu0 %3797
      %3799 = vadd.xlane.f32.xlu0 %v3776
      %v3800 = vpop.xlane.xlu0 %3799
      %3801 = vadd.xlane.f32.xlu0 %v3777
      %v3802 = vpop.xlane.xlu0 %3801
      %3803 = vadd.xlane.f32.xlu0 %v3778
      %v3804 = vpop.xlane.xlu0 %3803
      %3805 = vadd.xlane.f32.xlu0 %v3779
      %v3806 = vpop.xlane.xlu0 %3805
      %3807 = vadd.xlane.f32.xlu0 %v3780
      %v3808 = vpop.xlane.xlu0 %3807
      %3809 = vadd.xlane.f32.xlu0 %v3781
      %v3810 = vpop.xlane.xlu0 %3809
      %3811 = vadd.xlane.f32.xlu0 %v3782
      %v3812 = vpop.xlane.xlu0 %3811
      %3813 = vadd.xlane.f32.xlu0 %v3783
      %v3814 = vpop.xlane.xlu0 %3813
      %3815 = vadd.xlane.f32.xlu0 %v3784
      %v3816 = vpop.xlane.xlu0 %3815
      %s3817 = sld [smem:[#allocation2]]
      %v3818 = vstv %s3817
      %v3819 = vadd.f32 %v3786, %v3818
      %v3820 = vadd.f32 %v3788, %v3818
      %v3821 = vadd.f32 %v3790, %v3818
      %v3822 = vadd.f32 %v3792, %v3818
      %v3823 = vadd.f32 %v3794, %v3818
      %v3824 = vadd.f32 %v3796, %v3818
      %v3825 = vadd.f32 %v3798, %v3818
      %v3826 = vadd.f32 %v3800, %v3818
      %v3827 = vadd.f32 %v3802, %v3818
      %v3828 = vadd.f32 %v3804, %v3818
      %v3829 = vadd.f32 %v3806, %v3818
      %v3830 = vadd.f32 %v3808, %v3818
      %v3831 = vadd.f32 %v3810, %v3818
      %v3832 = vadd.f32 %v3812, %v3818
      %v3833 = vadd.f32 %v3814, %v3818
      %v3834 = vadd.f32 %v3816, %v3818
      %vm3835 = vcmask 7168
      %3836 = vst.msk [vmem:[%s338] sm:$0xff] %vm3835, %v3819
      %3837 = vst.msk [vmem:[%s338 + $0x8] sm:$0xff] %vm3835, %v3820
      %3838 = vst.msk [vmem:[%s338 + $0x10] sm:$0xff] %vm3835, %v3821
      %3839 = vst.msk [vmem:[%s338 + $0x18] sm:$0xff] %vm3835, %v3822
      %3840 = vst.msk [vmem:[%s338 + $0x20] sm:$0xff] %vm3835, %v3823
      %3841 = vst.msk [vmem:[%s338 + $0x28] sm:$0xff] %vm3835, %v3824
      %3842 = vst.msk [vmem:[%s338 + $0x30] sm:$0xff] %vm3835, %v3825
      %3843 = vst.msk [vmem:[%s338 + $0x38] sm:$0xff] %vm3835, %v3826
      %3844 = vst.msk [vmem:[%s338 + $0x40] sm:$0xff] %vm3835, %v3827
      %3845 = vst.msk [vmem:[%s338 + $0x48] sm:$0xff] %vm3835, %v3828
      %3846 = vst.msk [vmem:[%s338 + $0x50] sm:$0xff] %vm3835, %v3829
      %3847 = vst.msk [vmem:[%s338 + $0x58] sm:$0xff] %vm3835, %v3830
      %3848 = vst.msk [vmem:[%s338 + $0x60] sm:$0xff] %vm3835, %v3831
      %3849 = vst.msk [vmem:[%s338 + $0x68] sm:$0xff] %vm3835, %v3832
      %3850 = vst.msk [vmem:[%s338 + $0x70] sm:$0xff] %vm3835, %v3833
      %3851 = vst.msk [vmem:[%s338 + $0x78] sm:$0xff] %vm3835, %v3834
      %s3852 = smul.u32 16, %s21
      %p3853 = scmp.lt.s32.totalorder %s3852, 31
      %s3854 = scalar_select %p3853, %s3852, 31
      %s3855 = smul.addr %s3854, 8
      %s3856 = scalar_lea.vmem %s9, %s3855
      // Predicated region
      $region57: #{tpu_custom_call.1} parent=55 // pred_check
        %p3857 = pneg %p233
      $region58: #{tpu_custom_call.1} parent=55 // pred_check_branch
        %3859 = sbr.rel (%p3857) target = $region60
      $region59: #{tpu_custom_call.1} parent=55 // pred_region
        %s3860 = smul.u32 16, %s21
      $region60: #{tpu_custom_call.1} parent=55 // pred_fallthru
        _
    $region56: #{tpu_custom_call.1} parent=5 // pred_fallthru
      _
    %p3861 = scmp.le.s32.totalorder 2, %s16
    // Predicated region
    $region61: #{tpu_custom_call.1} parent=5 // pred_check
      %p3862 = pneg %p3861
    $region62: #{tpu_custom_call.1} parent=5 // pred_check_branch
      %3864 = sbr.rel (%p3862) target = $region64
    $region63: #{tpu_custom_call.1} parent=5 // pred_region
      %s3865 = ssub.s32 %s16, 2
      // Predicated region
      $region65: #{tpu_custom_call.1} parent=63 // pred_check
        %p3866 = pneg %p239
      $region66: #{tpu_custom_call.1} parent=63 // pred_check_branch
        %3868 = sbr.rel (%p3866) target = $region68
      $region67: #{tpu_custom_call.1} parent=63 // pred_region
        %s3869 = smul.u32 16, %s22
        %p3870 = scmp.lt.s32.totalorder %s3869, 31
        %s3871 = scalar_select %p3870, %s3869, 31
        %s3872 = smul.addr %s3871, 8
        %s3873 = scalar_lea.vmem %s9, %s3872
      $region68: #{tpu_custom_call.1} parent=63 // pred_fallthru
        _
    $region64: #{tpu_custom_call.1} parent=5 // pred_fallthru
      _
  $region6: #{tpu_custom_call.1} parent=0 // loop_footer
    %s20 = sadd.s32 1, %s16
  $region7: #{tpu_custom_call.1} parent=0 // loop_footer_branch
    %15 = sbr.rel target = $region3
  $region8: #{tpu_custom_call.1} parent=0 // loop_exit
    _

</llo_original>
